<compile_context>
chip_gen: v7x
topology: tpu7x:2x2x1
jax: 0.10.0
libtpu: 0.0.40
codegen_flags: <defaults>
</compile_context>

<pallas_src>
import math

import jax
import jax.numpy as jnp
from jax.experimental import pallas as pl
from jax.experimental.pallas import tpu as pltpu

# ---------------- configuration (scaled-down BERT) ----------------
B = 2            # batch
L = 8            # sequence length
H = 128          # hidden size (scaled from 768)
NH = 2           # attention heads
DH = H // NH     # head dim
FFN = 256        # intermediate size
NUM_LAYERS = 2
VOCAB = 1000
MAX_POS = 32
TYPE_VOCAB = 2
NUM_CLASSES = 2
CLS_PAD = 128    # lane-padded classifier output width
LN_EPS = 1e-12
GELU_C = 0.7978845608028654  # sqrt(2/pi)
MASK_BIAS = -10000.0


def _full_spec(shape):
    """BlockSpec covering the whole array at grid step 0 (grid=(1,))."""
    nd = len(shape)
    return pl.BlockSpec(shape, lambda i, _nd=nd: (0,) * _nd)


def _layernorm(h, g, b):
    """LayerNorm over the last dim, f32 statistics."""
    mu = jnp.mean(h, axis=-1, keepdims=True)
    var = jnp.mean((h - mu) * (h - mu), axis=-1, keepdims=True)
    return (h - mu) * jax.lax.rsqrt(var + LN_EPS) * g + b


def _split_heads(qkv_bf, base):
    """(B*L, 3H) bf16 -> (NH*B, L, DH) bf16 for the Q/K/V block starting at column `base`.

    Head-major batch ordering: batch index = head * B + b  (rows within each head block
    stay in (b, l) order, so the trailing reshape is a pure leading-dim regroup).
    """
    cols = [qkv_bf[:, base + hd * DH: base + (hd + 1) * DH] for hd in range(NH)]
    return jnp.concatenate(cols, axis=0).reshape(NH * B, L, DH)


def _encoder_layer(h, bias3, wqkv, bqkv, wo, bo, g1, beta1, w1, b1, w2, b2, g2, beta2):
    """One BERT encoder layer on a VMEM-resident (B*L, H) f32 activation."""
    hb = h.astype(jnp.bfloat16)                         # hoisted: single bf16 cast of x

    # ---- fused QKV projection: single (B*L, H) @ (H, 3H) MXU pass ----
    qkv = jnp.dot(hb, wqkv, preferred_element_type=jnp.float32) + bqkv
    qkv_bf = qkv.astype(jnp.bfloat16)                   # cast once, reused by all heads

    q3 = _split_heads(qkv_bf, 0)                        # (NH*B, L, DH)
    k3 = _split_heads(qkv_bf, H)
    v3 = _split_heads(qkv_bf, 2 * H)

    # ---- batched self-attention over (NH*B) with a single einsum each way ----
    scale = 1.0 / math.sqrt(DH)
    s = jnp.einsum('bqd,bkd->bqk', q3, k3,
                   preferred_element_type=jnp.float32) * scale + bias3   # (NH*B, L, L)
    m = jnp.max(s, axis=-1, keepdims=True)
    p = jnp.exp(s - m)
    p = p * pl.reciprocal(jnp.sum(p, axis=-1, keepdims=True), approx=True)
    ctx3 = jnp.einsum('bqk,bkd->bqd', p.astype(jnp.bfloat16), v3,
                      preferred_element_type=jnp.float32)                # (NH*B, L, DH)

    # merge heads back onto the lane axis -> (B*L, H)
    ctx3 = ctx3.reshape(NH, B * L, DH)
    ctx = jnp.concatenate([ctx3[hd] for hd in range(NH)], axis=-1)

    # ---- output projection + residual LayerNorm ----
    attn = jnp.dot(ctx.astype(jnp.bfloat16), wo,
                   preferred_element_type=jnp.float32) + bo
    h1 = _layernorm(attn + h, g1, beta1)

    # ---- FFN: LN2(gelu(h1 W1 + b1) W2 + b2 + h1) ----
    f = jnp.dot(h1.astype(jnp.bfloat16), w1,
                preferred_element_type=jnp.float32) + b1
    # TODO(synk): HF BERT uses exact erf GELU; tanh approximation used here (EUP-friendly).
    f = 0.5 * f * (1.0 + jnp.tanh(GELU_C * (f + 0.044715 * f * f * f)))
    f2 = jnp.dot(f.astype(jnp.bfloat16), w2,
                 preferred_element_type=jnp.float32) + b2
    return _layernorm(f2 + h1, g2, beta2)


# ---------------- the single fused kernel ----------------
def _fused_bert_kernel(emb_ref, mask_ref, emb_g_ref, emb_b_ref,
                       wqkv_ref, bqkv_ref, wo_ref, bo_ref, ln1g_ref, ln1b_ref,
                       w1_ref, b1_ref, w2_ref, b2_ref, ln2g_ref, ln2b_ref,
                       wp_ref, bp_ref, wc_ref, bc_ref,
                       o_ref):
    # ---- embeddings LayerNorm ----
    h = _layernorm(emb_ref[...], emb_g_ref[...], emb_b_ref[...])        # (B*L, H) f32

    # ---- additive attention-mask bias, computed once from the raw int mask ----
    mask_f = mask_ref[...].astype(jnp.float32)                          # (B, L)
    bias_bl = (1.0 - mask_f) * MASK_BIAS
    bias3 = jnp.concatenate([bias_bl] * NH, axis=0).reshape(NH * B, 1, L)

    # ---- encoder layers (static unroll); activation stays resident in VMEM ----
    # NOTE(v7x): a leading 'parallel' grid axis over batch could shard the 2 TensorCores;
    # skipped at these toy sizes to avoid per-step overhead on single-TC v5e/v6e.
    for l in range(NUM_LAYERS):
        h = _encoder_layer(
            h, bias3,
            wqkv_ref[l], bqkv_ref[l], wo_ref[l], bo_ref[l],
            ln1g_ref[l], ln1b_ref[l],
            w1_ref[l], b1_ref[l], w2_ref[l], b2_ref[l],
            ln2g_ref[l], ln2b_ref[l])

    # ---- [CLS] rows + pooler (tanh Linear) + Dropout (eval: identity) + classifier ----
    cls = jnp.concatenate([h[b * L:b * L + 1, :] for b in range(B)], axis=0)   # (B, H)
    pooled = jnp.tanh(
        jnp.dot(cls.astype(jnp.bfloat16), wp_ref[...],
                preferred_element_type=jnp.float32) + bp_ref[...])
    logits = jnp.dot(pooled.astype(jnp.bfloat16), wc_ref[...],
                     preferred_element_type=jnp.float32) + bc_ref[...]         # (B, 128)
    o_ref[...] = logits.astype(o_ref.dtype)


# rough advisory cost (helps XLA schedule the gather glue around the call)
_FLOPS = NUM_LAYERS * (2 * B * L * H * 3 * H            # fused QKV
                       + 2 * NH * B * L * L * DH * 2    # scores + p@v
                       + 2 * B * L * H * H              # output projection
                       + 2 * B * L * H * FFN * 2)       # FFN up + down
_FLOPS += 2 * B * H * H + 2 * B * H * CLS_PAD           # pooler + classifier
_TRANS = NUM_LAYERS * (NH * B * L * L + B * L * FFN) + B * H


def fused_bert_classifier(emb, mask, params):
    args = (emb, mask,
            params["emb_ln_g"], params["emb_ln_b"],
            params["wqkv"], params["bqkv"], params["wo"], params["bo"],
            params["ln1_g"], params["ln1_b"],
            params["w1"], params["b1"], params["w2"], params["b2"],
            params["ln2_g"], params["ln2_b"],
            params["pool_w"], params["pool_b"],
            params["cls_w_pad"], params["cls_b_pad"])
    bytes_accessed = sum(int(a.size) * a.dtype.itemsize for a in args) + B * CLS_PAD * 4
    out = pl.pallas_call(
        _fused_bert_kernel,
        out_shape=jax.ShapeDtypeStruct((B, CLS_PAD), jnp.float32),
        grid=(1,),
        in_specs=[_full_spec(a.shape) for a in args],
        out_specs=_full_spec((B, CLS_PAD)),
        compiler_params=pltpu.CompilerParams(dimension_semantics=("arbitrary",)),
        cost_estimate=pl.CostEstimate(flops=_FLOPS, transcendentals=_TRANS,
                                      bytes_accessed=bytes_accessed),
    )(*args)
    return out[:, :NUM_CLASSES]


# ---------------- parameter init (deterministic, synthetic; per-layer params stacked) ----------------
def init_params(key):
    def nrm(k, shape):
        return 0.02 * jax.random.normal(k, shape, dtype=jnp.float32)

    keys = iter(jax.random.split(key, 64))

    cls_w = nrm(next(keys), (H, NUM_CLASSES))
    cls_w_pad = jnp.zeros((H, CLS_PAD), jnp.float32).at[:, :NUM_CLASSES].set(cls_w)

    wqkv, wo, w1, w2 = [], [], [], []
    for _ in range(NUM_LAYERS):
        wq = nrm(next(keys), (H, H))
        wk = nrm(next(keys), (H, H))
        wv = nrm(next(keys), (H, H))
        wqkv.append(jnp.concatenate([wq, wk, wv], axis=1))   # fused (H, 3H)
        wo.append(nrm(next(keys), (H, H)))
        w1.append(nrm(next(keys), (H, FFN)))
        w2.append(nrm(next(keys), (FFN, H)))

    return {
        "word_emb": nrm(next(keys), (VOCAB, H)),
        "pos_emb": nrm(next(keys), (MAX_POS, H)),
        "type_emb": nrm(next(keys), (TYPE_VOCAB, H)),
        "emb_ln_g": jnp.ones((1, H), jnp.float32),
        "emb_ln_b": jnp.zeros((1, H), jnp.float32),
        # stacked encoder-layer parameters (leading axis = layer), bf16 matmul weights
        "wqkv": jnp.stack(wqkv).astype(jnp.bfloat16),          # (NL, H, 3H)
        "bqkv": jnp.zeros((NUM_LAYERS, 1, 3 * H), jnp.float32),
        "wo": jnp.stack(wo).astype(jnp.bfloat16),              # (NL, H, H)
        "bo": jnp.zeros((NUM_LAYERS, 1, H), jnp.float32),
        "ln1_g": jnp.ones((NUM_LAYERS, 1, H), jnp.float32),
        "ln1_b": jnp.zeros((NUM_LAYERS, 1, H), jnp.float32),
        "w1": jnp.stack(w1).astype(jnp.bfloat16),              # (NL, H, FFN)
        "b1": jnp.zeros((NUM_LAYERS, 1, FFN), jnp.float32),
        "w2": jnp.stack(w2).astype(jnp.bfloat16),              # (NL, FFN, H)
        "b2": jnp.zeros((NUM_LAYERS, 1, H), jnp.float32),
        "ln2_g": jnp.ones((NUM_LAYERS, 1, H), jnp.float32),
        "ln2_b": jnp.zeros((NUM_LAYERS, 1, H), jnp.float32),
        # pooler: Linear(H, H) + tanh
        "pool_w": nrm(next(keys), (H, H)).astype(jnp.bfloat16),
        "pool_b": jnp.zeros((1, H), jnp.float32),
        # classifier head: torch.nn.Linear(768, 2) scaled to (H, 2), lane-padded to 128
        "cls_w_pad": cls_w_pad.astype(jnp.bfloat16),
        "cls_b_pad": jnp.zeros((1, CLS_PAD), jnp.float32),
    }


# ---------------- forward pass ----------------
@jax.jit
def sentiment_binary_forward(params, ids, mask, token_type_ids):
    # embeddings: table gathers are plain-JAX glue; everything else is one fused kernel.
    positions = jnp.arange(L, dtype=jnp.int32)
    emb = (params["word_emb"][ids]
           + params["pos_emb"][positions][None, :, :]
           + params["type_emb"][token_type_ids])                        # (B, L, H)
    return fused_bert_classifier(emb.reshape(B * L, H),
                                 mask.astype(jnp.int32), params)        # (B, 2)


if __name__ == "__main__":
    key = jax.random.PRNGKey(0)
    k_params, k_ids, _, _ = jax.random.split(key, 4)

    params = init_params(k_params)

    ids = jax.random.randint(k_ids, (B, L), 0, VOCAB, dtype=jnp.int32)
    mask = jnp.concatenate(
        [jnp.ones((B, L - 2), jnp.int32), jnp.zeros((B, 2), jnp.int32)], axis=1)  # pad last 2
    token_type_ids = jnp.zeros((B, L), jnp.int32)

    logits = sentiment_binary_forward(params, ids, mask, token_type_ids)
    logits = jax.block_until_ready(logits)
    assert logits.shape == (B, NUM_CLASSES) and logits.dtype == jnp.float32
    assert bool(jnp.all(jnp.isfinite(logits)))
    print("KERNEL_OK")
</pallas_src>

<mosaic_0001>
module attributes {stable_mosaic.version = 11 : i64} {
  func.func @_fused_bert_kernel(%arg0: i32, %arg1: memref<16x128xf32, #tpu.memory_space<vmem>>, %arg2: memref<2x8xi32, #tpu.memory_space<vmem>>, %arg3: memref<1x128xf32, #tpu.memory_space<vmem>>, %arg4: memref<1x128xf32, #tpu.memory_space<vmem>>, %arg5: memref<2x128x384xbf16, #tpu.memory_space<vmem>>, %arg6: memref<2x1x384xf32, #tpu.memory_space<vmem>>, %arg7: memref<2x128x128xbf16, #tpu.memory_space<vmem>>, %arg8: memref<2x1x128xf32, #tpu.memory_space<vmem>>, %arg9: memref<2x1x128xf32, #tpu.memory_space<vmem>>, %arg10: memref<2x1x128xf32, #tpu.memory_space<vmem>>, %arg11: memref<2x128x256xbf16, #tpu.memory_space<vmem>>, %arg12: memref<2x1x256xf32, #tpu.memory_space<vmem>>, %arg13: memref<2x256x128xbf16, #tpu.memory_space<vmem>>, %arg14: memref<2x1x128xf32, #tpu.memory_space<vmem>>, %arg15: memref<2x1x128xf32, #tpu.memory_space<vmem>>, %arg16: memref<2x1x128xf32, #tpu.memory_space<vmem>>, %arg17: memref<128x128xbf16, #tpu.memory_space<vmem>>, %arg18: memref<1x128xf32, #tpu.memory_space<vmem>>, %arg19: memref<128x128xbf16, #tpu.memory_space<vmem>>, %arg20: memref<1x128xf32, #tpu.memory_space<vmem>>, %arg21: memref<2x128xf32, #tpu.memory_space<vmem>>) attributes {dimension_semantics = [#tpu.dimension_semantics<arbitrary>], iteration_bounds = array<i64: 1>, scalar_prefetch = 0 : i64, scratch_operands = 0 : i64, tpu.core_type = #tpu.core_type<tc>, window_params = [{pipeline_mode = #tpu.pipeline_mode<synchronous>, transform_indices = @transform_0, window_bounds = array<i64: 16, 128>}, {pipeline_mode = #tpu.pipeline_mode<synchronous>, transform_indices = @transform_1, window_bounds = array<i64: 2, 8>}, {pipeline_mode = #tpu.pipeline_mode<synchronous>, transform_indices = @transform_2, window_bounds = array<i64: 1, 128>}, {pipeline_mode = #tpu.pipeline_mode<synchronous>, transform_indices = @transform_3, window_bounds = array<i64: 1, 128>}, {pipeline_mode = #tpu.pipeline_mode<synchronous>, transform_indices = @transform_4, window_bounds = array<i64: 2, 128, 384>}, {pipeline_mode = #tpu.pipeline_mode<synchronous>, transform_indices = @transform_5, window_bounds = array<i64: 2, 1, 384>}, {pipeline_mode = #tpu.pipeline_mode<synchronous>, transform_indices = @transform_6, window_bounds = array<i64: 2, 128, 128>}, {pipeline_mode = #tpu.pipeline_mode<synchronous>, transform_indices = @transform_7, window_bounds = array<i64: 2, 1, 128>}, {pipeline_mode = #tpu.pipeline_mode<synchronous>, transform_indices = @transform_8, window_bounds = array<i64: 2, 1, 128>}, {pipeline_mode = #tpu.pipeline_mode<synchronous>, transform_indices = @transform_9, window_bounds = array<i64: 2, 1, 128>}, {pipeline_mode = #tpu.pipeline_mode<synchronous>, transform_indices = @transform_10, window_bounds = array<i64: 2, 128, 256>}, {pipeline_mode = #tpu.pipeline_mode<synchronous>, transform_indices = @transform_11, window_bounds = array<i64: 2, 1, 256>}, {pipeline_mode = #tpu.pipeline_mode<synchronous>, transform_indices = @transform_12, window_bounds = array<i64: 2, 256, 128>}, {pipeline_mode = #tpu.pipeline_mode<synchronous>, transform_indices = @transform_13, window_bounds = array<i64: 2, 1, 128>}, {pipeline_mode = #tpu.pipeline_mode<synchronous>, transform_indices = @transform_14, window_bounds = array<i64: 2, 1, 128>}, {pipeline_mode = #tpu.pipeline_mode<synchronous>, transform_indices = @transform_15, window_bounds = array<i64: 2, 1, 128>}, {pipeline_mode = #tpu.pipeline_mode<synchronous>, transform_indices = @transform_16, window_bounds = array<i64: 128, 128>}, {pipeline_mode = #tpu.pipeline_mode<synchronous>, transform_indices = @transform_17, window_bounds = array<i64: 1, 128>}, {pipeline_mode = #tpu.pipeline_mode<synchronous>, transform_indices = @transform_18, window_bounds = array<i64: 128, 128>}, {pipeline_mode = #tpu.pipeline_mode<synchronous>, transform_indices = @transform_19, window_bounds = array<i64: 1, 128>}, {pipeline_mode = #tpu.pipeline_mode<synchronous>, transform_indices = @transform_20, window_bounds = array<i64: 2, 128>}]} {
    %c0 = arith.constant 0 : index
    %c0_0 = arith.constant 0 : index
    %0 = vector.load %arg1[%c0, %c0_0] : memref<16x128xf32, #tpu.memory_space<vmem>>, vector<16x128xf32>
    %c0_1 = arith.constant 0 : index
    %c0_2 = arith.constant 0 : index
    %1 = vector.load %arg3[%c0_1, %c0_2] : memref<1x128xf32, #tpu.memory_space<vmem>>, vector<1x128xf32>
    %c0_3 = arith.constant 0 : index
    %c0_4 = arith.constant 0 : index
    %2 = vector.load %arg4[%c0_3, %c0_4] : memref<1x128xf32, #tpu.memory_space<vmem>>, vector<1x128xf32>
    %cst = arith.constant dense<0.000000e+00> : vector<16xf32>
    %3 = vector.multi_reduction <add>, %0, %cst [1] : vector<16x128xf32> to vector<16xf32>
    %4 = vector.shape_cast %3 : vector<16xf32> to vector<16x1xf32>
    %cst_5 = arith.constant 1.280000e+02 : f32
    %5 = vector.broadcast %cst_5 : f32 to vector<16x1xf32>
    %6 = arith.divf %4, %5 : vector<16x1xf32>
    %7 = vector.broadcast %6 : vector<16x1xf32> to vector<16x128xf32>
    %8 = arith.subf %0, %7 : vector<16x128xf32>
    %9 = vector.broadcast %6 : vector<16x1xf32> to vector<16x128xf32>
    %10 = arith.subf %0, %9 : vector<16x128xf32>
    %11 = arith.mulf %8, %10 : vector<16x128xf32>
    %cst_6 = arith.constant dense<0.000000e+00> : vector<16xf32>
    %12 = vector.multi_reduction <add>, %11, %cst_6 [1] : vector<16x128xf32> to vector<16xf32>
    %13 = vector.shape_cast %12 : vector<16xf32> to vector<16x1xf32>
    %cst_7 = arith.constant 1.280000e+02 : f32
    %14 = vector.broadcast %cst_7 : f32 to vector<16x1xf32>
    %15 = arith.divf %13, %14 : vector<16x1xf32>
    %16 = vector.broadcast %6 : vector<16x1xf32> to vector<16x128xf32>
    %17 = arith.subf %0, %16 : vector<16x128xf32>
    %cst_8 = arith.constant 9.99999996E-13 : f32
    %18 = vector.broadcast %cst_8 : f32 to vector<16x1xf32>
    %19 = arith.addf %15, %18 : vector<16x1xf32>
    %20 = math.rsqrt %19 : vector<16x1xf32>
    %21 = vector.broadcast %20 : vector<16x1xf32> to vector<16x128xf32>
    %22 = arith.mulf %17, %21 : vector<16x128xf32>
    %23 = vector.broadcast %1 : vector<1x128xf32> to vector<16x128xf32>
    %24 = arith.mulf %22, %23 : vector<16x128xf32>
    %25 = vector.broadcast %2 : vector<1x128xf32> to vector<16x128xf32>
    %26 = arith.addf %24, %25 : vector<16x128xf32>
    %c0_9 = arith.constant 0 : index
    %c0_10 = arith.constant 0 : index
    %27 = vector.load %arg2[%c0_9, %c0_10] : memref<2x8xi32, #tpu.memory_space<vmem>>, vector<2x8xi32>
    %28 = arith.sitofp %27 : vector<2x8xi32> to vector<2x8xf32>
    %cst_11 = arith.constant 1.000000e+00 : f32
    %29 = vector.broadcast %cst_11 : f32 to vector<2x8xf32>
    %30 = arith.subf %29, %28 : vector<2x8xf32>
    %cst_12 = arith.constant -1.000000e+04 : f32
    %31 = vector.broadcast %cst_12 : f32 to vector<2x8xf32>
    %32 = arith.mulf %30, %31 : vector<2x8xf32>
    %33 = tpu.concatenate %32, %32 in 0 : vector<2x8xf32>, vector<2x8xf32> -> vector<4x8xf32>
    %34 = vector.shape_cast %33 : vector<4x8xf32> to vector<4x1x8xf32>
    %c0_13 = arith.constant 0 : index
    %c0_14 = arith.constant 0 : index
    %c0_15 = arith.constant 0 : index
    %35 = vector.load %arg5[%c0_13, %c0_14, %c0_15] : memref<2x128x384xbf16, #tpu.memory_space<vmem>>, vector<1x128x384xbf16>
    %36 = vector.shape_cast %35 : vector<1x128x384xbf16> to vector<128x384xbf16>
    %c0_16 = arith.constant 0 : index
    %c0_17 = arith.constant 0 : index
    %c0_18 = arith.constant 0 : index
    %37 = vector.load %arg6[%c0_16, %c0_17, %c0_18] : memref<2x1x384xf32, #tpu.memory_space<vmem>>, vector<1x1x384xf32>
    %38 = vector.shape_cast %37 : vector<1x1x384xf32> to vector<1x384xf32>
    %c0_19 = arith.constant 0 : index
    %c0_20 = arith.constant 0 : index
    %c0_21 = arith.constant 0 : index
    %39 = vector.load %arg7[%c0_19, %c0_20, %c0_21] : memref<2x128x128xbf16, #tpu.memory_space<vmem>>, vector<1x128x128xbf16>
    %40 = vector.shape_cast %39 : vector<1x128x128xbf16> to vector<128x128xbf16>
    %c0_22 = arith.constant 0 : index
    %c0_23 = arith.constant 0 : index
    %c0_24 = arith.constant 0 : index
    %41 = vector.load %arg8[%c0_22, %c0_23, %c0_24] : memref<2x1x128xf32, #tpu.memory_space<vmem>>, vector<1x1x128xf32>
    %42 = vector.shape_cast %41 : vector<1x1x128xf32> to vector<1x128xf32>
    %c0_25 = arith.constant 0 : index
    %c0_26 = arith.constant 0 : index
    %c0_27 = arith.constant 0 : index
    %43 = vector.load %arg9[%c0_25, %c0_26, %c0_27] : memref<2x1x128xf32, #tpu.memory_space<vmem>>, vector<1x1x128xf32>
    %44 = vector.shape_cast %43 : vector<1x1x128xf32> to vector<1x128xf32>
    %c0_28 = arith.constant 0 : index
    %c0_29 = arith.constant 0 : index
    %c0_30 = arith.constant 0 : index
    %45 = vector.load %arg10[%c0_28, %c0_29, %c0_30] : memref<2x1x128xf32, #tpu.memory_space<vmem>>, vector<1x1x128xf32>
    %46 = vector.shape_cast %45 : vector<1x1x128xf32> to vector<1x128xf32>
    %c0_31 = arith.constant 0 : index
    %c0_32 = arith.constant 0 : index
    %c0_33 = arith.constant 0 : index
    %47 = vector.load %arg11[%c0_31, %c0_32, %c0_33] : memref<2x128x256xbf16, #tpu.memory_space<vmem>>, vector<1x128x256xbf16>
    %48 = vector.shape_cast %47 : vector<1x128x256xbf16> to vector<128x256xbf16>
    %c0_34 = arith.constant 0 : index
    %c0_35 = arith.constant 0 : index
    %c0_36 = arith.constant 0 : index
    %49 = vector.load %arg12[%c0_34, %c0_35, %c0_36] : memref<2x1x256xf32, #tpu.memory_space<vmem>>, vector<1x1x256xf32>
    %50 = vector.shape_cast %49 : vector<1x1x256xf32> to vector<1x256xf32>
    %c0_37 = arith.constant 0 : index
    %c0_38 = arith.constant 0 : index
    %c0_39 = arith.constant 0 : index
    %51 = vector.load %arg13[%c0_37, %c0_38, %c0_39] : memref<2x256x128xbf16, #tpu.memory_space<vmem>>, vector<1x256x128xbf16>
    %52 = vector.shape_cast %51 : vector<1x256x128xbf16> to vector<256x128xbf16>
    %c0_40 = arith.constant 0 : index
    %c0_41 = arith.constant 0 : index
    %c0_42 = arith.constant 0 : index
    %53 = vector.load %arg14[%c0_40, %c0_41, %c0_42] : memref<2x1x128xf32, #tpu.memory_space<vmem>>, vector<1x1x128xf32>
    %54 = vector.shape_cast %53 : vector<1x1x128xf32> to vector<1x128xf32>
    %c0_43 = arith.constant 0 : index
    %c0_44 = arith.constant 0 : index
    %c0_45 = arith.constant 0 : index
    %55 = vector.load %arg15[%c0_43, %c0_44, %c0_45] : memref<2x1x128xf32, #tpu.memory_space<vmem>>, vector<1x1x128xf32>
    %56 = vector.shape_cast %55 : vector<1x1x128xf32> to vector<1x128xf32>
    %c0_46 = arith.constant 0 : index
    %c0_47 = arith.constant 0 : index
    %c0_48 = arith.constant 0 : index
    %57 = vector.load %arg16[%c0_46, %c0_47, %c0_48] : memref<2x1x128xf32, #tpu.memory_space<vmem>>, vector<1x1x128xf32>
    %58 = vector.shape_cast %57 : vector<1x1x128xf32> to vector<1x128xf32>
    %59 = arith.truncf %26 : vector<16x128xf32> to vector<16x128xbf16>
    %cst_49 = arith.constant dense<0.000000e+00> : vector<16x384xf32>
    %60 = tpu.matmul %59, %36, %cst_49 {dimension_numbers = #tpu.dot_dimension_numbers<[1], [0], [0], [1], [0, 0, 1, 1], [], []>} : vector<16x128xbf16>, vector<128x384xbf16>, vector<16x384xf32> -> vector<16x384xf32>
    %61 = vector.broadcast %38 : vector<1x384xf32> to vector<16x384xf32>
    %62 = arith.addf %60, %61 : vector<16x384xf32>
    %63 = arith.truncf %62 : vector<16x384xf32> to vector<16x384xbf16>
    %64 = vector.extract_strided_slice %63 {offsets = [0, 0], sizes = [16, 64], strides = [1, 1]} : vector<16x384xbf16> to vector<16x64xbf16>
    %65 = vector.extract_strided_slice %63 {offsets = [0, 64], sizes = [16, 64], strides = [1, 1]} : vector<16x384xbf16> to vector<16x64xbf16>
    %66 = tpu.concatenate %64, %65 in 0 : vector<16x64xbf16>, vector<16x64xbf16> -> vector<32x64xbf16>
    %67 = vector.shape_cast %66 : vector<32x64xbf16> to vector<4x8x64xbf16>
    %68 = vector.extract_strided_slice %63 {offsets = [0, 128], sizes = [16, 64], strides = [1, 1]} : vector<16x384xbf16> to vector<16x64xbf16>
    %69 = vector.extract_strided_slice %63 {offsets = [0, 192], sizes = [16, 64], strides = [1, 1]} : vector<16x384xbf16> to vector<16x64xbf16>
    %70 = tpu.concatenate %68, %69 in 0 : vector<16x64xbf16>, vector<16x64xbf16> -> vector<32x64xbf16>
    %71 = vector.shape_cast %70 : vector<32x64xbf16> to vector<4x8x64xbf16>
    %72 = vector.extract_strided_slice %63 {offsets = [0, 256], sizes = [16, 64], strides = [1, 1]} : vector<16x384xbf16> to vector<16x64xbf16>
    %73 = vector.extract_strided_slice %63 {offsets = [0, 320], sizes = [16, 64], strides = [1, 1]} : vector<16x384xbf16> to vector<16x64xbf16>
    %74 = tpu.concatenate %72, %73 in 0 : vector<16x64xbf16>, vector<16x64xbf16> -> vector<32x64xbf16>
    %75 = vector.shape_cast %74 : vector<32x64xbf16> to vector<4x8x64xbf16>
    "tpu.trace_start"() <{level = 10 : i32, message = "bqd,bkd->bqk"}> : () -> ()
    %cst_50 = arith.constant dense<0.000000e+00> : vector<4x8x8xf32>
    %76 = tpu.matmul %67, %71, %cst_50 {dimension_numbers = #tpu.dot_dimension_numbers<[2], [2], [1], [1], [0, 0, 0, 1, 1, 1], [0], [0]>} : vector<4x8x64xbf16>, vector<4x8x64xbf16>, vector<4x8x8xf32> -> vector<4x8x8xf32>
    "tpu.trace_stop"() : () -> ()
    %cst_51 = arith.constant 1.250000e-01 : f32
    %77 = vector.broadcast %cst_51 : f32 to vector<4x8x8xf32>
    %78 = arith.mulf %76, %77 : vector<4x8x8xf32>
    %79 = vector.broadcast %34 : vector<4x1x8xf32> to vector<4x8x8xf32>
    %80 = arith.addf %78, %79 : vector<4x8x8xf32>
    %cst_52 = arith.constant dense<0xFF800000> : vector<4x8xf32>
    %81 = vector.multi_reduction <maximumf>, %80, %cst_52 [2] : vector<4x8x8xf32> to vector<4x8xf32>
    %82 = vector.shape_cast %81 : vector<4x8xf32> to vector<4x8x1xf32>
    %83 = vector.broadcast %82 : vector<4x8x1xf32> to vector<4x8x8xf32>
    %84 = arith.subf %80, %83 : vector<4x8x8xf32>
    %85 = math.exp %84 : vector<4x8x8xf32>
    %cst_53 = arith.constant dense<0.000000e+00> : vector<4x8xf32>
    %86 = vector.multi_reduction <add>, %85, %cst_53 [2] : vector<4x8x8xf32> to vector<4x8xf32>
    %87 = vector.shape_cast %86 : vector<4x8xf32> to vector<4x8x1xf32>
    %88 = tpu.reciprocal %87 {approx = true} : vector<4x8x1xf32> -> vector<4x8x1xf32>
    %89 = vector.broadcast %88 : vector<4x8x1xf32> to vector<4x8x8xf32>
    %90 = arith.mulf %85, %89 : vector<4x8x8xf32>
    %91 = arith.truncf %90 : vector<4x8x8xf32> to vector<4x8x8xbf16>
    "tpu.trace_start"() <{level = 10 : i32, message = "bqk,bkd->bqd"}> : () -> ()
    %cst_54 = arith.constant dense<0.000000e+00> : vector<4x8x64xf32>
    %92 = tpu.matmul %91, %75, %cst_54 {dimension_numbers = #tpu.dot_dimension_numbers<[2], [1], [1], [2], [0, 0, 0, 1, 1, 2], [0], [0]>} : vector<4x8x8xbf16>, vector<4x8x64xbf16>, vector<4x8x64xf32> -> vector<4x8x64xf32>
    "tpu.trace_stop"() : () -> ()
    %93 = vector.shape_cast %92 : vector<4x8x64xf32> to vector<2x16x64xf32>
    %94 = vector.extract_strided_slice %93 {offsets = [0, 0, 0], sizes = [1, 16, 64], strides = [1, 1, 1]} : vector<2x16x64xf32> to vector<1x16x64xf32>
    %95 = vector.shape_cast %94 : vector<1x16x64xf32> to vector<16x64xf32>
    %96 = vector.extract_strided_slice %93 {offsets = [1, 0, 0], sizes = [1, 16, 64], strides = [1, 1, 1]} : vector<2x16x64xf32> to vector<1x16x64xf32>
    %97 = vector.shape_cast %96 : vector<1x16x64xf32> to vector<16x64xf32>
    %98 = tpu.concatenate %95, %97 in 1 : vector<16x64xf32>, vector<16x64xf32> -> vector<16x128xf32>
    %99 = arith.truncf %98 : vector<16x128xf32> to vector<16x128xbf16>
    %cst_55 = arith.constant dense<0.000000e+00> : vector<16x128xf32>
    %100 = tpu.matmul %99, %40, %cst_55 {dimension_numbers = #tpu.dot_dimension_numbers<[1], [0], [0], [1], [0, 0, 1, 1], [], []>} : vector<16x128xbf16>, vector<128x128xbf16>, vector<16x128xf32> -> vector<16x128xf32>
    %101 = vector.broadcast %42 : vector<1x128xf32> to vector<16x128xf32>
    %102 = arith.addf %100, %101 : vector<16x128xf32>
    %103 = arith.addf %102, %26 : vector<16x128xf32>
    %cst_56 = arith.constant dense<0.000000e+00> : vector<16xf32>
    %104 = vector.multi_reduction <add>, %103, %cst_56 [1] : vector<16x128xf32> to vector<16xf32>
    %105 = vector.shape_cast %104 : vector<16xf32> to vector<16x1xf32>
    %cst_57 = arith.constant 1.280000e+02 : f32
    %106 = vector.broadcast %cst_57 : f32 to vector<16x1xf32>
    %107 = arith.divf %105, %106 : vector<16x1xf32>
    %108 = vector.broadcast %107 : vector<16x1xf32> to vector<16x128xf32>
    %109 = arith.subf %103, %108 : vector<16x128xf32>
    %110 = vector.broadcast %107 : vector<16x1xf32> to vector<16x128xf32>
    %111 = arith.subf %103, %110 : vector<16x128xf32>
    %112 = arith.mulf %109, %111 : vector<16x128xf32>
    %cst_58 = arith.constant dense<0.000000e+00> : vector<16xf32>
    %113 = vector.multi_reduction <add>, %112, %cst_58 [1] : vector<16x128xf32> to vector<16xf32>
    %114 = vector.shape_cast %113 : vector<16xf32> to vector<16x1xf32>
    %cst_59 = arith.constant 1.280000e+02 : f32
    %115 = vector.broadcast %cst_59 : f32 to vector<16x1xf32>
    %116 = arith.divf %114, %115 : vector<16x1xf32>
    %117 = vector.broadcast %107 : vector<16x1xf32> to vector<16x128xf32>
    %118 = arith.subf %103, %117 : vector<16x128xf32>
    %cst_60 = arith.constant 9.99999996E-13 : f32
    %119 = vector.broadcast %cst_60 : f32 to vector<16x1xf32>
    %120 = arith.addf %116, %119 : vector<16x1xf32>
    %121 = math.rsqrt %120 : vector<16x1xf32>
    %122 = vector.broadcast %121 : vector<16x1xf32> to vector<16x128xf32>
    %123 = arith.mulf %118, %122 : vector<16x128xf32>
    %124 = vector.broadcast %44 : vector<1x128xf32> to vector<16x128xf32>
    %125 = arith.mulf %123, %124 : vector<16x128xf32>
    %126 = vector.broadcast %46 : vector<1x128xf32> to vector<16x128xf32>
    %127 = arith.addf %125, %126 : vector<16x128xf32>
    %128 = arith.truncf %127 : vector<16x128xf32> to vector<16x128xbf16>
    %cst_61 = arith.constant dense<0.000000e+00> : vector<16x256xf32>
    %129 = tpu.matmul %128, %48, %cst_61 {dimension_numbers = #tpu.dot_dimension_numbers<[1], [0], [0], [1], [0, 0, 1, 1], [], []>} : vector<16x128xbf16>, vector<128x256xbf16>, vector<16x256xf32> -> vector<16x256xf32>
    %130 = vector.broadcast %50 : vector<1x256xf32> to vector<16x256xf32>
    %131 = arith.addf %129, %130 : vector<16x256xf32>
    %cst_62 = arith.constant 5.000000e-01 : f32
    %132 = vector.broadcast %cst_62 : f32 to vector<16x256xf32>
    %133 = arith.mulf %132, %131 : vector<16x256xf32>
    %cst_63 = arith.constant 4.471500e-02 : f32
    %134 = vector.broadcast %cst_63 : f32 to vector<16x256xf32>
    %135 = arith.mulf %134, %131 : vector<16x256xf32>
    %136 = arith.mulf %135, %131 : vector<16x256xf32>
    %137 = arith.mulf %136, %131 : vector<16x256xf32>
    %138 = arith.addf %131, %137 : vector<16x256xf32>
    %cst_64 = arith.constant 0.797884583 : f32
    %139 = vector.broadcast %cst_64 : f32 to vector<16x256xf32>
    %140 = arith.mulf %139, %138 : vector<16x256xf32>
    %141 = math.tanh %140 : vector<16x256xf32>
    %cst_65 = arith.constant 1.000000e+00 : f32
    %142 = vector.broadcast %cst_65 : f32 to vector<16x256xf32>
    %143 = arith.addf %142, %141 : vector<16x256xf32>
    %144 = arith.mulf %133, %143 : vector<16x256xf32>
    %145 = arith.truncf %144 : vector<16x256xf32> to vector<16x256xbf16>
    %cst_66 = arith.constant dense<0.000000e+00> : vector<16x128xf32>
    %146 = tpu.matmul %145, %52, %cst_66 {dimension_numbers = #tpu.dot_dimension_numbers<[1], [0], [0], [1], [0, 0, 1, 1], [], []>} : vector<16x256xbf16>, vector<256x128xbf16>, vector<16x128xf32> -> vector<16x128xf32>
    %147 = vector.broadcast %54 : vector<1x128xf32> to vector<16x128xf32>
    %148 = arith.addf %146, %147 : vector<16x128xf32>
    %149 = arith.addf %148, %127 : vector<16x128xf32>
    %cst_67 = arith.constant dense<0.000000e+00> : vector<16xf32>
    %150 = vector.multi_reduction <add>, %149, %cst_67 [1] : vector<16x128xf32> to vector<16xf32>
    %151 = vector.shape_cast %150 : vector<16xf32> to vector<16x1xf32>
    %cst_68 = arith.constant 1.280000e+02 : f32
    %152 = vector.broadcast %cst_68 : f32 to vector<16x1xf32>
    %153 = arith.divf %151, %152 : vector<16x1xf32>
    %154 = vector.broadcast %153 : vector<16x1xf32> to vector<16x128xf32>
    %155 = arith.subf %149, %154 : vector<16x128xf32>
    %156 = vector.broadcast %153 : vector<16x1xf32> to vector<16x128xf32>
    %157 = arith.subf %149, %156 : vector<16x128xf32>
    %158 = arith.mulf %155, %157 : vector<16x128xf32>
    %cst_69 = arith.constant dense<0.000000e+00> : vector<16xf32>
    %159 = vector.multi_reduction <add>, %158, %cst_69 [1] : vector<16x128xf32> to vector<16xf32>
    %160 = vector.shape_cast %159 : vector<16xf32> to vector<16x1xf32>
    %cst_70 = arith.constant 1.280000e+02 : f32
    %161 = vector.broadcast %cst_70 : f32 to vector<16x1xf32>
    %162 = arith.divf %160, %161 : vector<16x1xf32>
    %163 = vector.broadcast %153 : vector<16x1xf32> to vector<16x128xf32>
    %164 = arith.subf %149, %163 : vector<16x128xf32>
    %cst_71 = arith.constant 9.99999996E-13 : f32
    %165 = vector.broadcast %cst_71 : f32 to vector<16x1xf32>
    %166 = arith.addf %162, %165 : vector<16x1xf32>
    %167 = math.rsqrt %166 : vector<16x1xf32>
    %168 = vector.broadcast %167 : vector<16x1xf32> to vector<16x128xf32>
    %169 = arith.mulf %164, %168 : vector<16x128xf32>
    %170 = vector.broadcast %56 : vector<1x128xf32> to vector<16x128xf32>
    %171 = arith.mulf %169, %170 : vector<16x128xf32>
    %172 = vector.broadcast %58 : vector<1x128xf32> to vector<16x128xf32>
    %173 = arith.addf %171, %172 : vector<16x128xf32>
    %c1 = arith.constant 1 : index
    %c0_72 = arith.constant 0 : index
    %c0_73 = arith.constant 0 : index
    %174 = vector.load %arg5[%c1, %c0_72, %c0_73] : memref<2x128x384xbf16, #tpu.memory_space<vmem>>, vector<1x128x384xbf16>
    %175 = vector.shape_cast %174 : vector<1x128x384xbf16> to vector<128x384xbf16>
    %c1_74 = arith.constant 1 : index
    %c0_75 = arith.constant 0 : index
    %c0_76 = arith.constant 0 : index
    %176 = vector.load %arg6[%c1_74, %c0_75, %c0_76] : memref<2x1x384xf32, #tpu.memory_space<vmem>>, vector<1x1x384xf32>
    %177 = vector.shape_cast %176 : vector<1x1x384xf32> to vector<1x384xf32>
    %c1_77 = arith.constant 1 : index
    %c0_78 = arith.constant 0 : index
    %c0_79 = arith.constant 0 : index
    %178 = vector.load %arg7[%c1_77, %c0_78, %c0_79] : memref<2x128x128xbf16, #tpu.memory_space<vmem>>, vector<1x128x128xbf16>
    %179 = vector.shape_cast %178 : vector<1x128x128xbf16> to vector<128x128xbf16>
    %c1_80 = arith.constant 1 : index
    %c0_81 = arith.constant 0 : index
    %c0_82 = arith.constant 0 : index
    %180 = vector.load %arg8[%c1_80, %c0_81, %c0_82] : memref<2x1x128xf32, #tpu.memory_space<vmem>>, vector<1x1x128xf32>
    %181 = vector.shape_cast %180 : vector<1x1x128xf32> to vector<1x128xf32>
    %c1_83 = arith.constant 1 : index
    %c0_84 = arith.constant 0 : index
    %c0_85 = arith.constant 0 : index
    %182 = vector.load %arg9[%c1_83, %c0_84, %c0_85] : memref<2x1x128xf32, #tpu.memory_space<vmem>>, vector<1x1x128xf32>
    %183 = vector.shape_cast %182 : vector<1x1x128xf32> to vector<1x128xf32>
    %c1_86 = arith.constant 1 : index
    %c0_87 = arith.constant 0 : index
    %c0_88 = arith.constant 0 : index
    %184 = vector.load %arg10[%c1_86, %c0_87, %c0_88] : memref<2x1x128xf32, #tpu.memory_space<vmem>>, vector<1x1x128xf32>
    %185 = vector.shape_cast %184 : vector<1x1x128xf32> to vector<1x128xf32>
    %c1_89 = arith.constant 1 : index
    %c0_90 = arith.constant 0 : index
    %c0_91 = arith.constant 0 : index
    %186 = vector.load %arg11[%c1_89, %c0_90, %c0_91] : memref<2x128x256xbf16, #tpu.memory_space<vmem>>, vector<1x128x256xbf16>
    %187 = vector.shape_cast %186 : vector<1x128x256xbf16> to vector<128x256xbf16>
    %c1_92 = arith.constant 1 : index
    %c0_93 = arith.constant 0 : index
    %c0_94 = arith.constant 0 : index
    %188 = vector.load %arg12[%c1_92, %c0_93, %c0_94] : memref<2x1x256xf32, #tpu.memory_space<vmem>>, vector<1x1x256xf32>
    %189 = vector.shape_cast %188 : vector<1x1x256xf32> to vector<1x256xf32>
    %c1_95 = arith.constant 1 : index
    %c0_96 = arith.constant 0 : index
    %c0_97 = arith.constant 0 : index
    %190 = vector.load %arg13[%c1_95, %c0_96, %c0_97] : memref<2x256x128xbf16, #tpu.memory_space<vmem>>, vector<1x256x128xbf16>
    %191 = vector.shape_cast %190 : vector<1x256x128xbf16> to vector<256x128xbf16>
    %c1_98 = arith.constant 1 : index
    %c0_99 = arith.constant 0 : index
    %c0_100 = arith.constant 0 : index
    %192 = vector.load %arg14[%c1_98, %c0_99, %c0_100] : memref<2x1x128xf32, #tpu.memory_space<vmem>>, vector<1x1x128xf32>
    %193 = vector.shape_cast %192 : vector<1x1x128xf32> to vector<1x128xf32>
    %c1_101 = arith.constant 1 : index
    %c0_102 = arith.constant 0 : index
    %c0_103 = arith.constant 0 : index
    %194 = vector.load %arg15[%c1_101, %c0_102, %c0_103] : memref<2x1x128xf32, #tpu.memory_space<vmem>>, vector<1x1x128xf32>
    %195 = vector.shape_cast %194 : vector<1x1x128xf32> to vector<1x128xf32>
    %c1_104 = arith.constant 1 : index
    %c0_105 = arith.constant 0 : index
    %c0_106 = arith.constant 0 : index
    %196 = vector.load %arg16[%c1_104, %c0_105, %c0_106] : memref<2x1x128xf32, #tpu.memory_space<vmem>>, vector<1x1x128xf32>
    %197 = vector.shape_cast %196 : vector<1x1x128xf32> to vector<1x128xf32>
    %198 = arith.truncf %173 : vector<16x128xf32> to vector<16x128xbf16>
    %cst_107 = arith.constant dense<0.000000e+00> : vector<16x384xf32>
    %199 = tpu.matmul %198, %175, %cst_107 {dimension_numbers = #tpu.dot_dimension_numbers<[1], [0], [0], [1], [0, 0, 1, 1], [], []>} : vector<16x128xbf16>, vector<128x384xbf16>, vector<16x384xf32> -> vector<16x384xf32>
    %200 = vector.broadcast %177 : vector<1x384xf32> to vector<16x384xf32>
    %201 = arith.addf %199, %200 : vector<16x384xf32>
    %202 = arith.truncf %201 : vector<16x384xf32> to vector<16x384xbf16>
    %203 = vector.extract_strided_slice %202 {offsets = [0, 0], sizes = [16, 64], strides = [1, 1]} : vector<16x384xbf16> to vector<16x64xbf16>
    %204 = vector.extract_strided_slice %202 {offsets = [0, 64], sizes = [16, 64], strides = [1, 1]} : vector<16x384xbf16> to vector<16x64xbf16>
    %205 = tpu.concatenate %203, %204 in 0 : vector<16x64xbf16>, vector<16x64xbf16> -> vector<32x64xbf16>
    %206 = vector.shape_cast %205 : vector<32x64xbf16> to vector<4x8x64xbf16>
    %207 = vector.extract_strided_slice %202 {offsets = [0, 128], sizes = [16, 64], strides = [1, 1]} : vector<16x384xbf16> to vector<16x64xbf16>
    %208 = vector.extract_strided_slice %202 {offsets = [0, 192], sizes = [16, 64], strides = [1, 1]} : vector<16x384xbf16> to vector<16x64xbf16>
    %209 = tpu.concatenate %207, %208 in 0 : vector<16x64xbf16>, vector<16x64xbf16> -> vector<32x64xbf16>
    %210 = vector.shape_cast %209 : vector<32x64xbf16> to vector<4x8x64xbf16>
    %211 = vector.extract_strided_slice %202 {offsets = [0, 256], sizes = [16, 64], strides = [1, 1]} : vector<16x384xbf16> to vector<16x64xbf16>
    %212 = vector.extract_strided_slice %202 {offsets = [0, 320], sizes = [16, 64], strides = [1, 1]} : vector<16x384xbf16> to vector<16x64xbf16>
    %213 = tpu.concatenate %211, %212 in 0 : vector<16x64xbf16>, vector<16x64xbf16> -> vector<32x64xbf16>
    %214 = vector.shape_cast %213 : vector<32x64xbf16> to vector<4x8x64xbf16>
    "tpu.trace_start"() <{level = 10 : i32, message = "bqd,bkd->bqk"}> : () -> ()
    %cst_108 = arith.constant dense<0.000000e+00> : vector<4x8x8xf32>
    %215 = tpu.matmul %206, %210, %cst_108 {dimension_numbers = #tpu.dot_dimension_numbers<[2], [2], [1], [1], [0, 0, 0, 1, 1, 1], [0], [0]>} : vector<4x8x64xbf16>, vector<4x8x64xbf16>, vector<4x8x8xf32> -> vector<4x8x8xf32>
    "tpu.trace_stop"() : () -> ()
    %cst_109 = arith.constant 1.250000e-01 : f32
    %216 = vector.broadcast %cst_109 : f32 to vector<4x8x8xf32>
    %217 = arith.mulf %215, %216 : vector<4x8x8xf32>
    %218 = vector.broadcast %34 : vector<4x1x8xf32> to vector<4x8x8xf32>
    %219 = arith.addf %217, %218 : vector<4x8x8xf32>
    %cst_110 = arith.constant dense<0xFF800000> : vector<4x8xf32>
    %220 = vector.multi_reduction <maximumf>, %219, %cst_110 [2] : vector<4x8x8xf32> to vector<4x8xf32>
    %221 = vector.shape_cast %220 : vector<4x8xf32> to vector<4x8x1xf32>
    %222 = vector.broadcast %221 : vector<4x8x1xf32> to vector<4x8x8xf32>
    %223 = arith.subf %219, %222 : vector<4x8x8xf32>
    %224 = math.exp %223 : vector<4x8x8xf32>
    %cst_111 = arith.constant dense<0.000000e+00> : vector<4x8xf32>
    %225 = vector.multi_reduction <add>, %224, %cst_111 [2] : vector<4x8x8xf32> to vector<4x8xf32>
    %226 = vector.shape_cast %225 : vector<4x8xf32> to vector<4x8x1xf32>
    %227 = tpu.reciprocal %226 {approx = true} : vector<4x8x1xf32> -> vector<4x8x1xf32>
    %228 = vector.broadcast %227 : vector<4x8x1xf32> to vector<4x8x8xf32>
    %229 = arith.mulf %224, %228 : vector<4x8x8xf32>
    %230 = arith.truncf %229 : vector<4x8x8xf32> to vector<4x8x8xbf16>
    "tpu.trace_start"() <{level = 10 : i32, message = "bqk,bkd->bqd"}> : () -> ()
    %cst_112 = arith.constant dense<0.000000e+00> : vector<4x8x64xf32>
    %231 = tpu.matmul %230, %214, %cst_112 {dimension_numbers = #tpu.dot_dimension_numbers<[2], [1], [1], [2], [0, 0, 0, 1, 1, 2], [0], [0]>} : vector<4x8x8xbf16>, vector<4x8x64xbf16>, vector<4x8x64xf32> -> vector<4x8x64xf32>
    "tpu.trace_stop"() : () -> ()
    %232 = vector.shape_cast %231 : vector<4x8x64xf32> to vector<2x16x64xf32>
    %233 = vector.extract_strided_slice %232 {offsets = [0, 0, 0], sizes = [1, 16, 64], strides = [1, 1, 1]} : vector<2x16x64xf32> to vector<1x16x64xf32>
    %234 = vector.shape_cast %233 : vector<1x16x64xf32> to vector<16x64xf32>
    %235 = vector.extract_strided_slice %232 {offsets = [1, 0, 0], sizes = [1, 16, 64], strides = [1, 1, 1]} : vector<2x16x64xf32> to vector<1x16x64xf32>
    %236 = vector.shape_cast %235 : vector<1x16x64xf32> to vector<16x64xf32>
    %237 = tpu.concatenate %234, %236 in 1 : vector<16x64xf32>, vector<16x64xf32> -> vector<16x128xf32>
    %238 = arith.truncf %237 : vector<16x128xf32> to vector<16x128xbf16>
    %cst_113 = arith.constant dense<0.000000e+00> : vector<16x128xf32>
    %239 = tpu.matmul %238, %179, %cst_113 {dimension_numbers = #tpu.dot_dimension_numbers<[1], [0], [0], [1], [0, 0, 1, 1], [], []>} : vector<16x128xbf16>, vector<128x128xbf16>, vector<16x128xf32> -> vector<16x128xf32>
    %240 = vector.broadcast %181 : vector<1x128xf32> to vector<16x128xf32>
    %241 = arith.addf %239, %240 : vector<16x128xf32>
    %242 = arith.addf %241, %173 : vector<16x128xf32>
    %cst_114 = arith.constant dense<0.000000e+00> : vector<16xf32>
    %243 = vector.multi_reduction <add>, %242, %cst_114 [1] : vector<16x128xf32> to vector<16xf32>
    %244 = vector.shape_cast %243 : vector<16xf32> to vector<16x1xf32>
    %cst_115 = arith.constant 1.280000e+02 : f32
    %245 = vector.broadcast %cst_115 : f32 to vector<16x1xf32>
    %246 = arith.divf %244, %245 : vector<16x1xf32>
    %247 = vector.broadcast %246 : vector<16x1xf32> to vector<16x128xf32>
    %248 = arith.subf %242, %247 : vector<16x128xf32>
    %249 = vector.broadcast %246 : vector<16x1xf32> to vector<16x128xf32>
    %250 = arith.subf %242, %249 : vector<16x128xf32>
    %251 = arith.mulf %248, %250 : vector<16x128xf32>
    %cst_116 = arith.constant dense<0.000000e+00> : vector<16xf32>
    %252 = vector.multi_reduction <add>, %251, %cst_116 [1] : vector<16x128xf32> to vector<16xf32>
    %253 = vector.shape_cast %252 : vector<16xf32> to vector<16x1xf32>
    %cst_117 = arith.constant 1.280000e+02 : f32
    %254 = vector.broadcast %cst_117 : f32 to vector<16x1xf32>
    %255 = arith.divf %253, %254 : vector<16x1xf32>
    %256 = vector.broadcast %246 : vector<16x1xf32> to vector<16x128xf32>
    %257 = arith.subf %242, %256 : vector<16x128xf32>
    %cst_118 = arith.constant 9.99999996E-13 : f32
    %258 = vector.broadcast %cst_118 : f32 to vector<16x1xf32>
    %259 = arith.addf %255, %258 : vector<16x1xf32>
    %260 = math.rsqrt %259 : vector<16x1xf32>
    %261 = vector.broadcast %260 : vector<16x1xf32> to vector<16x128xf32>
    %262 = arith.mulf %257, %261 : vector<16x128xf32>
    %263 = vector.broadcast %183 : vector<1x128xf32> to vector<16x128xf32>
    %264 = arith.mulf %262, %263 : vector<16x128xf32>
    %265 = vector.broadcast %185 : vector<1x128xf32> to vector<16x128xf32>
    %266 = arith.addf %264, %265 : vector<16x128xf32>
    %267 = arith.truncf %266 : vector<16x128xf32> to vector<16x128xbf16>
    %cst_119 = arith.constant dense<0.000000e+00> : vector<16x256xf32>
    %268 = tpu.matmul %267, %187, %cst_119 {dimension_numbers = #tpu.dot_dimension_numbers<[1], [0], [0], [1], [0, 0, 1, 1], [], []>} : vector<16x128xbf16>, vector<128x256xbf16>, vector<16x256xf32> -> vector<16x256xf32>
    %269 = vector.broadcast %189 : vector<1x256xf32> to vector<16x256xf32>
    %270 = arith.addf %268, %269 : vector<16x256xf32>
    %cst_120 = arith.constant 5.000000e-01 : f32
    %271 = vector.broadcast %cst_120 : f32 to vector<16x256xf32>
    %272 = arith.mulf %271, %270 : vector<16x256xf32>
    %cst_121 = arith.constant 4.471500e-02 : f32
    %273 = vector.broadcast %cst_121 : f32 to vector<16x256xf32>
    %274 = arith.mulf %273, %270 : vector<16x256xf32>
    %275 = arith.mulf %274, %270 : vector<16x256xf32>
    %276 = arith.mulf %275, %270 : vector<16x256xf32>
    %277 = arith.addf %270, %276 : vector<16x256xf32>
    %cst_122 = arith.constant 0.797884583 : f32
    %278 = vector.broadcast %cst_122 : f32 to vector<16x256xf32>
    %279 = arith.mulf %278, %277 : vector<16x256xf32>
    %280 = math.tanh %279 : vector<16x256xf32>
    %cst_123 = arith.constant 1.000000e+00 : f32
    %281 = vector.broadcast %cst_123 : f32 to vector<16x256xf32>
    %282 = arith.addf %281, %280 : vector<16x256xf32>
    %283 = arith.mulf %272, %282 : vector<16x256xf32>
    %284 = arith.truncf %283 : vector<16x256xf32> to vector<16x256xbf16>
    %cst_124 = arith.constant dense<0.000000e+00> : vector<16x128xf32>
    %285 = tpu.matmul %284, %191, %cst_124 {dimension_numbers = #tpu.dot_dimension_numbers<[1], [0], [0], [1], [0, 0, 1, 1], [], []>} : vector<16x256xbf16>, vector<256x128xbf16>, vector<16x128xf32> -> vector<16x128xf32>
    %286 = vector.broadcast %193 : vector<1x128xf32> to vector<16x128xf32>
    %287 = arith.addf %285, %286 : vector<16x128xf32>
    %288 = arith.addf %287, %266 : vector<16x128xf32>
    %cst_125 = arith.constant dense<0.000000e+00> : vector<16xf32>
    %289 = vector.multi_reduction <add>, %288, %cst_125 [1] : vector<16x128xf32> to vector<16xf32>
    %290 = vector.shape_cast %289 : vector<16xf32> to vector<16x1xf32>
    %cst_126 = arith.constant 1.280000e+02 : f32
    %291 = vector.broadcast %cst_126 : f32 to vector<16x1xf32>
    %292 = arith.divf %290, %291 : vector<16x1xf32>
    %293 = vector.broadcast %292 : vector<16x1xf32> to vector<16x128xf32>
    %294 = arith.subf %288, %293 : vector<16x128xf32>
    %295 = vector.broadcast %292 : vector<16x1xf32> to vector<16x128xf32>
    %296 = arith.subf %288, %295 : vector<16x128xf32>
    %297 = arith.mulf %294, %296 : vector<16x128xf32>
    %cst_127 = arith.constant dense<0.000000e+00> : vector<16xf32>
    %298 = vector.multi_reduction <add>, %297, %cst_127 [1] : vector<16x128xf32> to vector<16xf32>
    %299 = vector.shape_cast %298 : vector<16xf32> to vector<16x1xf32>
    %cst_128 = arith.constant 1.280000e+02 : f32
    %300 = vector.broadcast %cst_128 : f32 to vector<16x1xf32>
    %301 = arith.divf %299, %300 : vector<16x1xf32>
    %302 = vector.broadcast %292 : vector<16x1xf32> to vector<16x128xf32>
    %303 = arith.subf %288, %302 : vector<16x128xf32>
    %cst_129 = arith.constant 9.99999996E-13 : f32
    %304 = vector.broadcast %cst_129 : f32 to vector<16x1xf32>
    %305 = arith.addf %301, %304 : vector<16x1xf32>
    %306 = math.rsqrt %305 : vector<16x1xf32>
    %307 = vector.broadcast %306 : vector<16x1xf32> to vector<16x128xf32>
    %308 = arith.mulf %303, %307 : vector<16x128xf32>
    %309 = vector.broadcast %195 : vector<1x128xf32> to vector<16x128xf32>
    %310 = arith.mulf %308, %309 : vector<16x128xf32>
    %311 = vector.broadcast %197 : vector<1x128xf32> to vector<16x128xf32>
    %312 = arith.addf %310, %311 : vector<16x128xf32>
    %313 = vector.extract_strided_slice %312 {offsets = [0, 0], sizes = [1, 128], strides = [1, 1]} : vector<16x128xf32> to vector<1x128xf32>
    %314 = vector.extract_strided_slice %312 {offsets = [8, 0], sizes = [1, 128], strides = [1, 1]} : vector<16x128xf32> to vector<1x128xf32>
    %315 = tpu.concatenate %313, %314 in 0 : vector<1x128xf32>, vector<1x128xf32> -> vector<2x128xf32>
    %316 = arith.truncf %315 : vector<2x128xf32> to vector<2x128xbf16>
    %c0_130 = arith.constant 0 : index
    %c0_131 = arith.constant 0 : index
    %317 = vector.load %arg17[%c0_130, %c0_131] : memref<128x128xbf16, #tpu.memory_space<vmem>>, vector<128x128xbf16>
    %cst_132 = arith.constant dense<0.000000e+00> : vector<2x128xf32>
    %318 = tpu.matmul %316, %317, %cst_132 {dimension_numbers = #tpu.dot_dimension_numbers<[1], [0], [0], [1], [0, 0, 1, 1], [], []>} : vector<2x128xbf16>, vector<128x128xbf16>, vector<2x128xf32> -> vector<2x128xf32>
    %c0_133 = arith.constant 0 : index
    %c0_134 = arith.constant 0 : index
    %319 = vector.load %arg18[%c0_133, %c0_134] : memref<1x128xf32, #tpu.memory_space<vmem>>, vector<1x128xf32>
    %320 = vector.broadcast %319 : vector<1x128xf32> to vector<2x128xf32>
    %321 = arith.addf %318, %320 : vector<2x128xf32>
    %322 = math.tanh %321 : vector<2x128xf32>
    %323 = arith.truncf %322 : vector<2x128xf32> to vector<2x128xbf16>
    %c0_135 = arith.constant 0 : index
    %c0_136 = arith.constant 0 : index
    %324 = vector.load %arg19[%c0_135, %c0_136] : memref<128x128xbf16, #tpu.memory_space<vmem>>, vector<128x128xbf16>
    %cst_137 = arith.constant dense<0.000000e+00> : vector<2x128xf32>
    %325 = tpu.matmul %323, %324, %cst_137 {dimension_numbers = #tpu.dot_dimension_numbers<[1], [0], [0], [1], [0, 0, 1, 1], [], []>} : vector<2x128xbf16>, vector<128x128xbf16>, vector<2x128xf32> -> vector<2x128xf32>
    %c0_138 = arith.constant 0 : index
    %c0_139 = arith.constant 0 : index
    %326 = vector.load %arg20[%c0_138, %c0_139] : memref<1x128xf32, #tpu.memory_space<vmem>>, vector<1x128xf32>
    %327 = vector.broadcast %326 : vector<1x128xf32> to vector<2x128xf32>
    %328 = arith.addf %325, %327 : vector<2x128xf32>
    %c0_140 = arith.constant 0 : index
    %c0_141 = arith.constant 0 : index
    %329 = vector.load %arg21[%c0_140, %c0_141] : memref<2x128xf32, #tpu.memory_space<vmem>>, vector<2x128xf32>
    tpu.vector_store %arg21[%c0_140, %c0_141], %328 {strides = array<i32>} : memref<2x128xf32, #tpu.memory_space<vmem>>, vector<2x128xf32>,
    return
  }
  func.func @transform_0(%arg0: i32) -> (i32, i32) {
    %c0_i32 = arith.constant 0 : i32
    %c0_i32_0 = arith.constant 0 : i32
    %c0_i32_1 = arith.constant 0 : i32
    return %c0_i32, %c0_i32_0 : i32, i32
  }
  func.func @transform_1(%arg0: i32) -> (i32, i32) {
    %c0_i32 = arith.constant 0 : i32
    %c0_i32_0 = arith.constant 0 : i32
    %c0_i32_1 = arith.constant 0 : i32
    return %c0_i32, %c0_i32_0 : i32, i32
  }
  func.func @transform_2(%arg0: i32) -> (i32, i32) {
    %c0_i32 = arith.constant 0 : i32
    %c0_i32_0 = arith.constant 0 : i32
    %c0_i32_1 = arith.constant 0 : i32
    return %c0_i32, %c0_i32_0 : i32, i32
  }
  func.func @transform_3(%arg0: i32) -> (i32, i32) {
    %c0_i32 = arith.constant 0 : i32
    %c0_i32_0 = arith.constant 0 : i32
    %c0_i32_1 = arith.constant 0 : i32
    return %c0_i32, %c0_i32_0 : i32, i32
  }
  func.func @transform_4(%arg0: i32) -> (i32, i32, i32) {
    %c0_i32 = arith.constant 0 : i32
    %c0_i32_0 = arith.constant 0 : i32
    %c0_i32_1 = arith.constant 0 : i32
    %c0_i32_2 = arith.constant 0 : i32
    return %c0_i32, %c0_i32_0, %c0_i32_1 : i32, i32, i32
  }
  func.func @transform_5(%arg0: i32) -> (i32, i32, i32) {
    %c0_i32 = arith.constant 0 : i32
    %c0_i32_0 = arith.constant 0 : i32
    %c0_i32_1 = arith.constant 0 : i32
    %c0_i32_2 = arith.constant 0 : i32
    return %c0_i32, %c0_i32_0, %c0_i32_1 : i32, i32, i32
  }
  func.func @transform_6(%arg0: i32) -> (i32, i32, i32) {
    %c0_i32 = arith.constant 0 : i32
    %c0_i32_0 = arith.constant 0 : i32
    %c0_i32_1 = arith.constant 0 : i32
    %c0_i32_2 = arith.constant 0 : i32
    return %c0_i32, %c0_i32_0, %c0_i32_1 : i32, i32, i32
  }
  func.func @transform_7(%arg0: i32) -> (i32, i32, i32) {
    %c0_i32 = arith.constant 0 : i32
    %c0_i32_0 = arith.constant 0 : i32
    %c0_i32_1 = arith.constant 0 : i32
    %c0_i32_2 = arith.constant 0 : i32
    return %c0_i32, %c0_i32_0, %c0_i32_1 : i32, i32, i32
  }
  func.func @transform_8(%arg0: i32) -> (i32, i32, i32) {
    %c0_i32 = arith.constant 0 : i32
    %c0_i32_0 = arith.constant 0 : i32
    %c0_i32_1 = arith.constant 0 : i32
    %c0_i32_2 = arith.constant 0 : i32
    return %c0_i32, %c0_i32_0, %c0_i32_1 : i32, i32, i32
  }
  func.func @transform_9(%arg0: i32) -> (i32, i32, i32) {
    %c0_i32 = arith.constant 0 : i32
    %c0_i32_0 = arith.constant 0 : i32
    %c0_i32_1 = arith.constant 0 : i32
    %c0_i32_2 = arith.constant 0 : i32
    return %c0_i32, %c0_i32_0, %c0_i32_1 : i32, i32, i32
  }
  func.func @transform_10(%arg0: i32) -> (i32, i32, i32) {
    %c0_i32 = arith.constant 0 : i32
    %c0_i32_0 = arith.constant 0 : i32
    %c0_i32_1 = arith.constant 0 : i32
    %c0_i32_2 = arith.constant 0 : i32
    return %c0_i32, %c0_i32_0, %c0_i32_1 : i32, i32, i32
  }
  func.func @transform_11(%arg0: i32) -> (i32, i32, i32) {
    %c0_i32 = arith.constant 0 : i32
    %c0_i32_0 = arith.constant 0 : i32
    %c0_i32_1 = arith.constant 0 : i32
    %c0_i32_2 = arith.constant 0 : i32
    return %c0_i32, %c0_i32_0, %c0_i32_1 : i32, i32, i32
  }
  func.func @transform_12(%arg0: i32) -> (i32, i32, i32) {
    %c0_i32 = arith.constant 0 : i32
    %c0_i32_0 = arith.constant 0 : i32
    %c0_i32_1 = arith.constant 0 : i32
    %c0_i32_2 = arith.constant 0 : i32
    return %c0_i32, %c0_i32_0, %c0_i32_1 : i32, i32, i32
  }
  func.func @transform_13(%arg0: i32) -> (i32, i32, i32) {
    %c0_i32 = arith.constant 0 : i32
    %c0_i32_0 = arith.constant 0 : i32
    %c0_i32_1 = arith.constant 0 : i32
    %c0_i32_2 = arith.constant 0 : i32
    return %c0_i32, %c0_i32_0, %c0_i32_1 : i32, i32, i32
  }
  func.func @transform_14(%arg0: i32) -> (i32, i32, i32) {
    %c0_i32 = arith.constant 0 : i32
    %c0_i32_0 = arith.constant 0 : i32
    %c0_i32_1 = arith.constant 0 : i32
    %c0_i32_2 = arith.constant 0 : i32
    return %c0_i32, %c0_i32_0, %c0_i32_1 : i32, i32, i32
  }
  func.func @transform_15(%arg0: i32) -> (i32, i32, i32) {
    %c0_i32 = arith.constant 0 : i32
    %c0_i32_0 = arith.constant 0 : i32
    %c0_i32_1 = arith.constant 0 : i32
    %c0_i32_2 = arith.constant 0 : i32
    return %c0_i32, %c0_i32_0, %c0_i32_1 : i32, i32, i32
  }
  func.func @transform_16(%arg0: i32) -> (i32, i32) {
    %c0_i32 = arith.constant 0 : i32
    %c0_i32_0 = arith.constant 0 : i32
    %c0_i32_1 = arith.constant 0 : i32
    return %c0_i32, %c0_i32_0 : i32, i32
  }
  func.func @transform_17(%arg0: i32) -> (i32, i32) {
    %c0_i32 = arith.constant 0 : i32
    %c0_i32_0 = arith.constant 0 : i32
    %c0_i32_1 = arith.constant 0 : i32
    return %c0_i32, %c0_i32_0 : i32, i32
  }
  func.func @transform_18(%arg0: i32) -> (i32, i32) {
    %c0_i32 = arith.constant 0 : i32
    %c0_i32_0 = arith.constant 0 : i32
    %c0_i32_1 = arith.constant 0 : i32
    return %c0_i32, %c0_i32_0 : i32, i32
  }
  func.func @transform_19(%arg0: i32) -> (i32, i32) {
    %c0_i32 = arith.constant 0 : i32
    %c0_i32_0 = arith.constant 0 : i32
    %c0_i32_1 = arith.constant 0 : i32
    return %c0_i32, %c0_i32_0 : i32, i32
  }
  func.func @transform_20(%arg0: i32) -> (i32, i32) {
    %c0_i32 = arith.constant 0 : i32
    %c0_i32_0 = arith.constant 0 : i32
    %c0_i32_1 = arith.constant 0 : i32
    return %c0_i32, %c0_i32_0 : i32, i32
  }
}

</mosaic_0001>

<llo_original>
// kernel: sentiment_binary_forward.1
$region0: #{sentiment_binary_forward.1}
  #allocation0 [shape = 'u32[]', space=smem, size = 0x4, offset = 0x4, fixed_abs, tag = 'smem constant byte address 0x4 - core index']
  #allocation1 [shape = 'u32[144,128]{1,0:T(1,128)}', space=vmem, size = 0x12000, scoped, tag = 'internal scratch']
  %s0 = inlined_call_operand.vmem [shape: f32[16,128], index: 0, kind: input, shape index: {}]
  %s1 = inlined_call_operand.vmem [shape: s32[2,8], index: 1, kind: input, shape index: {}]
  %s2 = inlined_call_operand.vmem [shape: f32[1,128], index: 2, kind: input, shape index: {}]
  %s3 = inlined_call_operand.vmem [shape: f32[1,128], index: 3, kind: input, shape index: {}]
  %s4 = inlined_call_operand.hbm [shape: bf16[2,128,384], index: 4, kind: input, shape index: {}]
  %s5 = inlined_call_operand.vmem [shape: f32[2,1,384], index: 5, kind: input, shape index: {}]
  %s6 = inlined_call_operand.vmem [shape: bf16[2,128,128], index: 6, kind: input, shape index: {}]
  %s7 = inlined_call_operand.vmem [shape: f32[2,1,128], index: 7, kind: input, shape index: {}]
  %s8 = inlined_call_operand.vmem [shape: f32[2,1,128], index: 8, kind: input, shape index: {}]
  %s9 = inlined_call_operand.vmem [shape: f32[2,1,128], index: 9, kind: input, shape index: {}]
  %s10 = inlined_call_operand.vmem [shape: bf16[2,128,256], index: 10, kind: input, shape index: {}]
  %s11 = inlined_call_operand.vmem [shape: f32[2,1,256], index: 11, kind: input, shape index: {}]
  %s12 = inlined_call_operand.hbm [shape: bf16[2,256,128], index: 12, kind: input, shape index: {}]
  %s13 = inlined_call_operand.vmem [shape: f32[2,1,128], index: 13, kind: input, shape index: {}]
  %s14 = inlined_call_operand.vmem [shape: f32[2,1,128], index: 14, kind: input, shape index: {}]
  %s15 = inlined_call_operand.vmem [shape: f32[2,1,128], index: 15, kind: input, shape index: {}]
  %s16 = inlined_call_operand.vmem [shape: bf16[128,128], index: 16, kind: input, shape index: {}]
  %s17 = inlined_call_operand.vmem [shape: f32[1,128], index: 17, kind: input, shape index: {}]
  %s18 = inlined_call_operand.hbm [shape: bf16[128,128], index: 18, kind: input, shape index: {}]
  %s19 = inlined_call_operand.vmem [shape: f32[1,128], index: 19, kind: input, shape index: {}]
  %s20 = inlined_call_operand.hbm [shape: f32[2,128], index: 20, kind: output, shape index: {}]
  %s21 = sld [smem:[#allocation0]]
  $region102: #{sentiment_binary_forward.1} parent=0
    _
  %s23 = ssub.s32 1, %s21
  %s24 = scalar_select 0, %s23, %s21
  $region1: #{sentiment_binary_forward.1} parent=0
    #allocation2 [shape = 'u8[196608]{0}', space=vmem, size = 0x30000, scoped, tag = 'input window, operand 4, single buffered']
    #allocation3 [shape = 's32[1]{0}', space=sflag, size = 0x4, scoped, tag = 'scoped memory for sentiment_binary_forward.1']
    #allocation4 [shape = 's32[1]{0}', space=sflag, size = 0x4, scoped, tag = 'scoped memory for sentiment_binary_forward.1']
    #allocation5 [shape = 'u8[131072]{0}', space=vmem, size = 0x20000, scoped, tag = 'input window, operand 12, single buffered']
    #allocation6 [shape = 's32[1]{0}', space=sflag, size = 0x4, scoped, tag = 'scoped memory for sentiment_binary_forward.1']
    #allocation7 [shape = 'u8[32768]{0}', space=vmem, size = 0x8000, scoped, tag = 'input window, operand 18, single buffered']
    #allocation8 [shape = 'u8[1024]{0}', space=vmem, size = 0x400, scoped, tag = 'output window, operand 0, single buffered']
    %25 = vsyncpa [#allocation3], 0
    %26 = vsyncpa [#allocation6], 0
    %27 = vsyncpa [#allocation4], 0
    // Predicated region
    $region2: #{sentiment_binary_forward.1} parent=1 // pred_check
      _
    $region3: #{sentiment_binary_forward.1} parent=1 // pred_check_branch
      %29 = sbr.rel (0) target = $region5
    $region4: #{sentiment_binary_forward.1} parent=1 // pred_region
      _
    $region5: #{sentiment_binary_forward.1} parent=1 // pred_fallthru
      _
    // Predicated region
    $region6: #{sentiment_binary_forward.1} parent=1 // pred_check
      _
    $region7: #{sentiment_binary_forward.1} parent=1 // pred_check_branch
      %31 = sbr.rel (0) target = $region9
    $region8: #{sentiment_binary_forward.1} parent=1 // pred_region
      _
    $region9: #{sentiment_binary_forward.1} parent=1 // pred_fallthru
      _
    // Predicated region
    $region10: #{sentiment_binary_forward.1} parent=1 // pred_check
      _
    $region11: #{sentiment_binary_forward.1} parent=1 // pred_check_branch
      %33 = sbr.rel (0) target = $region13
    $region12: #{sentiment_binary_forward.1} parent=1 // pred_region
      _
    $region13: #{sentiment_binary_forward.1} parent=1 // pred_fallthru
      _
    // Predicated region
    $region14: #{sentiment_binary_forward.1} parent=1 // pred_check
      _
    $region15: #{sentiment_binary_forward.1} parent=1 // pred_check_branch
      %35 = sbr.rel (0) target = $region17
    $region16: #{sentiment_binary_forward.1} parent=1 // pred_region
      _
    $region17: #{sentiment_binary_forward.1} parent=1 // pred_fallthru
      _
    // Predicated region
    $region18: #{sentiment_binary_forward.1} parent=1 // pred_check
      _
    $region19: #{sentiment_binary_forward.1} parent=1 // pred_check_branch
      %37 = sbr.rel (0) target = $region21
    $region20: #{sentiment_binary_forward.1} parent=1 // pred_region
      %s39 = ssub.s32 6144, 6144
      %40 = vsyncadd [#allocation3], %s39
      %s41 = sshll.u32 [#allocation2], 4
      %s42 = int_to_ptr.vmem [resolvable:$true] %s41
      %47 = dma.hbm_to_vmem [thread:$0]  %s4, 6144, %s42, [#allocation3], 192, 192, 12
    $region21: #{sentiment_binary_forward.1} parent=1 // pred_fallthru
      _
    // Predicated region
    $region22: #{sentiment_binary_forward.1} parent=1 // pred_check
      _
    $region23: #{sentiment_binary_forward.1} parent=1 // pred_check_branch
      %49 = sbr.rel (0) target = $region25
    $region24: #{sentiment_binary_forward.1} parent=1 // pred_region
      _
    $region25: #{sentiment_binary_forward.1} parent=1 // pred_fallthru
      _
    // Predicated region
    $region26: #{sentiment_binary_forward.1} parent=1 // pred_check
      _
    $region27: #{sentiment_binary_forward.1} parent=1 // pred_check_branch
      %51 = sbr.rel (0) target = $region29
    $region28: #{sentiment_binary_forward.1} parent=1 // pred_region
      _
    $region29: #{sentiment_binary_forward.1} parent=1 // pred_fallthru
      _
    // Predicated region
    $region30: #{sentiment_binary_forward.1} parent=1 // pred_check
      _
    $region31: #{sentiment_binary_forward.1} parent=1 // pred_check_branch
      %53 = sbr.rel (0) target = $region33
    $region32: #{sentiment_binary_forward.1} parent=1 // pred_region
      _
    $region33: #{sentiment_binary_forward.1} parent=1 // pred_fallthru
      _
    // Predicated region
    $region34: #{sentiment_binary_forward.1} parent=1 // pred_check
      _
    $region35: #{sentiment_binary_forward.1} parent=1 // pred_check_branch
      %55 = sbr.rel (0) target = $region37
    $region36: #{sentiment_binary_forward.1} parent=1 // pred_region
      _
    $region37: #{sentiment_binary_forward.1} parent=1 // pred_fallthru
      _
    // Predicated region
    $region38: #{sentiment_binary_forward.1} parent=1 // pred_check
      _
    $region39: #{sentiment_binary_forward.1} parent=1 // pred_check_branch
      %57 = sbr.rel (0) target = $region41
    $region40: #{sentiment_binary_forward.1} parent=1 // pred_region
      _
    $region41: #{sentiment_binary_forward.1} parent=1 // pred_fallthru
      _
    // Predicated region
    $region42: #{sentiment_binary_forward.1} parent=1 // pred_check
      _
    $region43: #{sentiment_binary_forward.1} parent=1 // pred_check_branch
      %59 = sbr.rel (0) target = $region45
    $region44: #{sentiment_binary_forward.1} parent=1 // pred_region
      _
    $region45: #{sentiment_binary_forward.1} parent=1 // pred_fallthru
      _
    // Predicated region
    $region46: #{sentiment_binary_forward.1} parent=1 // pred_check
      _
    $region47: #{sentiment_binary_forward.1} parent=1 // pred_check_branch
      %61 = sbr.rel (0) target = $region49
    $region48: #{sentiment_binary_forward.1} parent=1 // pred_region
      _
    $region49: #{sentiment_binary_forward.1} parent=1 // pred_fallthru
      _
    // Predicated region
    $region50: #{sentiment_binary_forward.1} parent=1 // pred_check
      _
    $region51: #{sentiment_binary_forward.1} parent=1 // pred_check_branch
      %63 = sbr.rel (0) target = $region53
    $region52: #{sentiment_binary_forward.1} parent=1 // pred_region
      %s65 = ssub.s32 4096, 4096
      %66 = vsyncadd [#allocation6], %s65
      %s67 = sshll.u32 [#allocation5], 4
      %s68 = int_to_ptr.vmem [resolvable:$true] %s67
      %73 = dma.hbm_to_vmem [thread:$0]  %s12, 4096, %s68, [#allocation6], 64, 64, 4
    $region53: #{sentiment_binary_forward.1} parent=1 // pred_fallthru
      _
    // Predicated region
    $region54: #{sentiment_binary_forward.1} parent=1 // pred_check
      _
    $region55: #{sentiment_binary_forward.1} parent=1 // pred_check_branch
      %75 = sbr.rel (0) target = $region57
    $region56: #{sentiment_binary_forward.1} parent=1 // pred_region
      _
    $region57: #{sentiment_binary_forward.1} parent=1 // pred_fallthru
      _
    // Predicated region
    $region58: #{sentiment_binary_forward.1} parent=1 // pred_check
      _
    $region59: #{sentiment_binary_forward.1} parent=1 // pred_check_branch
      %77 = sbr.rel (0) target = $region61
    $region60: #{sentiment_binary_forward.1} parent=1 // pred_region
      _
    $region61: #{sentiment_binary_forward.1} parent=1 // pred_fallthru
      _
    // Predicated region
    $region62: #{sentiment_binary_forward.1} parent=1 // pred_check
      _
    $region63: #{sentiment_binary_forward.1} parent=1 // pred_check_branch
      %79 = sbr.rel (0) target = $region65
    $region64: #{sentiment_binary_forward.1} parent=1 // pred_region
      _
    $region65: #{sentiment_binary_forward.1} parent=1 // pred_fallthru
      _
    // Predicated region
    $region66: #{sentiment_binary_forward.1} parent=1 // pred_check
      _
    $region67: #{sentiment_binary_forward.1} parent=1 // pred_check_branch
      %81 = sbr.rel (0) target = $region69
    $region68: #{sentiment_binary_forward.1} parent=1 // pred_region
      _
    $region69: #{sentiment_binary_forward.1} parent=1 // pred_fallthru
      _
    // Predicated region
    $region70: #{sentiment_binary_forward.1} parent=1 // pred_check
      _
    $region71: #{sentiment_binary_forward.1} parent=1 // pred_check_branch
      %83 = sbr.rel (0) target = $region73
    $region72: #{sentiment_binary_forward.1} parent=1 // pred_region
      _
    $region73: #{sentiment_binary_forward.1} parent=1 // pred_fallthru
      _
    // Predicated region
    $region74: #{sentiment_binary_forward.1} parent=1 // pred_check
      _
    $region75: #{sentiment_binary_forward.1} parent=1 // pred_check_branch
      %85 = sbr.rel (0) target = $region77
    $region76: #{sentiment_binary_forward.1} parent=1 // pred_region
      %s87 = ssub.s32 1024, 1024
      %88 = vsyncadd [#allocation6], %s87
      %s89 = sshll.u32 [#allocation7], 4
      %s90 = int_to_ptr.vmem [resolvable:$true] %s89
      %95 = dma.hbm_to_vmem [thread:$0]  %s18, 1024, %s90, [#allocation6], 64, 64, 4
    $region77: #{sentiment_binary_forward.1} parent=1 // pred_fallthru
      _
    // Predicated region
    $region78: #{sentiment_binary_forward.1} parent=1 // pred_check
      _
    $region79: #{sentiment_binary_forward.1} parent=1 // pred_check_branch
      %97 = sbr.rel (0) target = $region81
    $region80: #{sentiment_binary_forward.1} parent=1 // pred_region
      _
    $region81: #{sentiment_binary_forward.1} parent=1 // pred_fallthru
      _
    // Predicated region
    $region82: #{sentiment_binary_forward.1} parent=1 // pred_check
      _
    $region83: #{sentiment_binary_forward.1} parent=1 // pred_check_branch
      %99 = sbr.rel (0) target = $region85
    $region84: #{sentiment_binary_forward.1} parent=1 // pred_region
      %100 = dma.done [#allocation3], 6144
    $region85: #{sentiment_binary_forward.1} parent=1 // pred_fallthru
      _
    // Predicated region
    $region86: #{sentiment_binary_forward.1} parent=1 // pred_check
      _
    $region87: #{sentiment_binary_forward.1} parent=1 // pred_check_branch
      %102 = sbr.rel (0) target = $region89
    $region88: #{sentiment_binary_forward.1} parent=1 // pred_region
      %103 = dma.done [#allocation6], 4096
    $region89: #{sentiment_binary_forward.1} parent=1 // pred_fallthru
      _
    // Predicated region
    $region90: #{sentiment_binary_forward.1} parent=1 // pred_check
      _
    $region91: #{sentiment_binary_forward.1} parent=1 // pred_check_branch
      %105 = sbr.rel (0) target = $region93
    $region92: #{sentiment_binary_forward.1} parent=1 // pred_region
      %106 = dma.done [#allocation6], 1024
    $region93: #{sentiment_binary_forward.1} parent=1 // pred_fallthru
      _
    %v108 = vld [vmem:[%s0] sm:$0xff]
    %v109 = vld [vmem:[%s0 + $0x8] sm:$0xff]
    %v110 = vld [vmem:[%s2] sm:$0x1]
    %v111 = vld [vmem:[%s3] sm:$0x1]
    %112 = vadd.xlane.f32.xlu0 %v108
    %v113 = vpop.xlane.xlu0 %112
    %114 = vadd.xlane.f32.xlu0 %v109
    %v115 = vpop.xlane.xlu0 %114
    %v116 = vrcp.pop 128.0
    %v117 = vmul.f32 %v113, %v116
    %v118 = vmul.f32 %v115, %v116
    %v119 = vsub.f32 %v108, %v117
    %v120 = vsub.f32 %v109, %v118
    %v121 = vmul.f32 %v119, %v119
    %v122 = vmul.f32 %v120, %v120
    %123 = vadd.xlane.f32.xlu0 %v121
    %v124 = vpop.xlane.xlu0 %123
    %125 = vadd.xlane.f32.xlu0 %v122
    %v126 = vpop.xlane.xlu0 %125
    %v127 = vmul.f32 %v124, %v116
    %v128 = vmul.f32 %v126, %v116
    %v129 = vadd.f32 %v127, 1e-12
    %v130 = vadd.f32 %v128, 1e-12
    %v131 = vrsqrt.pop %v129
    %v132 = vrsqrt.pop %v130
    %v133 = vmul.f32 %v119, %v131
    %v134 = vmul.f32 %v120, %v132
    %v136 = vlaneseq
    %v137 = vshrl.u32 %v136, 7
    %v138 = vsub.s32 0, %v137
    %v139 = vrot.slane %v110, %v138
    %v141 = vmul.f32 %v133, %v139
    %v142 = vmul.f32 %v134, %v139
    %v144 = vlaneseq
    %v145 = vshrl.u32 %v144, 7
    %v146 = vsub.s32 0, %v145
    %v147 = vrot.slane %v111, %v146
    %v149 = vadd.f32 %v141, %v147
    %v150 = vadd.f32 %v142, %v147
    %v151 = vld [vmem:[%s1] sm:$0x3]
    %v152 = vcvt.s32.f32 %v151
    %v153 = vsub.f32 1.0, %v152
    %v154 = vmul.f32 %v153, -10000.0
    %v156 = vrot.slane %v154, 6
    %vm158 = vcmask 1041408
    %v159 = vsel %vm158, %v154, %v156
    %v162 = vunpack.c.l.s4 1966171168
    %v163 = vunpack.c.0.s8 %v162
    %v164 = vlaneseq
    %v165 = vshrl.u32 %v164, 7
    %v166 = vsub.s32 %v163, %v165
    %v167 = vrot.slane %v159, %v166
    %v168 = vcombine.high %v167, %v167
    %v170 = vunpack.c.l.s4 1966171168
    %v171 = vunpack.c.0.s8 %v170
    %v172 = vlaneseq
    %v173 = vshrl.u32 %v172, 7
    %v174 = vsub.s32 %v171, %v173
    %v175 = vrot.slane %v167, %v174
    %v177 = vunpack.c.l.s4 1966171168
    %v178 = vunpack.c.0.s8 %v177
    %v179 = vlaneseq
    %v180 = vshrl.u32 %v179, 7
    %v181 = vsub.s32 %v178, %v180
    %v182 = vrot.slane %v168, %v181
    %v183 = vcombine.high %v175, %v175
    %v184 = vcombine.high %v182, %v182
    %v185 = vld [vmem:[#allocation2] sm:$0xff]
    %v186 = vld [vmem:[#allocation2 + $0x8] sm:$0xf]
    %v187 = vld [vmem:[#allocation2 + $0xc] sm:$0xff]
    %v188 = vld [vmem:[#allocation2 + $0x14] sm:$0xf]
    %v189 = vld [vmem:[#allocation2 + $0x18] sm:$0xff]
    %v190 = vld [vmem:[#allocation2 + $0x20] sm:$0xf]
    %v191 = vld [vmem:[#allocation2 + $0x24] sm:$0xff]
    %v192 = vld [vmem:[#allocation2 + $0x2c] sm:$0xf]
    %v193 = vld [vmem:[#allocation2 + $0x30] sm:$0xff]
    %v194 = vld [vmem:[#allocation2 + $0x38] sm:$0xf]
    %v195 = vld [vmem:[#allocation2 + $0x3c] sm:$0xff]
    %v196 = vld [vmem:[#allocation2 + $0x44] sm:$0xf]
    %v197 = vld [vmem:[#allocation2 + $0x48] sm:$0xff]
    %v198 = vld [vmem:[#allocation2 + $0x50] sm:$0xf]
    %v199 = vld [vmem:[#allocation2 + $0x54] sm:$0xff]
    %v200 = vld [vmem:[#allocation2 + $0x5c] sm:$0xf]
    %v201 = vld [vmem:[#allocation2 + $0x60] sm:$0xff]
    %v202 = vld [vmem:[#allocation2 + $0x68] sm:$0xf]
    %v203 = vld [vmem:[#allocation2 + $0x6c] sm:$0xff]
    %v204 = vld [vmem:[#allocation2 + $0x74] sm:$0xf]
    %v205 = vld [vmem:[#allocation2 + $0x78] sm:$0xff]
    %v206 = vld [vmem:[#allocation2 + $0x80] sm:$0xf]
    %v207 = vld [vmem:[#allocation2 + $0x84] sm:$0xff]
    %v208 = vld [vmem:[#allocation2 + $0x8c] sm:$0xf]
    %v209 = vld [vmem:[#allocation2 + $0x90] sm:$0xff]
    %v210 = vld [vmem:[#allocation2 + $0x98] sm:$0xf]
    %v211 = vld [vmem:[#allocation2 + $0x9c] sm:$0xff]
    %v212 = vld [vmem:[#allocation2 + $0xa4] sm:$0xf]
    %v213 = vld [vmem:[#allocation2 + $0xa8] sm:$0xff]
    %v214 = vld [vmem:[#allocation2 + $0xb0] sm:$0xf]
    %v215 = vld [vmem:[#allocation2 + $0xb4] sm:$0xff]
    %v216 = vld [vmem:[#allocation2 + $0xbc] sm:$0xf]
    %v217 = vld [vmem:[%s5] sm:$0x7]
    %v218 = vld [vmem:[%s6] sm:$0xf]
    %v219 = vld [vmem:[%s6 + $0x4] sm:$0xf]
    %v220 = vld [vmem:[%s6 + $0x8] sm:$0xf]
    %v221 = vld [vmem:[%s6 + $0xc] sm:$0xf]
    %v222 = vld [vmem:[%s6 + $0x10] sm:$0xf]
    %v223 = vld [vmem:[%s6 + $0x14] sm:$0xf]
    %v224 = vld [vmem:[%s6 + $0x18] sm:$0xf]
    %v225 = vld [vmem:[%s6 + $0x1c] sm:$0xf]
    %v226 = vld [vmem:[%s6 + $0x20] sm:$0xf]
    %v227 = vld [vmem:[%s6 + $0x24] sm:$0xf]
    %v228 = vld [vmem:[%s6 + $0x28] sm:$0xf]
    %v229 = vld [vmem:[%s6 + $0x2c] sm:$0xf]
    %v230 = vld [vmem:[%s6 + $0x30] sm:$0xf]
    %v231 = vld [vmem:[%s6 + $0x34] sm:$0xf]
    %v232 = vld [vmem:[%s6 + $0x38] sm:$0xf]
    %v233 = vld [vmem:[%s6 + $0x3c] sm:$0xf]
    %v234 = vld [vmem:[%s7] sm:$0x1]
    %v235 = vld [vmem:[%s8] sm:$0x1]
    %v236 = vld [vmem:[%s9] sm:$0x1]
    %v237 = vld [vmem:[%s10] sm:$0xff]
    %v238 = vld [vmem:[%s10 + $0x8] sm:$0xff]
    %v239 = vld [vmem:[%s10 + $0x10] sm:$0xff]
    %v240 = vld [vmem:[%s10 + $0x18] sm:$0xff]
    %v241 = vld [vmem:[%s10 + $0x20] sm:$0xff]
    %v242 = vld [vmem:[%s10 + $0x28] sm:$0xff]
    %v243 = vld [vmem:[%s10 + $0x30] sm:$0xff]
    %v244 = vld [vmem:[%s10 + $0x38] sm:$0xff]
    %v245 = vld [vmem:[%s10 + $0x40] sm:$0xff]
    %v246 = vld [vmem:[%s10 + $0x48] sm:$0xff]
    %v247 = vld [vmem:[%s10 + $0x50] sm:$0xff]
    %v248 = vld [vmem:[%s10 + $0x58] sm:$0xff]
    %v249 = vld [vmem:[%s10 + $0x60] sm:$0xff]
    %v250 = vld [vmem:[%s10 + $0x68] sm:$0xff]
    %v251 = vld [vmem:[%s10 + $0x70] sm:$0xff]
    %v252 = vld [vmem:[%s10 + $0x78] sm:$0xff]
    %v253 = vld [vmem:[%s11] sm:$0x3]
    %v254 = vld [vmem:[#allocation5] sm:$0xf]
    %v255 = vld [vmem:[#allocation5 + $0x4] sm:$0xf]
    %v256 = vld [vmem:[#allocation5 + $0x8] sm:$0xf]
    %v257 = vld [vmem:[#allocation5 + $0xc] sm:$0xf]
    %v258 = vld [vmem:[#allocation5 + $0x10] sm:$0xf]
    %v259 = vld [vmem:[#allocation5 + $0x14] sm:$0xf]
    %v260 = vld [vmem:[#allocation5 + $0x18] sm:$0xf]
    %v261 = vld [vmem:[#allocation5 + $0x1c] sm:$0xf]
    %v262 = vld [vmem:[#allocation5 + $0x20] sm:$0xf]
    %v263 = vld [vmem:[#allocation5 + $0x24] sm:$0xf]
    %v264 = vld [vmem:[#allocation5 + $0x28] sm:$0xf]
    %v265 = vld [vmem:[#allocation5 + $0x2c] sm:$0xf]
    %v266 = vld [vmem:[#allocation5 + $0x30] sm:$0xf]
    %v267 = vld [vmem:[#allocation5 + $0x34] sm:$0xf]
    %v268 = vld [vmem:[#allocation5 + $0x38] sm:$0xf]
    %v269 = vld [vmem:[#allocation5 + $0x3c] sm:$0xf]
    %v270 = vld [vmem:[#allocation5 + $0x40] sm:$0xf]
    %v271 = vld [vmem:[#allocation5 + $0x44] sm:$0xf]
    %v272 = vld [vmem:[#allocation5 + $0x48] sm:$0xf]
    %v273 = vld [vmem:[#allocation5 + $0x4c] sm:$0xf]
    %v274 = vld [vmem:[#allocation5 + $0x50] sm:$0xf]
    %v275 = vld [vmem:[#allocation5 + $0x54] sm:$0xf]
    %v276 = vld [vmem:[#allocation5 + $0x58] sm:$0xf]
    %v277 = vld [vmem:[#allocation5 + $0x5c] sm:$0xf]
    %v278 = vld [vmem:[#allocation5 + $0x60] sm:$0xf]
    %v279 = vld [vmem:[#allocation5 + $0x64] sm:$0xf]
    %v280 = vld [vmem:[#allocation5 + $0x68] sm:$0xf]
    %v281 = vld [vmem:[#allocation5 + $0x6c] sm:$0xf]
    %v282 = vld [vmem:[#allocation5 + $0x70] sm:$0xf]
    %v283 = vld [vmem:[#allocation5 + $0x74] sm:$0xf]
    %v284 = vld [vmem:[#allocation5 + $0x78] sm:$0xf]
    %v285 = vld [vmem:[#allocation5 + $0x7c] sm:$0xf]
    %v286 = vld [vmem:[%s13] sm:$0x1]
    %v287 = vld [vmem:[%s14] sm:$0x1]
    %v288 = vld [vmem:[%s15] sm:$0x1]
    %v289 = vpack.c.bf16 %v150, %v149
    %v291 = vlaneseq
    %v292 = vshrl.u32 %v291, 7
    %v293 = vsub.s32 0, %v292
    %v294 = vrot.slane %v217, %v293
    %v295 = vlaneseq
    %v296 = vshrl.u32 %v295, 7
    %v297 = vsub.s32 1, %v296
    %v298 = vrot.slane %v217, %v297
    %v299 = vlaneseq
    %v300 = vshrl.u32 %v299, 7
    %v301 = vsub.s32 2, %v300
    %v302 = vrot.slane %v217, %v301
    %v338 = vunpack.c.l.b16 %v185
    %v339 = vunpack.c.h.b16 %v185
    %v340 = vunpack.c.l.b16 %v186
    %v341 = vunpack.c.l.b16 %v187
    %v342 = vunpack.c.h.b16 %v187
    %v343 = vunpack.c.l.b16 %v188
    %v344 = vunpack.c.l.b16 %v189
    %v345 = vunpack.c.h.b16 %v189
    %v346 = vunpack.c.l.b16 %v190
    %v347 = vunpack.c.l.b16 %v191
    %v348 = vunpack.c.h.b16 %v191
    %v349 = vunpack.c.l.b16 %v192
    %v350 = vunpack.c.l.b16 %v193
    %v351 = vunpack.c.h.b16 %v193
    %v352 = vunpack.c.l.b16 %v194
    %v353 = vunpack.c.l.b16 %v195
    %v354 = vunpack.c.h.b16 %v195
    %v355 = vunpack.c.l.b16 %v196
    %v356 = vunpack.c.l.b16 %v197
    %v357 = vunpack.c.h.b16 %v197
    %v358 = vunpack.c.l.b16 %v198
    %v359 = vunpack.c.l.b16 %v199
    %v360 = vunpack.c.h.b16 %v199
    %v361 = vunpack.c.l.b16 %v200
    %v362 = vunpack.c.l.b16 %v201
    %v363 = vunpack.c.h.b16 %v201
    %v364 = vunpack.c.l.b16 %v202
    %v365 = vunpack.c.l.b16 %v203
    %v366 = vunpack.c.h.b16 %v203
    %v367 = vunpack.c.l.b16 %v204
    %v368 = vunpack.c.l.b16 %v205
    %v369 = vunpack.c.h.b16 %v205
    %v370 = vunpack.c.l.b16 %v206
    %v371 = vunpack.c.l.b16 %v207
    %v372 = vunpack.c.h.b16 %v207
    %v373 = vunpack.c.l.b16 %v208
    %v374 = vunpack.c.l.b16 %v209
    %v375 = vunpack.c.h.b16 %v209
    %v376 = vunpack.c.l.b16 %v210
    %v377 = vunpack.c.l.b16 %v211
    %v378 = vunpack.c.h.b16 %v211
    %v379 = vunpack.c.l.b16 %v212
    %v380 = vunpack.c.l.b16 %v213
    %v381 = vunpack.c.h.b16 %v213
    %v382 = vunpack.c.l.b16 %v214
    %v383 = vunpack.c.l.b16 %v215
    %v384 = vunpack.c.h.b16 %v215
    %v385 = vunpack.c.l.b16 %v216
    %v386 = vpack.c.b16 %v341, %v338
    %v387 = vpack.c.b16 %v342, %v339
    %v388 = vpack.c.b16 %v343, %v340
    %v389 = vpack.c.b16 %v347, %v344
    %v390 = vpack.c.b16 %v348, %v345
    %v391 = vpack.c.b16 %v349, %v346
    %v392 = vpack.c.b16 %v353, %v350
    %v393 = vpack.c.b16 %v354, %v351
    %v394 = vpack.c.b16 %v355, %v352
    %v395 = vpack.c.b16 %v359, %v356
    %v396 = vpack.c.b16 %v360, %v357
    %v397 = vpack.c.b16 %v361, %v358
    %v398 = vpack.c.b16 %v365, %v362
    %v399 = vpack.c.b16 %v366, %v363
    %v400 = vpack.c.b16 %v367, %v364
    %v401 = vpack.c.b16 %v371, %v368
    %v402 = vpack.c.b16 %v372, %v369
    %v403 = vpack.c.b16 %v373, %v370
    %v404 = vpack.c.b16 %v377, %v374
    %v405 = vpack.c.b16 %v378, %v375
    %v406 = vpack.c.b16 %v379, %v376
    %v407 = vpack.c.b16 %v383, %v380
    %v408 = vpack.c.b16 %v384, %v381
    %v409 = vpack.c.b16 %v385, %v382
    %434 = vmatprep.subr.bf16.mxu0 %v387
    %435 = vmatpush1.bf16.msra.mxu0 %v386
    %436 = vmatprep.subr.bf16.mxu0 %v390
    %437 = vmatpush1.bf16.msra.mxu0 %v389
    %438 = vmatprep.subr.bf16.mxu0 %v393
    %439 = vmatpush1.bf16.msra.mxu0 %v392
    %440 = vmatprep.subr.bf16.mxu0 %v396
    %441 = vmatpush1.bf16.msra.mxu0 %v395
    %442 = vmatprep.subr.bf16.mxu0 %v399
    %443 = vmatpush1.bf16.msra.mxu0 %v398
    %444 = vmatprep.subr.bf16.mxu0 %v402
    %445 = vmatpush1.bf16.msra.mxu0 %v401
    %446 = vmatprep.subr.bf16.mxu0 %v405
    %447 = vmatpush1.bf16.msra.mxu0 %v404
    %448 = vmatprep.subr.bf16.mxu0 %v408
    %449 = vmatpush1.bf16.msra.mxu0 %v407
    %450 = vmatprep.subr.bf16.mxu0 0
    %451 = vmatpush1.bf16.msra.mxu0 0
    %452 = vmatprep.subr.bf16.mxu0 0
    %453 = vmatpush1.bf16.msra.mxu0 0
    %454 = vmatprep.subr.bf16.mxu0 0
    %455 = vmatpush1.bf16.msra.mxu0 0
    %456 = vmatprep.subr.bf16.mxu0 0
    %457 = vmatpush1.bf16.msra.mxu0 0
    %458 = vmatprep.subr.bf16.mxu0 0
    %459 = vmatpush1.bf16.msra.mxu0 0
    %460 = vmatprep.subr.bf16.mxu0 0
    %461 = vmatpush1.bf16.msra.mxu0 0
    %462 = vmatprep.subr.bf16.mxu0 0
    %463 = vmatpush1.bf16.msra.mxu0 0
    %464 = vmatprep.subr.bf16.mxu0 0
    %465 = vmatpush1.bf16.msra.mxu0 0
    %466 = vmatprep.mubr.bf16.mxu0 0
    %467 = vmatmul.mubr.bf16.gmra.mrb[0].mxu0 %v289
    %v468 = vpop.f32.mrb[0].mxu0
    %v469 = vadd.f32 %v294, %v468
    %v470 = vpop.f32.mrb[0].mxu0
    %v471 = vadd.f32 %v298, %v470
    %v472 = vpop.f32.mrb[0].mxu0
    %v473 = vadd.f32 %v294, %v472
    %v474 = vpop.f32.mrb[0].mxu0
    %v475 = vadd.f32 %v298, %v474
    %476 = vdwg.mxu0
    %477 = vmatprep.subr.bf16.mxu0 0
    %478 = vmatpush1.bf16.msra.mxu0 %v388
    %479 = vmatprep.subr.bf16.mxu0 0
    %480 = vmatpush1.bf16.msra.mxu0 %v391
    %481 = vmatprep.subr.bf16.mxu0 0
    %482 = vmatpush1.bf16.msra.mxu0 %v394
    %483 = vmatprep.subr.bf16.mxu0 0
    %484 = vmatpush1.bf16.msra.mxu0 %v397
    %485 = vmatprep.subr.bf16.mxu0 0
    %486 = vmatpush1.bf16.msra.mxu0 %v400
    %487 = vmatprep.subr.bf16.mxu0 0
    %488 = vmatpush1.bf16.msra.mxu0 %v403
    %489 = vmatprep.subr.bf16.mxu0 0
    %490 = vmatpush1.bf16.msra.mxu0 %v406
    %491 = vmatprep.subr.bf16.mxu0 0
    %492 = vmatpush1.bf16.msra.mxu0 %v409
    %493 = vmatprep.subr.bf16.mxu0 0
    %494 = vmatpush1.bf16.msra.mxu0 0
    %495 = vmatprep.subr.bf16.mxu0 0
    %496 = vmatpush1.bf16.msra.mxu0 0
    %497 = vmatprep.subr.bf16.mxu0 0
    %498 = vmatpush1.bf16.msra.mxu0 0
    %499 = vmatprep.subr.bf16.mxu0 0
    %500 = vmatpush1.bf16.msra.mxu0 0
    %501 = vmatprep.subr.bf16.mxu0 0
    %502 = vmatpush1.bf16.msra.mxu0 0
    %503 = vmatprep.subr.bf16.mxu0 0
    %504 = vmatpush1.bf16.msra.mxu0 0
    %505 = vmatprep.subr.bf16.mxu0 0
    %506 = vmatpush1.bf16.msra.mxu0 0
    %507 = vmatprep.subr.bf16.mxu0 0
    %508 = vmatpush1.bf16.msra.mxu0 0
    %509 = vmatprep.mubr.bf16.mxu0 0
    %510 = vmatmul.mubr.bf16.gmra.mrb[0].mxu0 %v289
    %v511 = vpop.f32.mrb[0].mxu0
    %v512 = vadd.f32 %v302, %v511
    %v513 = vpop.f32.mrb[0].mxu0
    %v514 = vpop.f32.mrb[0].mxu0
    %v515 = vadd.f32 %v302, %v514
    %v516 = vpop.f32.mrb[0].mxu0
    %517 = vdwg.mxu0
    %v518 = vpack.c.bf16 %v473, %v469
    %v519 = vpack.c.bf16 %v475, %v471
    %v520 = vpack.c.bf16 %v515, %v512
    %522 = vrot.lane.b32.xlu0 %v518, 64
    %v523 = vpop.permute.xlu0 %522
    %v524 = vunpack.c.l.b16 %v518
    %v525 = vunpack.c.h.b16 %v518
    %v526 = vunpack.c.l.b16 %v523
    %v527 = vunpack.c.h.b16 %v523
    %v528 = vpack.c.b16 %v524, %v524
    %v529 = vpack.c.b16 %v525, %v525
    %v530 = vpack.c.b16 %v526, %v526
    %v531 = vpack.c.b16 %v527, %v527
    %533 = vrot.lane.b32.xlu0 %v519, 64
    %v534 = vpop.permute.xlu0 %533
    %v535 = vunpack.c.l.b16 %v519
    %v536 = vunpack.c.h.b16 %v519
    %v537 = vunpack.c.l.b16 %v534
    %v538 = vunpack.c.h.b16 %v534
    %v539 = vpack.c.b16 %v535, %v535
    %v540 = vpack.c.b16 %v536, %v536
    %v541 = vpack.c.b16 %v537, %v537
    %v542 = vpack.c.b16 %v538, %v538
    %544 = vrot.lane.b32.xlu0 %v520, 64
    %v545 = vpop.permute.xlu0 %544
    %v546 = vunpack.c.l.b16 %v520
    %v547 = vunpack.c.h.b16 %v520
    %v548 = vunpack.c.l.b16 %v545
    %v549 = vunpack.c.h.b16 %v545
    %v550 = vpack.c.b16 %v546, %v546
    %v551 = vpack.c.b16 %v547, %v547
    %v552 = vpack.c.b16 %v548, %v548
    %v553 = vpack.c.b16 %v549, %v549
    %vm554 = vcmask 523264
    %v556 = vsel %vm554, %v528, 0
    %v559 = vsel %vm554, %v539, 0
    %561 = vmatprep.subr.bf16.mxu0 0
    %562 = vmatpush1.bf16.xpose.msra.mxu0 %v559
    %563 = vmatprep.subr.bf16.mxu0 0
    %564 = vmatpush1.bf16.xpose.msra.mxu0 0
    %565 = vmatprep.subr.bf16.mxu0 0
    %566 = vmatpush1.bf16.xpose.msra.mxu0 0
    %567 = vmatprep.subr.bf16.mxu0 0
    %568 = vmatpush1.bf16.xpose.msra.mxu0 0
    %569 = vmatprep.subr.bf16.mxu0 0
    %570 = vmatpush1.bf16.xpose.msra.mxu0 0
    %571 = vmatprep.subr.bf16.mxu0 0
    %572 = vmatpush1.bf16.xpose.msra.mxu0 0
    %573 = vmatprep.subr.bf16.mxu0 0
    %574 = vmatpush1.bf16.xpose.msra.mxu0 0
    %575 = vmatprep.subr.bf16.mxu0 0
    %576 = vmatpush1.bf16.xpose.msra.mxu0 0
    %577 = vmatprep.subr.bf16.mxu0 0
    %578 = vmatpush1.bf16.xpose.msra.mxu0 0
    %579 = vmatprep.subr.bf16.mxu0 0
    %580 = vmatpush1.bf16.xpose.msra.mxu0 0
    %581 = vmatprep.subr.bf16.mxu0 0
    %582 = vmatpush1.bf16.xpose.msra.mxu0 0
    %583 = vmatprep.subr.bf16.mxu0 0
    %584 = vmatpush1.bf16.xpose.msra.mxu0 0
    %585 = vmatprep.subr.bf16.mxu0 0
    %586 = vmatpush1.bf16.xpose.msra.mxu0 0
    %587 = vmatprep.subr.bf16.mxu0 0
    %588 = vmatpush1.bf16.xpose.msra.mxu0 0
    %589 = vmatprep.subr.bf16.mxu0 0
    %590 = vmatpush1.bf16.xpose.msra.mxu0 0
    %591 = vmatprep.subr.bf16.mxu0 0
    %592 = vmatpush1.bf16.xpose.msra.mxu0 0
    %593 = vmatprep.mubr.bf16.mxu0 0
    %594 = vmatmul.mubr.bf16.gmra.mrb[0].mxu0 %v556
    %v595 = vpop.f32.mrb[0].mxu0
    %v596 = vadd.f32 0.0, %v595
    %v597 = vpop.f32.mrb[0].mxu0
    %v598 = vpop.f32.mrb[0].mxu0
    %v599 = vpop.f32.mrb[0].mxu0
    %600 = vdwg.mxu0
    %v602 = vsel %vm554, %v529, 0
    %v605 = vsel %vm554, %v540, 0
    %607 = vmatprep.subr.bf16.mxu0 0
    %608 = vmatpush1.bf16.xpose.msra.mxu0 %v605
    %609 = vmatprep.subr.bf16.mxu0 0
    %610 = vmatpush1.bf16.xpose.msra.mxu0 0
    %611 = vmatprep.subr.bf16.mxu0 0
    %612 = vmatpush1.bf16.xpose.msra.mxu0 0
    %613 = vmatprep.subr.bf16.mxu0 0
    %614 = vmatpush1.bf16.xpose.msra.mxu0 0
    %615 = vmatprep.subr.bf16.mxu0 0
    %616 = vmatpush1.bf16.xpose.msra.mxu0 0
    %617 = vmatprep.subr.bf16.mxu0 0
    %618 = vmatpush1.bf16.xpose.msra.mxu0 0
    %619 = vmatprep.subr.bf16.mxu0 0
    %620 = vmatpush1.bf16.xpose.msra.mxu0 0
    %621 = vmatprep.subr.bf16.mxu0 0
    %622 = vmatpush1.bf16.xpose.msra.mxu0 0
    %623 = vmatprep.subr.bf16.mxu0 0
    %624 = vmatpush1.bf16.xpose.msra.mxu0 0
    %625 = vmatprep.subr.bf16.mxu0 0
    %626 = vmatpush1.bf16.xpose.msra.mxu0 0
    %627 = vmatprep.subr.bf16.mxu0 0
    %628 = vmatpush1.bf16.xpose.msra.mxu0 0
    %629 = vmatprep.subr.bf16.mxu0 0
    %630 = vmatpush1.bf16.xpose.msra.mxu0 0
    %631 = vmatprep.subr.bf16.mxu0 0
    %632 = vmatpush1.bf16.xpose.msra.mxu0 0
    %633 = vmatprep.subr.bf16.mxu0 0
    %634 = vmatpush1.bf16.xpose.msra.mxu0 0
    %635 = vmatprep.subr.bf16.mxu0 0
    %636 = vmatpush1.bf16.xpose.msra.mxu0 0
    %637 = vmatprep.subr.bf16.mxu0 0
    %638 = vmatpush1.bf16.xpose.msra.mxu0 0
    %639 = vmatprep.mubr.bf16.mxu0 0
    %640 = vmatmul.mubr.bf16.gmra.mrb[0].mxu0 %v602
    %v641 = vpop.f32.mrb[0].mxu0
    %v642 = vadd.f32 0.0, %v641
    %v643 = vpop.f32.mrb[0].mxu0
    %v644 = vpop.f32.mrb[0].mxu0
    %v645 = vpop.f32.mrb[0].mxu0
    %646 = vdwg.mxu0
    %v648 = vsel %vm554, %v530, 0
    %v651 = vsel %vm554, %v541, 0
    %653 = vmatprep.subr.bf16.mxu0 0
    %654 = vmatpush1.bf16.xpose.msra.mxu0 %v651
    %655 = vmatprep.subr.bf16.mxu0 0
    %656 = vmatpush1.bf16.xpose.msra.mxu0 0
    %657 = vmatprep.subr.bf16.mxu0 0
    %658 = vmatpush1.bf16.xpose.msra.mxu0 0
    %659 = vmatprep.subr.bf16.mxu0 0
    %660 = vmatpush1.bf16.xpose.msra.mxu0 0
    %661 = vmatprep.subr.bf16.mxu0 0
    %662 = vmatpush1.bf16.xpose.msra.mxu0 0
    %663 = vmatprep.subr.bf16.mxu0 0
    %664 = vmatpush1.bf16.xpose.msra.mxu0 0
    %665 = vmatprep.subr.bf16.mxu0 0
    %666 = vmatpush1.bf16.xpose.msra.mxu0 0
    %667 = vmatprep.subr.bf16.mxu0 0
    %668 = vmatpush1.bf16.xpose.msra.mxu0 0
    %669 = vmatprep.subr.bf16.mxu0 0
    %670 = vmatpush1.bf16.xpose.msra.mxu0 0
    %671 = vmatprep.subr.bf16.mxu0 0
    %672 = vmatpush1.bf16.xpose.msra.mxu0 0
    %673 = vmatprep.subr.bf16.mxu0 0
    %674 = vmatpush1.bf16.xpose.msra.mxu0 0
    %675 = vmatprep.subr.bf16.mxu0 0
    %676 = vmatpush1.bf16.xpose.msra.mxu0 0
    %677 = vmatprep.subr.bf16.mxu0 0
    %678 = vmatpush1.bf16.xpose.msra.mxu0 0
    %679 = vmatprep.subr.bf16.mxu0 0
    %680 = vmatpush1.bf16.xpose.msra.mxu0 0
    %681 = vmatprep.subr.bf16.mxu0 0
    %682 = vmatpush1.bf16.xpose.msra.mxu0 0
    %683 = vmatprep.subr.bf16.mxu0 0
    %684 = vmatpush1.bf16.xpose.msra.mxu0 0
    %685 = vmatprep.mubr.bf16.mxu0 0
    %686 = vmatmul.mubr.bf16.gmra.mrb[0].mxu0 %v648
    %v687 = vpop.f32.mrb[0].mxu0
    %v688 = vadd.f32 0.0, %v687
    %v689 = vpop.f32.mrb[0].mxu0
    %v690 = vpop.f32.mrb[0].mxu0
    %v691 = vpop.f32.mrb[0].mxu0
    %692 = vdwg.mxu0
    %v694 = vsel %vm554, %v531, 0
    %v697 = vsel %vm554, %v542, 0
    %699 = vmatprep.subr.bf16.mxu0 0
    %700 = vmatpush1.bf16.xpose.msra.mxu0 %v697
    %701 = vmatprep.subr.bf16.mxu0 0
    %702 = vmatpush1.bf16.xpose.msra.mxu0 0
    %703 = vmatprep.subr.bf16.mxu0 0
    %704 = vmatpush1.bf16.xpose.msra.mxu0 0
    %705 = vmatprep.subr.bf16.mxu0 0
    %706 = vmatpush1.bf16.xpose.msra.mxu0 0
    %707 = vmatprep.subr.bf16.mxu0 0
    %708 = vmatpush1.bf16.xpose.msra.mxu0 0
    %709 = vmatprep.subr.bf16.mxu0 0
    %710 = vmatpush1.bf16.xpose.msra.mxu0 0
    %711 = vmatprep.subr.bf16.mxu0 0
    %712 = vmatpush1.bf16.xpose.msra.mxu0 0
    %713 = vmatprep.subr.bf16.mxu0 0
    %714 = vmatpush1.bf16.xpose.msra.mxu0 0
    %715 = vmatprep.subr.bf16.mxu0 0
    %716 = vmatpush1.bf16.xpose.msra.mxu0 0
    %717 = vmatprep.subr.bf16.mxu0 0
    %718 = vmatpush1.bf16.xpose.msra.mxu0 0
    %719 = vmatprep.subr.bf16.mxu0 0
    %720 = vmatpush1.bf16.xpose.msra.mxu0 0
    %721 = vmatprep.subr.bf16.mxu0 0
    %722 = vmatpush1.bf16.xpose.msra.mxu0 0
    %723 = vmatprep.subr.bf16.mxu0 0
    %724 = vmatpush1.bf16.xpose.msra.mxu0 0
    %725 = vmatprep.subr.bf16.mxu0 0
    %726 = vmatpush1.bf16.xpose.msra.mxu0 0
    %727 = vmatprep.subr.bf16.mxu0 0
    %728 = vmatpush1.bf16.xpose.msra.mxu0 0
    %729 = vmatprep.subr.bf16.mxu0 0
    %730 = vmatpush1.bf16.xpose.msra.mxu0 0
    %731 = vmatprep.mubr.bf16.mxu0 0
    %732 = vmatmul.mubr.bf16.gmra.mrb[0].mxu0 %v694
    %v733 = vpop.f32.mrb[0].mxu0
    %v734 = vadd.f32 0.0, %v733
    %v735 = vpop.f32.mrb[0].mxu0
    %v736 = vpop.f32.mrb[0].mxu0
    %v737 = vpop.f32.mrb[0].mxu0
    %738 = vdwg.mxu0
    %v739 = vmul.f32 %v596, 0.125
    %v740 = vmul.f32 %v642, 0.125
    %v741 = vmul.f32 %v688, 0.125
    %v742 = vmul.f32 %v734, 0.125
    %v743 = vlaneseq
    %v744 = vshrl.u32 %v743, 7
    %v745 = vsub.s32 0, %v744
    %v746 = vrot.slane %v175, %v745
    %v747 = vlaneseq
    %v748 = vshrl.u32 %v747, 7
    %v749 = vsub.s32 0, %v748
    %v750 = vrot.slane %v182, %v749
    %v751 = vlaneseq
    %v752 = vshrl.u32 %v751, 7
    %v753 = vsub.s32 0, %v752
    %v754 = vrot.slane %v183, %v753
    %v755 = vlaneseq
    %v756 = vshrl.u32 %v755, 7
    %v757 = vsub.s32 0, %v756
    %v758 = vrot.slane %v184, %v757
    %v763 = vadd.f32 %v739, %v746
    %v764 = vadd.f32 %v740, %v750
    %v765 = vadd.f32 %v741, %v754
    %v766 = vadd.f32 %v742, %v758
    %vm767 = vcmask 64512
    %v768 = vsel %vm767, %v763, -inf
    %769 = vmax.xlane.f32.xlu0 %v768
    %v770 = vpop.xlane.xlu0 %769
    %v771 = vsel %vm767, %v764, -inf
    %772 = vmax.xlane.f32.xlu0 %v771
    %v773 = vpop.xlane.xlu0 %772
    %v774 = vsel %vm767, %v765, -inf
    %775 = vmax.xlane.f32.xlu0 %v774
    %v776 = vpop.xlane.xlu0 %775
    %v777 = vsel %vm767, %v766, -inf
    %778 = vmax.xlane.f32.xlu0 %v777
    %v779 = vpop.xlane.xlu0 %778
    %v780 = vsub.f32 %v763, %v770
    %v781 = vsub.f32 %v764, %v773
    %v782 = vsub.f32 %v765, %v776
    %v783 = vsub.f32 %v766, %v779
    %v784 = vmul.f32 %v780, 1.442695
    %v785 = vpow.pop %v784
    %v786 = vmul.f32 %v781, 1.442695
    %v787 = vpow.pop %v786
    %v788 = vmul.f32 %v782, 1.442695
    %v789 = vpow.pop %v788
    %v790 = vmul.f32 %v783, 1.442695
    %v791 = vpow.pop %v790
    %v792 = vsel %vm767, %v785, 0.0
    %793 = vadd.xlane.f32.xlu0 %v792
    %v794 = vpop.xlane.xlu0 %793
    %v795 = vsel %vm767, %v787, 0.0
    %796 = vadd.xlane.f32.xlu0 %v795
    %v797 = vpop.xlane.xlu0 %796
    %v798 = vsel %vm767, %v789, 0.0
    %799 = vadd.xlane.f32.xlu0 %v798
    %v800 = vpop.xlane.xlu0 %799
    %v801 = vsel %vm767, %v791, 0.0
    %802 = vadd.xlane.f32.xlu0 %v801
    %v803 = vpop.xlane.xlu0 %802
    %v804 = vrcp.pop %v794
    %v805 = vrcp.pop %v797
    %v806 = vrcp.pop %v800
    %v807 = vrcp.pop %v803
    %v808 = vmul.f32 %v785, %v804
    %v809 = vmul.f32 %v787, %v805
    %v810 = vmul.f32 %v789, %v806
    %v811 = vmul.f32 %v791, %v807
    %v812 = vpack.c.bf16 %v808, %v808
    %v813 = vpack.c.bf16 %v809, %v809
    %v814 = vpack.c.bf16 %v810, %v810
    %v815 = vpack.c.bf16 %v811, %v811
    %v817 = vsel %vm767, %v812, 0
    %vm819 = vcmask 1043456
    %v821 = vsel %vm819, %v550, 0
    %823 = vmatprep.subr.bf16.mxu0 0
    %824 = vmatpush1.bf16.msra.mxu0 %v821
    %825 = vmatprep.subr.bf16.mxu0 0
    %826 = vmatpush1.bf16.msra.mxu0 0
    %827 = vmatprep.subr.bf16.mxu0 0
    %828 = vmatpush1.bf16.msra.mxu0 0
    %829 = vmatprep.subr.bf16.mxu0 0
    %830 = vmatpush1.bf16.msra.mxu0 0
    %831 = vmatprep.subr.bf16.mxu0 0
    %832 = vmatpush1.bf16.msra.mxu0 0
    %833 = vmatprep.subr.bf16.mxu0 0
    %834 = vmatpush1.bf16.msra.mxu0 0
    %835 = vmatprep.subr.bf16.mxu0 0
    %836 = vmatpush1.bf16.msra.mxu0 0
    %837 = vmatprep.subr.bf16.mxu0 0
    %838 = vmatpush1.bf16.msra.mxu0 0
    %839 = vmatprep.subr.bf16.mxu0 0
    %840 = vmatpush1.bf16.msra.mxu0 0
    %841 = vmatprep.subr.bf16.mxu0 0
    %842 = vmatpush1.bf16.msra.mxu0 0
    %843 = vmatprep.subr.bf16.mxu0 0
    %844 = vmatpush1.bf16.msra.mxu0 0
    %845 = vmatprep.subr.bf16.mxu0 0
    %846 = vmatpush1.bf16.msra.mxu0 0
    %847 = vmatprep.subr.bf16.mxu0 0
    %848 = vmatpush1.bf16.msra.mxu0 0
    %849 = vmatprep.subr.bf16.mxu0 0
    %850 = vmatpush1.bf16.msra.mxu0 0
    %851 = vmatprep.subr.bf16.mxu0 0
    %852 = vmatpush1.bf16.msra.mxu0 0
    %853 = vmatprep.subr.bf16.mxu0 0
    %854 = vmatpush1.bf16.msra.mxu0 0
    %855 = vmatprep.mubr.bf16.mxu0 0
    %856 = vmatmul.mubr.bf16.gmra.mrb[0].mxu0 %v817
    %v857 = vpop.f32.mrb[0].mxu0
    %v858 = vadd.f32 0.0, %v857
    %v859 = vpop.f32.mrb[0].mxu0
    %v860 = vpop.f32.mrb[0].mxu0
    %v861 = vpop.f32.mrb[0].mxu0
    %862 = vdwg.mxu0
    %v864 = vsel %vm767, %v813, 0
    %v867 = vsel %vm819, %v551, 0
    %869 = vmatprep.subr.bf16.mxu0 0
    %870 = vmatpush1.bf16.msra.mxu0 %v867
    %871 = vmatprep.subr.bf16.mxu0 0
    %872 = vmatpush1.bf16.msra.mxu0 0
    %873 = vmatprep.subr.bf16.mxu0 0
    %874 = vmatpush1.bf16.msra.mxu0 0
    %875 = vmatprep.subr.bf16.mxu0 0
    %876 = vmatpush1.bf16.msra.mxu0 0
    %877 = vmatprep.subr.bf16.mxu0 0
    %878 = vmatpush1.bf16.msra.mxu0 0
    %879 = vmatprep.subr.bf16.mxu0 0
    %880 = vmatpush1.bf16.msra.mxu0 0
    %881 = vmatprep.subr.bf16.mxu0 0
    %882 = vmatpush1.bf16.msra.mxu0 0
    %883 = vmatprep.subr.bf16.mxu0 0
    %884 = vmatpush1.bf16.msra.mxu0 0
    %885 = vmatprep.subr.bf16.mxu0 0
    %886 = vmatpush1.bf16.msra.mxu0 0
    %887 = vmatprep.subr.bf16.mxu0 0
    %888 = vmatpush1.bf16.msra.mxu0 0
    %889 = vmatprep.subr.bf16.mxu0 0
    %890 = vmatpush1.bf16.msra.mxu0 0
    %891 = vmatprep.subr.bf16.mxu0 0
    %892 = vmatpush1.bf16.msra.mxu0 0
    %893 = vmatprep.subr.bf16.mxu0 0
    %894 = vmatpush1.bf16.msra.mxu0 0
    %895 = vmatprep.subr.bf16.mxu0 0
    %896 = vmatpush1.bf16.msra.mxu0 0
    %897 = vmatprep.subr.bf16.mxu0 0
    %898 = vmatpush1.bf16.msra.mxu0 0
    %899 = vmatprep.subr.bf16.mxu0 0
    %900 = vmatpush1.bf16.msra.mxu0 0
    %901 = vmatprep.mubr.bf16.mxu0 0
    %902 = vmatmul.mubr.bf16.gmra.mrb[0].mxu0 %v864
    %v903 = vpop.f32.mrb[0].mxu0
    %v904 = vadd.f32 0.0, %v903
    %v905 = vpop.f32.mrb[0].mxu0
    %v906 = vpop.f32.mrb[0].mxu0
    %v907 = vpop.f32.mrb[0].mxu0
    %908 = vdwg.mxu0
    %v910 = vsel %vm767, %v814, 0
    %v913 = vsel %vm819, %v552, 0
    %915 = vmatprep.subr.bf16.mxu0 0
    %916 = vmatpush1.bf16.msra.mxu0 %v913
    %917 = vmatprep.subr.bf16.mxu0 0
    %918 = vmatpush1.bf16.msra.mxu0 0
    %919 = vmatprep.subr.bf16.mxu0 0
    %920 = vmatpush1.bf16.msra.mxu0 0
    %921 = vmatprep.subr.bf16.mxu0 0
    %922 = vmatpush1.bf16.msra.mxu0 0
    %923 = vmatprep.subr.bf16.mxu0 0
    %924 = vmatpush1.bf16.msra.mxu0 0
    %925 = vmatprep.subr.bf16.mxu0 0
    %926 = vmatpush1.bf16.msra.mxu0 0
    %927 = vmatprep.subr.bf16.mxu0 0
    %928 = vmatpush1.bf16.msra.mxu0 0
    %929 = vmatprep.subr.bf16.mxu0 0
    %930 = vmatpush1.bf16.msra.mxu0 0
    %931 = vmatprep.subr.bf16.mxu0 0
    %932 = vmatpush1.bf16.msra.mxu0 0
    %933 = vmatprep.subr.bf16.mxu0 0
    %934 = vmatpush1.bf16.msra.mxu0 0
    %935 = vmatprep.subr.bf16.mxu0 0
    %936 = vmatpush1.bf16.msra.mxu0 0
    %937 = vmatprep.subr.bf16.mxu0 0
    %938 = vmatpush1.bf16.msra.mxu0 0
    %939 = vmatprep.subr.bf16.mxu0 0
    %940 = vmatpush1.bf16.msra.mxu0 0
    %941 = vmatprep.subr.bf16.mxu0 0
    %942 = vmatpush1.bf16.msra.mxu0 0
    %943 = vmatprep.subr.bf16.mxu0 0
    %944 = vmatpush1.bf16.msra.mxu0 0
    %945 = vmatprep.subr.bf16.mxu0 0
    %946 = vmatpush1.bf16.msra.mxu0 0
    %947 = vmatprep.mubr.bf16.mxu0 0
    %948 = vmatmul.mubr.bf16.gmra.mrb[0].mxu0 %v910
    %v949 = vpop.f32.mrb[0].mxu0
    %v950 = vadd.f32 0.0, %v949
    %v951 = vpop.f32.mrb[0].mxu0
    %v952 = vpop.f32.mrb[0].mxu0
    %v953 = vpop.f32.mrb[0].mxu0
    %954 = vdwg.mxu0
    %v956 = vsel %vm767, %v815, 0
    %v959 = vsel %vm819, %v553, 0
    %961 = vmatprep.subr.bf16.mxu0 0
    %962 = vmatpush1.bf16.msra.mxu0 %v959
    %963 = vmatprep.subr.bf16.mxu0 0
    %964 = vmatpush1.bf16.msra.mxu0 0
    %965 = vmatprep.subr.bf16.mxu0 0
    %966 = vmatpush1.bf16.msra.mxu0 0
    %967 = vmatprep.subr.bf16.mxu0 0
    %968 = vmatpush1.bf16.msra.mxu0 0
    %969 = vmatprep.subr.bf16.mxu0 0
    %970 = vmatpush1.bf16.msra.mxu0 0
    %971 = vmatprep.subr.bf16.mxu0 0
    %972 = vmatpush1.bf16.msra.mxu0 0
    %973 = vmatprep.subr.bf16.mxu0 0
    %974 = vmatpush1.bf16.msra.mxu0 0
    %975 = vmatprep.subr.bf16.mxu0 0
    %976 = vmatpush1.bf16.msra.mxu0 0
    %977 = vmatprep.subr.bf16.mxu0 0
    %978 = vmatpush1.bf16.msra.mxu0 0
    %979 = vmatprep.subr.bf16.mxu0 0
    %980 = vmatpush1.bf16.msra.mxu0 0
    %981 = vmatprep.subr.bf16.mxu0 0
    %982 = vmatpush1.bf16.msra.mxu0 0
    %983 = vmatprep.subr.bf16.mxu0 0
    %984 = vmatpush1.bf16.msra.mxu0 0
    %985 = vmatprep.subr.bf16.mxu0 0
    %986 = vmatpush1.bf16.msra.mxu0 0
    %987 = vmatprep.subr.bf16.mxu0 0
    %988 = vmatpush1.bf16.msra.mxu0 0
    %989 = vmatprep.subr.bf16.mxu0 0
    %990 = vmatpush1.bf16.msra.mxu0 0
    %991 = vmatprep.subr.bf16.mxu0 0
    %992 = vmatpush1.bf16.msra.mxu0 0
    %993 = vmatprep.mubr.bf16.mxu0 0
    %994 = vmatmul.mubr.bf16.gmra.mrb[0].mxu0 %v956
    %v995 = vpop.f32.mrb[0].mxu0
    %v996 = vadd.f32 0.0, %v995
    %v997 = vpop.f32.mrb[0].mxu0
    %v998 = vpop.f32.mrb[0].mxu0
    %v999 = vpop.f32.mrb[0].mxu0
    %1000 = vdwg.mxu0
    %1003 = vrot.lane.b32.xlu0 %v950, 64
    %v1004 = vpop.permute.xlu0 %1003
    %1005 = vrot.lane.b32.xlu0 %v996, 64
    %v1006 = vpop.permute.xlu0 %1005
    %v1009 = vsel %vm554, %v858, %v1004
    %v1010 = vsel %vm554, %v904, %v1006
    %v1011 = vpack.c.bf16 %v1010, %v1009
    %v1013 = vlaneseq
    %v1014 = vshrl.u32 %v1013, 7
    %v1015 = vsub.s32 0, %v1014
    %v1016 = vrot.slane %v234, %v1015
    %v1034 = vunpack.c.l.b16 %v218
    %v1035 = vunpack.c.l.b16 %v219
    %v1036 = vunpack.c.l.b16 %v220
    %v1037 = vunpack.c.l.b16 %v221
    %v1038 = vunpack.c.l.b16 %v222
    %v1039 = vunpack.c.l.b16 %v223
    %v1040 = vunpack.c.l.b16 %v224
    %v1041 = vunpack.c.l.b16 %v225
    %v1042 = vunpack.c.l.b16 %v226
    %v1043 = vunpack.c.l.b16 %v227
    %v1044 = vunpack.c.l.b16 %v228
    %v1045 = vunpack.c.l.b16 %v229
    %v1046 = vunpack.c.l.b16 %v230
    %v1047 = vunpack.c.l.b16 %v231
    %v1048 = vunpack.c.l.b16 %v232
    %v1049 = vunpack.c.l.b16 %v233
    %v1050 = vpack.c.b16 %v1035, %v1034
    %v1051 = vpack.c.b16 %v1037, %v1036
    %v1052 = vpack.c.b16 %v1039, %v1038
    %v1053 = vpack.c.b16 %v1041, %v1040
    %v1054 = vpack.c.b16 %v1043, %v1042
    %v1055 = vpack.c.b16 %v1045, %v1044
    %v1056 = vpack.c.b16 %v1047, %v1046
    %v1057 = vpack.c.b16 %v1049, %v1048
    %1066 = vmatprep.subr.bf16.mxu0 0
    %1067 = vmatpush1.bf16.msra.mxu0 %v1050
    %1068 = vmatprep.subr.bf16.mxu0 0
    %1069 = vmatpush1.bf16.msra.mxu0 %v1051
    %1070 = vmatprep.subr.bf16.mxu0 0
    %1071 = vmatpush1.bf16.msra.mxu0 %v1052
    %1072 = vmatprep.subr.bf16.mxu0 0
    %1073 = vmatpush1.bf16.msra.mxu0 %v1053
    %1074 = vmatprep.subr.bf16.mxu0 0
    %1075 = vmatpush1.bf16.msra.mxu0 %v1054
    %1076 = vmatprep.subr.bf16.mxu0 0
    %1077 = vmatpush1.bf16.msra.mxu0 %v1055
    %1078 = vmatprep.subr.bf16.mxu0 0
    %1079 = vmatpush1.bf16.msra.mxu0 %v1056
    %1080 = vmatprep.subr.bf16.mxu0 0
    %1081 = vmatpush1.bf16.msra.mxu0 %v1057
    %1082 = vmatprep.subr.bf16.mxu0 0
    %1083 = vmatpush1.bf16.msra.mxu0 0
    %1084 = vmatprep.subr.bf16.mxu0 0
    %1085 = vmatpush1.bf16.msra.mxu0 0
    %1086 = vmatprep.subr.bf16.mxu0 0
    %1087 = vmatpush1.bf16.msra.mxu0 0
    %1088 = vmatprep.subr.bf16.mxu0 0
    %1089 = vmatpush1.bf16.msra.mxu0 0
    %1090 = vmatprep.subr.bf16.mxu0 0
    %1091 = vmatpush1.bf16.msra.mxu0 0
    %1092 = vmatprep.subr.bf16.mxu0 0
    %1093 = vmatpush1.bf16.msra.mxu0 0
    %1094 = vmatprep.subr.bf16.mxu0 0
    %1095 = vmatpush1.bf16.msra.mxu0 0
    %1096 = vmatprep.subr.bf16.mxu0 0
    %1097 = vmatpush1.bf16.msra.mxu0 0
    %1098 = vmatprep.mubr.bf16.mxu0 0
    %1099 = vmatmul.mubr.bf16.gmra.mrb[0].mxu0 %v1011
    %v1100 = vpop.f32.mrb[0].mxu0
    %v1101 = vadd.f32 %v1016, %v1100
    %v1102 = vpop.f32.mrb[0].mxu0
    %v1103 = vpop.f32.mrb[0].mxu0
    %v1104 = vadd.f32 %v1016, %v1103
    %v1105 = vpop.f32.mrb[0].mxu0
    %1106 = vdwg.mxu0
    %v1107 = vadd.f32 %v1101, %v149
    %v1108 = vadd.f32 %v1104, %v150
    %1109 = vadd.xlane.f32.xlu0 %v1107
    %v1110 = vpop.xlane.xlu0 %1109
    %1111 = vadd.xlane.f32.xlu0 %v1108
    %v1112 = vpop.xlane.xlu0 %1111
    %v1113 = vmul.f32 %v1110, %v116
    %v1114 = vmul.f32 %v1112, %v116
    %v1115 = vsub.f32 %v1107, %v1113
    %v1116 = vsub.f32 %v1108, %v1114
    %v1117 = vmul.f32 %v1115, %v1115
    %v1118 = vmul.f32 %v1116, %v1116
    %1119 = vadd.xlane.f32.xlu0 %v1117
    %v1120 = vpop.xlane.xlu0 %1119
    %1121 = vadd.xlane.f32.xlu0 %v1118
    %v1122 = vpop.xlane.xlu0 %1121
    %v1123 = vmul.f32 %v1120, %v116
    %v1124 = vmul.f32 %v1122, %v116
    %v1125 = vadd.f32 %v1123, 1e-12
    %v1126 = vadd.f32 %v1124, 1e-12
    %v1127 = vrsqrt.pop %v1125
    %v1128 = vrsqrt.pop %v1126
    %v1129 = vmul.f32 %v1115, %v1127
    %v1130 = vmul.f32 %v1116, %v1128
    %v1132 = vlaneseq
    %v1133 = vshrl.u32 %v1132, 7
    %v1134 = vsub.s32 0, %v1133
    %v1135 = vrot.slane %v235, %v1134
    %v1137 = vmul.f32 %v1129, %v1135
    %v1138 = vmul.f32 %v1130, %v1135
    %v1140 = vlaneseq
    %v1141 = vshrl.u32 %v1140, 7
    %v1142 = vsub.s32 0, %v1141
    %v1143 = vrot.slane %v236, %v1142
    %v1145 = vadd.f32 %v1137, %v1143
    %v1146 = vadd.f32 %v1138, %v1143
    %v1147 = vpack.c.bf16 %v1146, %v1145
    %v1149 = vlaneseq
    %v1150 = vshrl.u32 %v1149, 7
    %v1151 = vsub.s32 0, %v1150
    %v1152 = vrot.slane %v253, %v1151
    %v1153 = vlaneseq
    %v1154 = vshrl.u32 %v1153, 7
    %v1155 = vsub.s32 1, %v1154
    %v1156 = vrot.slane %v253, %v1155
    %v1175 = vunpack.c.l.b16 %v237
    %v1176 = vunpack.c.h.b16 %v237
    %v1177 = vunpack.c.l.b16 %v238
    %v1178 = vunpack.c.h.b16 %v238
    %v1179 = vunpack.c.l.b16 %v239
    %v1180 = vunpack.c.h.b16 %v239
    %v1181 = vunpack.c.l.b16 %v240
    %v1182 = vunpack.c.h.b16 %v240
    %v1183 = vunpack.c.l.b16 %v241
    %v1184 = vunpack.c.h.b16 %v241
    %v1185 = vunpack.c.l.b16 %v242
    %v1186 = vunpack.c.h.b16 %v242
    %v1187 = vunpack.c.l.b16 %v243
    %v1188 = vunpack.c.h.b16 %v243
    %v1189 = vunpack.c.l.b16 %v244
    %v1190 = vunpack.c.h.b16 %v244
    %v1191 = vunpack.c.l.b16 %v245
    %v1192 = vunpack.c.h.b16 %v245
    %v1193 = vunpack.c.l.b16 %v246
    %v1194 = vunpack.c.h.b16 %v246
    %v1195 = vunpack.c.l.b16 %v247
    %v1196 = vunpack.c.h.b16 %v247
    %v1197 = vunpack.c.l.b16 %v248
    %v1198 = vunpack.c.h.b16 %v248
    %v1199 = vunpack.c.l.b16 %v249
    %v1200 = vunpack.c.h.b16 %v249
    %v1201 = vunpack.c.l.b16 %v250
    %v1202 = vunpack.c.h.b16 %v250
    %v1203 = vunpack.c.l.b16 %v251
    %v1204 = vunpack.c.h.b16 %v251
    %v1205 = vunpack.c.l.b16 %v252
    %v1206 = vunpack.c.h.b16 %v252
    %v1207 = vpack.c.b16 %v1177, %v1175
    %v1208 = vpack.c.b16 %v1178, %v1176
    %v1209 = vpack.c.b16 %v1181, %v1179
    %v1210 = vpack.c.b16 %v1182, %v1180
    %v1211 = vpack.c.b16 %v1185, %v1183
    %v1212 = vpack.c.b16 %v1186, %v1184
    %v1213 = vpack.c.b16 %v1189, %v1187
    %v1214 = vpack.c.b16 %v1190, %v1188
    %v1215 = vpack.c.b16 %v1193, %v1191
    %v1216 = vpack.c.b16 %v1194, %v1192
    %v1217 = vpack.c.b16 %v1197, %v1195
    %v1218 = vpack.c.b16 %v1198, %v1196
    %v1219 = vpack.c.b16 %v1201, %v1199
    %v1220 = vpack.c.b16 %v1202, %v1200
    %v1221 = vpack.c.b16 %v1205, %v1203
    %v1222 = vpack.c.b16 %v1206, %v1204
    %1239 = vmatprep.subr.bf16.mxu0 %v1208
    %1240 = vmatpush1.bf16.msra.mxu0 %v1207
    %1241 = vmatprep.subr.bf16.mxu0 %v1210
    %1242 = vmatpush1.bf16.msra.mxu0 %v1209
    %1243 = vmatprep.subr.bf16.mxu0 %v1212
    %1244 = vmatpush1.bf16.msra.mxu0 %v1211
    %1245 = vmatprep.subr.bf16.mxu0 %v1214
    %1246 = vmatpush1.bf16.msra.mxu0 %v1213
    %1247 = vmatprep.subr.bf16.mxu0 %v1216
    %1248 = vmatpush1.bf16.msra.mxu0 %v1215
    %1249 = vmatprep.subr.bf16.mxu0 %v1218
    %1250 = vmatpush1.bf16.msra.mxu0 %v1217
    %1251 = vmatprep.subr.bf16.mxu0 %v1220
    %1252 = vmatpush1.bf16.msra.mxu0 %v1219
    %1253 = vmatprep.subr.bf16.mxu0 %v1222
    %1254 = vmatpush1.bf16.msra.mxu0 %v1221
    %1255 = vmatprep.subr.bf16.mxu0 0
    %1256 = vmatpush1.bf16.msra.mxu0 0
    %1257 = vmatprep.subr.bf16.mxu0 0
    %1258 = vmatpush1.bf16.msra.mxu0 0
    %1259 = vmatprep.subr.bf16.mxu0 0
    %1260 = vmatpush1.bf16.msra.mxu0 0
    %1261 = vmatprep.subr.bf16.mxu0 0
    %1262 = vmatpush1.bf16.msra.mxu0 0
    %1263 = vmatprep.subr.bf16.mxu0 0
    %1264 = vmatpush1.bf16.msra.mxu0 0
    %1265 = vmatprep.subr.bf16.mxu0 0
    %1266 = vmatpush1.bf16.msra.mxu0 0
    %1267 = vmatprep.subr.bf16.mxu0 0
    %1268 = vmatpush1.bf16.msra.mxu0 0
    %1269 = vmatprep.subr.bf16.mxu0 0
    %1270 = vmatpush1.bf16.msra.mxu0 0
    %1271 = vmatprep.mubr.bf16.mxu0 0
    %1272 = vmatmul.mubr.bf16.gmra.mrb[0].mxu0 %v1147
    %v1273 = vpop.f32.mrb[0].mxu0
    %v1274 = vadd.f32 %v1152, %v1273
    %v1275 = vpop.f32.mrb[0].mxu0
    %v1276 = vadd.f32 %v1156, %v1275
    %v1277 = vpop.f32.mrb[0].mxu0
    %v1278 = vadd.f32 %v1152, %v1277
    %v1279 = vpop.f32.mrb[0].mxu0
    %v1280 = vadd.f32 %v1156, %v1279
    %1281 = vdwg.mxu0
    %v1282 = vmul.f32 %v1274, 0.5
    %v1283 = vmul.f32 %v1276, 0.5
    %v1284 = vmul.f32 %v1278, 0.5
    %v1285 = vmul.f32 %v1280, 0.5
    %v1286 = vmul.f32 %v1274, 0.044715
    %v1287 = vmul.f32 %v1276, 0.044715
    %v1288 = vmul.f32 %v1278, 0.044715
    %v1289 = vmul.f32 %v1280, 0.044715
    %v1290 = vmul.f32 %v1286, %v1274
    %v1291 = vmul.f32 %v1287, %v1276
    %v1292 = vmul.f32 %v1288, %v1278
    %v1293 = vmul.f32 %v1289, %v1280
    %v1294 = vmul.f32 %v1290, %v1274
    %v1295 = vmul.f32 %v1291, %v1276
    %v1296 = vmul.f32 %v1292, %v1278
    %v1297 = vmul.f32 %v1293, %v1280
    %v1298 = vadd.f32 %v1274, %v1294
    %v1299 = vadd.f32 %v1276, %v1295
    %v1300 = vadd.f32 %v1278, %v1296
    %v1301 = vadd.f32 %v1280, %v1297
    %v1302 = vmul.f32 %v1298, 0.7978846
    %v1303 = vmul.f32 %v1299, 0.7978846
    %v1304 = vmul.f32 %v1300, 0.7978846
    %v1305 = vmul.f32 %v1301, 0.7978846
    %v1306 = vtanh.pop %v1302
    %v1307 = vtanh.pop %v1303
    %v1308 = vtanh.pop %v1304
    %v1309 = vtanh.pop %v1305
    %v1310 = vadd.f32 %v1306, 1.0
    %v1311 = vadd.f32 %v1307, 1.0
    %v1312 = vadd.f32 %v1308, 1.0
    %v1313 = vadd.f32 %v1309, 1.0
    %v1314 = vmul.f32 %v1282, %v1310
    %v1315 = vmul.f32 %v1283, %v1311
    %v1316 = vmul.f32 %v1284, %v1312
    %v1317 = vmul.f32 %v1285, %v1313
    %v1318 = vpack.c.bf16 %v1316, %v1314
    %v1319 = vpack.c.bf16 %v1317, %v1315
    %v1321 = vlaneseq
    %v1322 = vshrl.u32 %v1321, 7
    %v1323 = vsub.s32 0, %v1322
    %v1324 = vrot.slane %v286, %v1323
    %v1358 = vunpack.c.l.b16 %v254
    %v1359 = vunpack.c.l.b16 %v255
    %v1360 = vunpack.c.l.b16 %v256
    %v1361 = vunpack.c.l.b16 %v257
    %v1362 = vunpack.c.l.b16 %v258
    %v1363 = vunpack.c.l.b16 %v259
    %v1364 = vunpack.c.l.b16 %v260
    %v1365 = vunpack.c.l.b16 %v261
    %v1366 = vunpack.c.l.b16 %v262
    %v1367 = vunpack.c.l.b16 %v263
    %v1368 = vunpack.c.l.b16 %v264
    %v1369 = vunpack.c.l.b16 %v265
    %v1370 = vunpack.c.l.b16 %v266
    %v1371 = vunpack.c.l.b16 %v267
    %v1372 = vunpack.c.l.b16 %v268
    %v1373 = vunpack.c.l.b16 %v269
    %v1374 = vunpack.c.l.b16 %v270
    %v1375 = vunpack.c.l.b16 %v271
    %v1376 = vunpack.c.l.b16 %v272
    %v1377 = vunpack.c.l.b16 %v273
    %v1378 = vunpack.c.l.b16 %v274
    %v1379 = vunpack.c.l.b16 %v275
    %v1380 = vunpack.c.l.b16 %v276
    %v1381 = vunpack.c.l.b16 %v277
    %v1382 = vunpack.c.l.b16 %v278
    %v1383 = vunpack.c.l.b16 %v279
    %v1384 = vunpack.c.l.b16 %v280
    %v1385 = vunpack.c.l.b16 %v281
    %v1386 = vunpack.c.l.b16 %v282
    %v1387 = vunpack.c.l.b16 %v283
    %v1388 = vunpack.c.l.b16 %v284
    %v1389 = vunpack.c.l.b16 %v285
    %v1390 = vpack.c.b16 %v1359, %v1358
    %v1391 = vpack.c.b16 %v1361, %v1360
    %v1392 = vpack.c.b16 %v1363, %v1362
    %v1393 = vpack.c.b16 %v1365, %v1364
    %v1394 = vpack.c.b16 %v1367, %v1366
    %v1395 = vpack.c.b16 %v1369, %v1368
    %v1396 = vpack.c.b16 %v1371, %v1370
    %v1397 = vpack.c.b16 %v1373, %v1372
    %v1398 = vpack.c.b16 %v1375, %v1374
    %v1399 = vpack.c.b16 %v1377, %v1376
    %v1400 = vpack.c.b16 %v1379, %v1378
    %v1401 = vpack.c.b16 %v1381, %v1380
    %v1402 = vpack.c.b16 %v1383, %v1382
    %v1403 = vpack.c.b16 %v1385, %v1384
    %v1404 = vpack.c.b16 %v1387, %v1386
    %v1405 = vpack.c.b16 %v1389, %v1388
    %1422 = vmatprep.subr.bf16.mxu0 0
    %1423 = vmatpush1.bf16.msra.mxu0 %v1390
    %1424 = vmatprep.subr.bf16.mxu0 0
    %1425 = vmatpush1.bf16.msra.mxu0 %v1391
    %1426 = vmatprep.subr.bf16.mxu0 0
    %1427 = vmatpush1.bf16.msra.mxu0 %v1392
    %1428 = vmatprep.subr.bf16.mxu0 0
    %1429 = vmatpush1.bf16.msra.mxu0 %v1393
    %1430 = vmatprep.subr.bf16.mxu0 0
    %1431 = vmatpush1.bf16.msra.mxu0 %v1394
    %1432 = vmatprep.subr.bf16.mxu0 0
    %1433 = vmatpush1.bf16.msra.mxu0 %v1395
    %1434 = vmatprep.subr.bf16.mxu0 0
    %1435 = vmatpush1.bf16.msra.mxu0 %v1396
    %1436 = vmatprep.subr.bf16.mxu0 0
    %1437 = vmatpush1.bf16.msra.mxu0 %v1397
    %1438 = vmatprep.subr.bf16.mxu0 0
    %1439 = vmatpush1.bf16.msra.mxu0 %v1398
    %1440 = vmatprep.subr.bf16.mxu0 0
    %1441 = vmatpush1.bf16.msra.mxu0 %v1399
    %1442 = vmatprep.subr.bf16.mxu0 0
    %1443 = vmatpush1.bf16.msra.mxu0 %v1400
    %1444 = vmatprep.subr.bf16.mxu0 0
    %1445 = vmatpush1.bf16.msra.mxu0 %v1401
    %1446 = vmatprep.subr.bf16.mxu0 0
    %1447 = vmatpush1.bf16.msra.mxu0 %v1402
    %1448 = vmatprep.subr.bf16.mxu0 0
    %1449 = vmatpush1.bf16.msra.mxu0 %v1403
    %1450 = vmatprep.subr.bf16.mxu0 0
    %1451 = vmatpush1.bf16.msra.mxu0 %v1404
    %1452 = vmatprep.subr.bf16.mxu0 0
    %1453 = vmatpush1.bf16.msra.mxu0 %v1405
    %1454 = vmatprep.mubr.bf16.mxu0 %v1319
    %1455 = vmatmul.mubr.bf16.gmra.mrb[0].mxu0 %v1318
    %v1456 = vpop.f32.mrb[0].mxu0
    %v1457 = vadd.f32 %v1324, %v1456
    %v1458 = vpop.f32.mrb[0].mxu0
    %v1459 = vpop.f32.mrb[0].mxu0
    %v1460 = vadd.f32 %v1324, %v1459
    %v1461 = vpop.f32.mrb[0].mxu0
    %1462 = vdwg.mxu0
    %v1463 = vadd.f32 %v1457, %v1145
    %v1464 = vadd.f32 %v1460, %v1146
    %1465 = vadd.xlane.f32.xlu0 %v1463
    %v1466 = vpop.xlane.xlu0 %1465
    %1467 = vadd.xlane.f32.xlu0 %v1464
    %v1468 = vpop.xlane.xlu0 %1467
    %v1469 = vmul.f32 %v1466, %v116
    %v1470 = vmul.f32 %v1468, %v116
    %v1471 = vsub.f32 %v1463, %v1469
    %v1472 = vsub.f32 %v1464, %v1470
    %v1473 = vmul.f32 %v1471, %v1471
    %v1474 = vmul.f32 %v1472, %v1472
    %1475 = vadd.xlane.f32.xlu0 %v1473
    %v1476 = vpop.xlane.xlu0 %1475
    %1477 = vadd.xlane.f32.xlu0 %v1474
    %v1478 = vpop.xlane.xlu0 %1477
    %v1479 = vmul.f32 %v1476, %v116
    %v1480 = vmul.f32 %v1478, %v116
    %v1481 = vadd.f32 %v1479, 1e-12
    %v1482 = vadd.f32 %v1480, 1e-12
    %v1483 = vrsqrt.pop %v1481
    %v1484 = vrsqrt.pop %v1482
    %v1485 = vmul.f32 %v1471, %v1483
    %v1486 = vmul.f32 %v1472, %v1484
    %v1488 = vlaneseq
    %v1489 = vshrl.u32 %v1488, 7
    %v1490 = vsub.s32 0, %v1489
    %v1491 = vrot.slane %v287, %v1490
    %v1493 = vmul.f32 %v1485, %v1491
    %v1494 = vmul.f32 %v1486, %v1491
    %v1496 = vlaneseq
    %v1497 = vshrl.u32 %v1496, 7
    %v1498 = vsub.s32 0, %v1497
    %v1499 = vrot.slane %v288, %v1498
    %v1501 = vadd.f32 %v1493, %v1499
    %v1502 = vadd.f32 %v1494, %v1499
    %s1503 = scalar_lea.vmem [#allocation2], 192
    %v1504 = vld [vmem:[%s1503] sm:$0xff]
    %v1505 = vld [vmem:[%s1503 + $0x8] sm:$0xf]
    %v1506 = vld [vmem:[%s1503 + $0xc] sm:$0xff]
    %v1507 = vld [vmem:[%s1503 + $0x14] sm:$0xf]
    %v1508 = vld [vmem:[%s1503 + $0x18] sm:$0xff]
    %v1509 = vld [vmem:[%s1503 + $0x20] sm:$0xf]
    %v1510 = vld [vmem:[%s1503 + $0x24] sm:$0xff]
    %v1511 = vld [vmem:[%s1503 + $0x2c] sm:$0xf]
    %v1512 = vld [vmem:[%s1503 + $0x30] sm:$0xff]
    %v1513 = vld [vmem:[%s1503 + $0x38] sm:$0xf]
    %v1514 = vld [vmem:[%s1503 + $0x3c] sm:$0xff]
    %v1515 = vld [vmem:[%s1503 + $0x44] sm:$0xf]
    %v1516 = vld [vmem:[%s1503 + $0x48] sm:$0xff]
    %v1517 = vld [vmem:[%s1503 + $0x50] sm:$0xf]
    %v1518 = vld [vmem:[%s1503 + $0x54] sm:$0xff]
    %v1519 = vld [vmem:[%s1503 + $0x5c] sm:$0xf]
    %v1520 = vld [vmem:[%s1503 + $0x60] sm:$0xff]
    %v1521 = vld [vmem:[%s1503 + $0x68] sm:$0xf]
    %v1522 = vld [vmem:[%s1503 + $0x6c] sm:$0xff]
    %v1523 = vld [vmem:[%s1503 + $0x74] sm:$0xf]
    %v1524 = vld [vmem:[%s1503 + $0x78] sm:$0xff]
    %v1525 = vld [vmem:[%s1503 + $0x80] sm:$0xf]
    %v1526 = vld [vmem:[%s1503 + $0x84] sm:$0xff]
    %v1527 = vld [vmem:[%s1503 + $0x8c] sm:$0xf]
    %v1528 = vld [vmem:[%s1503 + $0x90] sm:$0xff]
    %v1529 = vld [vmem:[%s1503 + $0x98] sm:$0xf]
    %v1530 = vld [vmem:[%s1503 + $0x9c] sm:$0xff]
    %v1531 = vld [vmem:[%s1503 + $0xa4] sm:$0xf]
    %v1532 = vld [vmem:[%s1503 + $0xa8] sm:$0xff]
    %v1533 = vld [vmem:[%s1503 + $0xb0] sm:$0xf]
    %v1534 = vld [vmem:[%s1503 + $0xb4] sm:$0xff]
    %v1535 = vld [vmem:[%s1503 + $0xbc] sm:$0xf]
    %s1536 = scalar_lea.vmem %s5, 3
    %v1537 = vld [vmem:[%s1536] sm:$0x7]
    %s1538 = scalar_lea.vmem %s6, 64
    %v1539 = vld [vmem:[%s1538] sm:$0xf]
    %v1540 = vld [vmem:[%s1538 + $0x4] sm:$0xf]
    %v1541 = vld [vmem:[%s1538 + $0x8] sm:$0xf]
    %v1542 = vld [vmem:[%s1538 + $0xc] sm:$0xf]
    %v1543 = vld [vmem:[%s1538 + $0x10] sm:$0xf]
    %v1544 = vld [vmem:[%s1538 + $0x14] sm:$0xf]
    %v1545 = vld [vmem:[%s1538 + $0x18] sm:$0xf]
    %v1546 = vld [vmem:[%s1538 + $0x1c] sm:$0xf]
    %v1547 = vld [vmem:[%s1538 + $0x20] sm:$0xf]
    %v1548 = vld [vmem:[%s1538 + $0x24] sm:$0xf]
    %v1549 = vld [vmem:[%s1538 + $0x28] sm:$0xf]
    %v1550 = vld [vmem:[%s1538 + $0x2c] sm:$0xf]
    %v1551 = vld [vmem:[%s1538 + $0x30] sm:$0xf]
    %v1552 = vld [vmem:[%s1538 + $0x34] sm:$0xf]
    %v1553 = vld [vmem:[%s1538 + $0x38] sm:$0xf]
    %v1554 = vld [vmem:[%s1538 + $0x3c] sm:$0xf]
    %s1555 = scalar_lea.vmem %s7, 1
    %v1556 = vld [vmem:[%s1555] sm:$0x1]
    %s1557 = scalar_lea.vmem %s8, 1
    %v1558 = vld [vmem:[%s1557] sm:$0x1]
    %s1559 = scalar_lea.vmem %s9, 1
    %v1560 = vld [vmem:[%s1559] sm:$0x1]
    %s1561 = scalar_lea.vmem %s10, 128
    %v1562 = vld [vmem:[%s1561] sm:$0xff]
    %v1563 = vld [vmem:[%s1561 + $0x8] sm:$0xff]
    %v1564 = vld [vmem:[%s1561 + $0x10] sm:$0xff]
    %v1565 = vld [vmem:[%s1561 + $0x18] sm:$0xff]
    %v1566 = vld [vmem:[%s1561 + $0x20] sm:$0xff]
    %v1567 = vld [vmem:[%s1561 + $0x28] sm:$0xff]
    %v1568 = vld [vmem:[%s1561 + $0x30] sm:$0xff]
    %v1569 = vld [vmem:[%s1561 + $0x38] sm:$0xff]
    %v1570 = vld [vmem:[%s1561 + $0x40] sm:$0xff]
    %v1571 = vld [vmem:[%s1561 + $0x48] sm:$0xff]
    %v1572 = vld [vmem:[%s1561 + $0x50] sm:$0xff]
    %v1573 = vld [vmem:[%s1561 + $0x58] sm:$0xff]
    %v1574 = vld [vmem:[%s1561 + $0x60] sm:$0xff]
    %v1575 = vld [vmem:[%s1561 + $0x68] sm:$0xff]
    %v1576 = vld [vmem:[%s1561 + $0x70] sm:$0xff]
    %v1577 = vld [vmem:[%s1561 + $0x78] sm:$0xff]
    %s1578 = scalar_lea.vmem %s11, 2
    %v1579 = vld [vmem:[%s1578] sm:$0x3]
    %s1580 = scalar_lea.vmem [#allocation5], 128
    %v1581 = vld [vmem:[%s1580] sm:$0xf]
    %v1582 = vld [vmem:[%s1580 + $0x4] sm:$0xf]
    %v1583 = vld [vmem:[%s1580 + $0x8] sm:$0xf]
    %v1584 = vld [vmem:[%s1580 + $0xc] sm:$0xf]
    %v1585 = vld [vmem:[%s1580 + $0x10] sm:$0xf]
    %v1586 = vld [vmem:[%s1580 + $0x14] sm:$0xf]
    %v1587 = vld [vmem:[%s1580 + $0x18] sm:$0xf]
    %v1588 = vld [vmem:[%s1580 + $0x1c] sm:$0xf]
    %v1589 = vld [vmem:[%s1580 + $0x20] sm:$0xf]
    %v1590 = vld [vmem:[%s1580 + $0x24] sm:$0xf]
    %v1591 = vld [vmem:[%s1580 + $0x28] sm:$0xf]
    %v1592 = vld [vmem:[%s1580 + $0x2c] sm:$0xf]
    %v1593 = vld [vmem:[%s1580 + $0x30] sm:$0xf]
    %v1594 = vld [vmem:[%s1580 + $0x34] sm:$0xf]
    %v1595 = vld [vmem:[%s1580 + $0x38] sm:$0xf]
    %v1596 = vld [vmem:[%s1580 + $0x3c] sm:$0xf]
    %v1597 = vld [vmem:[%s1580 + $0x40] sm:$0xf]
    %v1598 = vld [vmem:[%s1580 + $0x44] sm:$0xf]
    %v1599 = vld [vmem:[%s1580 + $0x48] sm:$0xf]
    %v1600 = vld [vmem:[%s1580 + $0x4c] sm:$0xf]
    %v1601 = vld [vmem:[%s1580 + $0x50] sm:$0xf]
    %v1602 = vld [vmem:[%s1580 + $0x54] sm:$0xf]
    %v1603 = vld [vmem:[%s1580 + $0x58] sm:$0xf]
    %v1604 = vld [vmem:[%s1580 + $0x5c] sm:$0xf]
    %v1605 = vld [vmem:[%s1580 + $0x60] sm:$0xf]
    %v1606 = vld [vmem:[%s1580 + $0x64] sm:$0xf]
    %v1607 = vld [vmem:[%s1580 + $0x68] sm:$0xf]
    %v1608 = vld [vmem:[%s1580 + $0x6c] sm:$0xf]
    %v1609 = vld [vmem:[%s1580 + $0x70] sm:$0xf]
    %v1610 = vld [vmem:[%s1580 + $0x74] sm:$0xf]
    %v1611 = vld [vmem:[%s1580 + $0x78] sm:$0xf]
    %v1612 = vld [vmem:[%s1580 + $0x7c] sm:$0xf]
    %s1613 = scalar_lea.vmem %s13, 1
    %v1614 = vld [vmem:[%s1613] sm:$0x1]
    %s1615 = scalar_lea.vmem %s14, 1
    %v1616 = vld [vmem:[%s1615] sm:$0x1]
    %s1617 = scalar_lea.vmem %s15, 1
    %v1618 = vld [vmem:[%s1617] sm:$0x1]
    %v1619 = vpack.c.bf16 %v1502, %v1501
    %v1621 = vlaneseq
    %v1622 = vshrl.u32 %v1621, 7
    %v1623 = vsub.s32 0, %v1622
    %v1624 = vrot.slane %v1537, %v1623
    %v1625 = vlaneseq
    %v1626 = vshrl.u32 %v1625, 7
    %v1627 = vsub.s32 1, %v1626
    %v1628 = vrot.slane %v1537, %v1627
    %v1629 = vlaneseq
    %v1630 = vshrl.u32 %v1629, 7
    %v1631 = vsub.s32 2, %v1630
    %v1632 = vrot.slane %v1537, %v1631
    %v1668 = vunpack.c.l.b16 %v1504
    %v1669 = vunpack.c.h.b16 %v1504
    %v1670 = vunpack.c.l.b16 %v1505
    %v1671 = vunpack.c.l.b16 %v1506
    %v1672 = vunpack.c.h.b16 %v1506
    %v1673 = vunpack.c.l.b16 %v1507
    %v1674 = vunpack.c.l.b16 %v1508
    %v1675 = vunpack.c.h.b16 %v1508
    %v1676 = vunpack.c.l.b16 %v1509
    %v1677 = vunpack.c.l.b16 %v1510
    %v1678 = vunpack.c.h.b16 %v1510
    %v1679 = vunpack.c.l.b16 %v1511
    %v1680 = vunpack.c.l.b16 %v1512
    %v1681 = vunpack.c.h.b16 %v1512
    %v1682 = vunpack.c.l.b16 %v1513
    %v1683 = vunpack.c.l.b16 %v1514
    %v1684 = vunpack.c.h.b16 %v1514
    %v1685 = vunpack.c.l.b16 %v1515
    %v1686 = vunpack.c.l.b16 %v1516
    %v1687 = vunpack.c.h.b16 %v1516
    %v1688 = vunpack.c.l.b16 %v1517
    %v1689 = vunpack.c.l.b16 %v1518
    %v1690 = vunpack.c.h.b16 %v1518
    %v1691 = vunpack.c.l.b16 %v1519
    %v1692 = vunpack.c.l.b16 %v1520
    %v1693 = vunpack.c.h.b16 %v1520
    %v1694 = vunpack.c.l.b16 %v1521
    %v1695 = vunpack.c.l.b16 %v1522
    %v1696 = vunpack.c.h.b16 %v1522
    %v1697 = vunpack.c.l.b16 %v1523
    %v1698 = vunpack.c.l.b16 %v1524
    %v1699 = vunpack.c.h.b16 %v1524
    %v1700 = vunpack.c.l.b16 %v1525
    %v1701 = vunpack.c.l.b16 %v1526
    %v1702 = vunpack.c.h.b16 %v1526
    %v1703 = vunpack.c.l.b16 %v1527
    %v1704 = vunpack.c.l.b16 %v1528
    %v1705 = vunpack.c.h.b16 %v1528
    %v1706 = vunpack.c.l.b16 %v1529
    %v1707 = vunpack.c.l.b16 %v1530
    %v1708 = vunpack.c.h.b16 %v1530
    %v1709 = vunpack.c.l.b16 %v1531
    %v1710 = vunpack.c.l.b16 %v1532
    %v1711 = vunpack.c.h.b16 %v1532
    %v1712 = vunpack.c.l.b16 %v1533
    %v1713 = vunpack.c.l.b16 %v1534
    %v1714 = vunpack.c.h.b16 %v1534
    %v1715 = vunpack.c.l.b16 %v1535
    %v1716 = vpack.c.b16 %v1671, %v1668
    %v1717 = vpack.c.b16 %v1672, %v1669
    %v1718 = vpack.c.b16 %v1673, %v1670
    %v1719 = vpack.c.b16 %v1677, %v1674
    %v1720 = vpack.c.b16 %v1678, %v1675
    %v1721 = vpack.c.b16 %v1679, %v1676
    %v1722 = vpack.c.b16 %v1683, %v1680
    %v1723 = vpack.c.b16 %v1684, %v1681
    %v1724 = vpack.c.b16 %v1685, %v1682
    %v1725 = vpack.c.b16 %v1689, %v1686
    %v1726 = vpack.c.b16 %v1690, %v1687
    %v1727 = vpack.c.b16 %v1691, %v1688
    %v1728 = vpack.c.b16 %v1695, %v1692
    %v1729 = vpack.c.b16 %v1696, %v1693
    %v1730 = vpack.c.b16 %v1697, %v1694
    %v1731 = vpack.c.b16 %v1701, %v1698
    %v1732 = vpack.c.b16 %v1702, %v1699
    %v1733 = vpack.c.b16 %v1703, %v1700
    %v1734 = vpack.c.b16 %v1707, %v1704
    %v1735 = vpack.c.b16 %v1708, %v1705
    %v1736 = vpack.c.b16 %v1709, %v1706
    %v1737 = vpack.c.b16 %v1713, %v1710
    %v1738 = vpack.c.b16 %v1714, %v1711
    %v1739 = vpack.c.b16 %v1715, %v1712
    %1764 = vmatprep.subr.bf16.mxu0 %v1717
    %1765 = vmatpush1.bf16.msra.mxu0 %v1716
    %1766 = vmatprep.subr.bf16.mxu0 %v1720
    %1767 = vmatpush1.bf16.msra.mxu0 %v1719
    %1768 = vmatprep.subr.bf16.mxu0 %v1723
    %1769 = vmatpush1.bf16.msra.mxu0 %v1722
    %1770 = vmatprep.subr.bf16.mxu0 %v1726
    %1771 = vmatpush1.bf16.msra.mxu0 %v1725
    %1772 = vmatprep.subr.bf16.mxu0 %v1729
    %1773 = vmatpush1.bf16.msra.mxu0 %v1728
    %1774 = vmatprep.subr.bf16.mxu0 %v1732
    %1775 = vmatpush1.bf16.msra.mxu0 %v1731
    %1776 = vmatprep.subr.bf16.mxu0 %v1735
    %1777 = vmatpush1.bf16.msra.mxu0 %v1734
    %1778 = vmatprep.subr.bf16.mxu0 %v1738
    %1779 = vmatpush1.bf16.msra.mxu0 %v1737
    %1780 = vmatprep.subr.bf16.mxu0 0
    %1781 = vmatpush1.bf16.msra.mxu0 0
    %1782 = vmatprep.subr.bf16.mxu0 0
    %1783 = vmatpush1.bf16.msra.mxu0 0
    %1784 = vmatprep.subr.bf16.mxu0 0
    %1785 = vmatpush1.bf16.msra.mxu0 0
    %1786 = vmatprep.subr.bf16.mxu0 0
    %1787 = vmatpush1.bf16.msra.mxu0 0
    %1788 = vmatprep.subr.bf16.mxu0 0
    %1789 = vmatpush1.bf16.msra.mxu0 0
    %1790 = vmatprep.subr.bf16.mxu0 0
    %1791 = vmatpush1.bf16.msra.mxu0 0
    %1792 = vmatprep.subr.bf16.mxu0 0
    %1793 = vmatpush1.bf16.msra.mxu0 0
    %1794 = vmatprep.subr.bf16.mxu0 0
    %1795 = vmatpush1.bf16.msra.mxu0 0
    %1796 = vmatprep.mubr.bf16.mxu0 0
    %1797 = vmatmul.mubr.bf16.gmra.mrb[0].mxu0 %v1619
    %v1798 = vpop.f32.mrb[0].mxu0
    %v1799 = vadd.f32 %v1624, %v1798
    %v1800 = vpop.f32.mrb[0].mxu0
    %v1801 = vadd.f32 %v1628, %v1800
    %v1802 = vpop.f32.mrb[0].mxu0
    %v1803 = vadd.f32 %v1624, %v1802
    %v1804 = vpop.f32.mrb[0].mxu0
    %v1805 = vadd.f32 %v1628, %v1804
    %1806 = vdwg.mxu0
    %1807 = vmatprep.subr.bf16.mxu0 0
    %1808 = vmatpush1.bf16.msra.mxu0 %v1718
    %1809 = vmatprep.subr.bf16.mxu0 0
    %1810 = vmatpush1.bf16.msra.mxu0 %v1721
    %1811 = vmatprep.subr.bf16.mxu0 0
    %1812 = vmatpush1.bf16.msra.mxu0 %v1724
    %1813 = vmatprep.subr.bf16.mxu0 0
    %1814 = vmatpush1.bf16.msra.mxu0 %v1727
    %1815 = vmatprep.subr.bf16.mxu0 0
    %1816 = vmatpush1.bf16.msra.mxu0 %v1730
    %1817 = vmatprep.subr.bf16.mxu0 0
    %1818 = vmatpush1.bf16.msra.mxu0 %v1733
    %1819 = vmatprep.subr.bf16.mxu0 0
    %1820 = vmatpush1.bf16.msra.mxu0 %v1736
    %1821 = vmatprep.subr.bf16.mxu0 0
    %1822 = vmatpush1.bf16.msra.mxu0 %v1739
    %1823 = vmatprep.subr.bf16.mxu0 0
    %1824 = vmatpush1.bf16.msra.mxu0 0
    %1825 = vmatprep.subr.bf16.mxu0 0
    %1826 = vmatpush1.bf16.msra.mxu0 0
    %1827 = vmatprep.subr.bf16.mxu0 0
    %1828 = vmatpush1.bf16.msra.mxu0 0
    %1829 = vmatprep.subr.bf16.mxu0 0
    %1830 = vmatpush1.bf16.msra.mxu0 0
    %1831 = vmatprep.subr.bf16.mxu0 0
    %1832 = vmatpush1.bf16.msra.mxu0 0
    %1833 = vmatprep.subr.bf16.mxu0 0
    %1834 = vmatpush1.bf16.msra.mxu0 0
    %1835 = vmatprep.subr.bf16.mxu0 0
    %1836 = vmatpush1.bf16.msra.mxu0 0
    %1837 = vmatprep.subr.bf16.mxu0 0
    %1838 = vmatpush1.bf16.msra.mxu0 0
    %1839 = vmatprep.mubr.bf16.mxu0 0
    %1840 = vmatmul.mubr.bf16.gmra.mrb[0].mxu0 %v1619
    %v1841 = vpop.f32.mrb[0].mxu0
    %v1842 = vadd.f32 %v1632, %v1841
    %v1843 = vpop.f32.mrb[0].mxu0
    %v1844 = vpop.f32.mrb[0].mxu0
    %v1845 = vadd.f32 %v1632, %v1844
    %v1846 = vpop.f32.mrb[0].mxu0
    %1847 = vdwg.mxu0
    %v1848 = vpack.c.bf16 %v1803, %v1799
    %v1849 = vpack.c.bf16 %v1805, %v1801
    %v1850 = vpack.c.bf16 %v1845, %v1842
    %1852 = vrot.lane.b32.xlu0 %v1848, 64
    %v1853 = vpop.permute.xlu0 %1852
    %v1854 = vunpack.c.l.b16 %v1848
    %v1855 = vunpack.c.h.b16 %v1848
    %v1856 = vunpack.c.l.b16 %v1853
    %v1857 = vunpack.c.h.b16 %v1853
    %v1858 = vpack.c.b16 %v1854, %v1854
    %v1859 = vpack.c.b16 %v1855, %v1855
    %v1860 = vpack.c.b16 %v1856, %v1856
    %v1861 = vpack.c.b16 %v1857, %v1857
    %1863 = vrot.lane.b32.xlu0 %v1849, 64
    %v1864 = vpop.permute.xlu0 %1863
    %v1865 = vunpack.c.l.b16 %v1849
    %v1866 = vunpack.c.h.b16 %v1849
    %v1867 = vunpack.c.l.b16 %v1864
    %v1868 = vunpack.c.h.b16 %v1864
    %v1869 = vpack.c.b16 %v1865, %v1865
    %v1870 = vpack.c.b16 %v1866, %v1866
    %v1871 = vpack.c.b16 %v1867, %v1867
    %v1872 = vpack.c.b16 %v1868, %v1868
    %1874 = vrot.lane.b32.xlu0 %v1850, 64
    %v1875 = vpop.permute.xlu0 %1874
    %v1876 = vunpack.c.l.b16 %v1850
    %v1877 = vunpack.c.h.b16 %v1850
    %v1878 = vunpack.c.l.b16 %v1875
    %v1879 = vunpack.c.h.b16 %v1875
    %v1880 = vpack.c.b16 %v1876, %v1876
    %v1881 = vpack.c.b16 %v1877, %v1877
    %v1882 = vpack.c.b16 %v1878, %v1878
    %v1883 = vpack.c.b16 %v1879, %v1879
    %v1885 = vsel %vm554, %v1858, 0
    %v1888 = vsel %vm554, %v1869, 0
    %1890 = vmatprep.subr.bf16.mxu0 0
    %1891 = vmatpush1.bf16.xpose.msra.mxu0 %v1888
    %1892 = vmatprep.subr.bf16.mxu0 0
    %1893 = vmatpush1.bf16.xpose.msra.mxu0 0
    %1894 = vmatprep.subr.bf16.mxu0 0
    %1895 = vmatpush1.bf16.xpose.msra.mxu0 0
    %1896 = vmatprep.subr.bf16.mxu0 0
    %1897 = vmatpush1.bf16.xpose.msra.mxu0 0
    %1898 = vmatprep.subr.bf16.mxu0 0
    %1899 = vmatpush1.bf16.xpose.msra.mxu0 0
    %1900 = vmatprep.subr.bf16.mxu0 0
    %1901 = vmatpush1.bf16.xpose.msra.mxu0 0
    %1902 = vmatprep.subr.bf16.mxu0 0
    %1903 = vmatpush1.bf16.xpose.msra.mxu0 0
    %1904 = vmatprep.subr.bf16.mxu0 0
    %1905 = vmatpush1.bf16.xpose.msra.mxu0 0
    %1906 = vmatprep.subr.bf16.mxu0 0
    %1907 = vmatpush1.bf16.xpose.msra.mxu0 0
    %1908 = vmatprep.subr.bf16.mxu0 0
    %1909 = vmatpush1.bf16.xpose.msra.mxu0 0
    %1910 = vmatprep.subr.bf16.mxu0 0
    %1911 = vmatpush1.bf16.xpose.msra.mxu0 0
    %1912 = vmatprep.subr.bf16.mxu0 0
    %1913 = vmatpush1.bf16.xpose.msra.mxu0 0
    %1914 = vmatprep.subr.bf16.mxu0 0
    %1915 = vmatpush1.bf16.xpose.msra.mxu0 0
    %1916 = vmatprep.subr.bf16.mxu0 0
    %1917 = vmatpush1.bf16.xpose.msra.mxu0 0
    %1918 = vmatprep.subr.bf16.mxu0 0
    %1919 = vmatpush1.bf16.xpose.msra.mxu0 0
    %1920 = vmatprep.subr.bf16.mxu0 0
    %1921 = vmatpush1.bf16.xpose.msra.mxu0 0
    %1922 = vmatprep.mubr.bf16.mxu0 0
    %1923 = vmatmul.mubr.bf16.gmra.mrb[0].mxu0 %v1885
    %v1924 = vpop.f32.mrb[0].mxu0
    %v1925 = vadd.f32 0.0, %v1924
    %v1926 = vpop.f32.mrb[0].mxu0
    %v1927 = vpop.f32.mrb[0].mxu0
    %v1928 = vpop.f32.mrb[0].mxu0
    %1929 = vdwg.mxu0
    %v1931 = vsel %vm554, %v1859, 0
    %v1934 = vsel %vm554, %v1870, 0
    %1936 = vmatprep.subr.bf16.mxu0 0
    %1937 = vmatpush1.bf16.xpose.msra.mxu0 %v1934
    %1938 = vmatprep.subr.bf16.mxu0 0
    %1939 = vmatpush1.bf16.xpose.msra.mxu0 0
    %1940 = vmatprep.subr.bf16.mxu0 0
    %1941 = vmatpush1.bf16.xpose.msra.mxu0 0
    %1942 = vmatprep.subr.bf16.mxu0 0
    %1943 = vmatpush1.bf16.xpose.msra.mxu0 0
    %1944 = vmatprep.subr.bf16.mxu0 0
    %1945 = vmatpush1.bf16.xpose.msra.mxu0 0
    %1946 = vmatprep.subr.bf16.mxu0 0
    %1947 = vmatpush1.bf16.xpose.msra.mxu0 0
    %1948 = vmatprep.subr.bf16.mxu0 0
    %1949 = vmatpush1.bf16.xpose.msra.mxu0 0
    %1950 = vmatprep.subr.bf16.mxu0 0
    %1951 = vmatpush1.bf16.xpose.msra.mxu0 0
    %1952 = vmatprep.subr.bf16.mxu0 0
    %1953 = vmatpush1.bf16.xpose.msra.mxu0 0
    %1954 = vmatprep.subr.bf16.mxu0 0
    %1955 = vmatpush1.bf16.xpose.msra.mxu0 0
    %1956 = vmatprep.subr.bf16.mxu0 0
    %1957 = vmatpush1.bf16.xpose.msra.mxu0 0
    %1958 = vmatprep.subr.bf16.mxu0 0
    %1959 = vmatpush1.bf16.xpose.msra.mxu0 0
    %1960 = vmatprep.subr.bf16.mxu0 0
    %1961 = vmatpush1.bf16.xpose.msra.mxu0 0
    %1962 = vmatprep.subr.bf16.mxu0 0
    %1963 = vmatpush1.bf16.xpose.msra.mxu0 0
    %1964 = vmatprep.subr.bf16.mxu0 0
    %1965 = vmatpush1.bf16.xpose.msra.mxu0 0
    %1966 = vmatprep.subr.bf16.mxu0 0
    %1967 = vmatpush1.bf16.xpose.msra.mxu0 0
    %1968 = vmatprep.mubr.bf16.mxu0 0
    %1969 = vmatmul.mubr.bf16.gmra.mrb[0].mxu0 %v1931
    %v1970 = vpop.f32.mrb[0].mxu0
    %v1971 = vadd.f32 0.0, %v1970
    %v1972 = vpop.f32.mrb[0].mxu0
    %v1973 = vpop.f32.mrb[0].mxu0
    %v1974 = vpop.f32.mrb[0].mxu0
    %1975 = vdwg.mxu0
    %v1977 = vsel %vm554, %v1860, 0
    %v1980 = vsel %vm554, %v1871, 0
    %1982 = vmatprep.subr.bf16.mxu0 0
    %1983 = vmatpush1.bf16.xpose.msra.mxu0 %v1980
    %1984 = vmatprep.subr.bf16.mxu0 0
    %1985 = vmatpush1.bf16.xpose.msra.mxu0 0
    %1986 = vmatprep.subr.bf16.mxu0 0
    %1987 = vmatpush1.bf16.xpose.msra.mxu0 0
    %1988 = vmatprep.subr.bf16.mxu0 0
    %1989 = vmatpush1.bf16.xpose.msra.mxu0 0
    %1990 = vmatprep.subr.bf16.mxu0 0
    %1991 = vmatpush1.bf16.xpose.msra.mxu0 0
    %1992 = vmatprep.subr.bf16.mxu0 0
    %1993 = vmatpush1.bf16.xpose.msra.mxu0 0
    %1994 = vmatprep.subr.bf16.mxu0 0
    %1995 = vmatpush1.bf16.xpose.msra.mxu0 0
    %1996 = vmatprep.subr.bf16.mxu0 0
    %1997 = vmatpush1.bf16.xpose.msra.mxu0 0
    %1998 = vmatprep.subr.bf16.mxu0 0
    %1999 = vmatpush1.bf16.xpose.msra.mxu0 0
    %2000 = vmatprep.subr.bf16.mxu0 0
    %2001 = vmatpush1.bf16.xpose.msra.mxu0 0
    %2002 = vmatprep.subr.bf16.mxu0 0
    %2003 = vmatpush1.bf16.xpose.msra.mxu0 0
    %2004 = vmatprep.subr.bf16.mxu0 0
    %2005 = vmatpush1.bf16.xpose.msra.mxu0 0
    %2006 = vmatprep.subr.bf16.mxu0 0
    %2007 = vmatpush1.bf16.xpose.msra.mxu0 0
    %2008 = vmatprep.subr.bf16.mxu0 0
    %2009 = vmatpush1.bf16.xpose.msra.mxu0 0
    %2010 = vmatprep.subr.bf16.mxu0 0
    %2011 = vmatpush1.bf16.xpose.msra.mxu0 0
    %2012 = vmatprep.subr.bf16.mxu0 0
    %2013 = vmatpush1.bf16.xpose.msra.mxu0 0
    %2014 = vmatprep.mubr.bf16.mxu0 0
    %2015 = vmatmul.mubr.bf16.gmra.mrb[0].mxu0 %v1977
    %v2016 = vpop.f32.mrb[0].mxu0
    %v2017 = vadd.f32 0.0, %v2016
    %v2018 = vpop.f32.mrb[0].mxu0
    %v2019 = vpop.f32.mrb[0].mxu0
    %v2020 = vpop.f32.mrb[0].mxu0
    %2021 = vdwg.mxu0
    %v2023 = vsel %vm554, %v1861, 0
    %v2026 = vsel %vm554, %v1872, 0
    %2028 = vmatprep.subr.bf16.mxu0 0
    %2029 = vmatpush1.bf16.xpose.msra.mxu0 %v2026
    %2030 = vmatprep.subr.bf16.mxu0 0
    %2031 = vmatpush1.bf16.xpose.msra.mxu0 0
    %2032 = vmatprep.subr.bf16.mxu0 0
    %2033 = vmatpush1.bf16.xpose.msra.mxu0 0
    %2034 = vmatprep.subr.bf16.mxu0 0
    %2035 = vmatpush1.bf16.xpose.msra.mxu0 0
    %2036 = vmatprep.subr.bf16.mxu0 0
    %2037 = vmatpush1.bf16.xpose.msra.mxu0 0
    %2038 = vmatprep.subr.bf16.mxu0 0
    %2039 = vmatpush1.bf16.xpose.msra.mxu0 0
    %2040 = vmatprep.subr.bf16.mxu0 0
    %2041 = vmatpush1.bf16.xpose.msra.mxu0 0
    %2042 = vmatprep.subr.bf16.mxu0 0
    %2043 = vmatpush1.bf16.xpose.msra.mxu0 0
    %2044 = vmatprep.subr.bf16.mxu0 0
    %2045 = vmatpush1.bf16.xpose.msra.mxu0 0
    %2046 = vmatprep.subr.bf16.mxu0 0
    %2047 = vmatpush1.bf16.xpose.msra.mxu0 0
    %2048 = vmatprep.subr.bf16.mxu0 0
    %2049 = vmatpush1.bf16.xpose.msra.mxu0 0
    %2050 = vmatprep.subr.bf16.mxu0 0
    %2051 = vmatpush1.bf16.xpose.msra.mxu0 0
    %2052 = vmatprep.subr.bf16.mxu0 0
    %2053 = vmatpush1.bf16.xpose.msra.mxu0 0
    %2054 = vmatprep.subr.bf16.mxu0 0
    %2055 = vmatpush1.bf16.xpose.msra.mxu0 0
    %2056 = vmatprep.subr.bf16.mxu0 0
    %2057 = vmatpush1.bf16.xpose.msra.mxu0 0
    %2058 = vmatprep.subr.bf16.mxu0 0
    %2059 = vmatpush1.bf16.xpose.msra.mxu0 0
    %2060 = vmatprep.mubr.bf16.mxu0 0
    %2061 = vmatmul.mubr.bf16.gmra.mrb[0].mxu0 %v2023
    %v2062 = vpop.f32.mrb[0].mxu0
    %v2063 = vadd.f32 0.0, %v2062
    %v2064 = vpop.f32.mrb[0].mxu0
    %v2065 = vpop.f32.mrb[0].mxu0
    %v2066 = vpop.f32.mrb[0].mxu0
    %2067 = vdwg.mxu0
    %v2068 = vmul.f32 %v1925, 0.125
    %v2069 = vmul.f32 %v1971, 0.125
    %v2070 = vmul.f32 %v2017, 0.125
    %v2071 = vmul.f32 %v2063, 0.125
    %v2072 = vadd.f32 %v2068, %v746
    %v2073 = vadd.f32 %v2069, %v750
    %v2074 = vadd.f32 %v2070, %v754
    %v2075 = vadd.f32 %v2071, %v758
    %v2076 = vsel %vm767, %v2072, -inf
    %2077 = vmax.xlane.f32.xlu0 %v2076
    %v2078 = vpop.xlane.xlu0 %2077
    %v2079 = vsel %vm767, %v2073, -inf
    %2080 = vmax.xlane.f32.xlu0 %v2079
    %v2081 = vpop.xlane.xlu0 %2080
    %v2082 = vsel %vm767, %v2074, -inf
    %2083 = vmax.xlane.f32.xlu0 %v2082
    %v2084 = vpop.xlane.xlu0 %2083
    %v2085 = vsel %vm767, %v2075, -inf
    %2086 = vmax.xlane.f32.xlu0 %v2085
    %v2087 = vpop.xlane.xlu0 %2086
    %v2088 = vsub.f32 %v2072, %v2078
    %v2089 = vsub.f32 %v2073, %v2081
    %v2090 = vsub.f32 %v2074, %v2084
    %v2091 = vsub.f32 %v2075, %v2087
    %v2092 = vmul.f32 %v2088, 1.442695
    %v2093 = vpow.pop %v2092
    %v2094 = vmul.f32 %v2089, 1.442695
    %v2095 = vpow.pop %v2094
    %v2096 = vmul.f32 %v2090, 1.442695
    %v2097 = vpow.pop %v2096
    %v2098 = vmul.f32 %v2091, 1.442695
    %v2099 = vpow.pop %v2098
    %v2100 = vsel %vm767, %v2093, 0.0
    %2101 = vadd.xlane.f32.xlu0 %v2100
    %v2102 = vpop.xlane.xlu0 %2101
    %v2103 = vsel %vm767, %v2095, 0.0
    %2104 = vadd.xlane.f32.xlu0 %v2103
    %v2105 = vpop.xlane.xlu0 %2104
    %v2106 = vsel %vm767, %v2097, 0.0
    %2107 = vadd.xlane.f32.xlu0 %v2106
    %v2108 = vpop.xlane.xlu0 %2107
    %v2109 = vsel %vm767, %v2099, 0.0
    %2110 = vadd.xlane.f32.xlu0 %v2109
    %v2111 = vpop.xlane.xlu0 %2110
    %v2112 = vrcp.pop %v2102
    %v2113 = vrcp.pop %v2105
    %v2114 = vrcp.pop %v2108
    %v2115 = vrcp.pop %v2111
    %v2116 = vmul.f32 %v2093, %v2112
    %v2117 = vmul.f32 %v2095, %v2113
    %v2118 = vmul.f32 %v2097, %v2114
    %v2119 = vmul.f32 %v2099, %v2115
    %v2120 = vpack.c.bf16 %v2116, %v2116
    %v2121 = vpack.c.bf16 %v2117, %v2117
    %v2122 = vpack.c.bf16 %v2118, %v2118
    %v2123 = vpack.c.bf16 %v2119, %v2119
    %v2125 = vsel %vm767, %v2120, 0
    %v2128 = vsel %vm819, %v1880, 0
    %2130 = vmatprep.subr.bf16.mxu0 0
    %2131 = vmatpush1.bf16.msra.mxu0 %v2128
    %2132 = vmatprep.subr.bf16.mxu0 0
    %2133 = vmatpush1.bf16.msra.mxu0 0
    %2134 = vmatprep.subr.bf16.mxu0 0
    %2135 = vmatpush1.bf16.msra.mxu0 0
    %2136 = vmatprep.subr.bf16.mxu0 0
    %2137 = vmatpush1.bf16.msra.mxu0 0
    %2138 = vmatprep.subr.bf16.mxu0 0
    %2139 = vmatpush1.bf16.msra.mxu0 0
    %2140 = vmatprep.subr.bf16.mxu0 0
    %2141 = vmatpush1.bf16.msra.mxu0 0
    %2142 = vmatprep.subr.bf16.mxu0 0
    %2143 = vmatpush1.bf16.msra.mxu0 0
    %2144 = vmatprep.subr.bf16.mxu0 0
    %2145 = vmatpush1.bf16.msra.mxu0 0
    %2146 = vmatprep.subr.bf16.mxu0 0
    %2147 = vmatpush1.bf16.msra.mxu0 0
    %2148 = vmatprep.subr.bf16.mxu0 0
    %2149 = vmatpush1.bf16.msra.mxu0 0
    %2150 = vmatprep.subr.bf16.mxu0 0
    %2151 = vmatpush1.bf16.msra.mxu0 0
    %2152 = vmatprep.subr.bf16.mxu0 0
    %2153 = vmatpush1.bf16.msra.mxu0 0
    %2154 = vmatprep.subr.bf16.mxu0 0
    %2155 = vmatpush1.bf16.msra.mxu0 0
    %2156 = vmatprep.subr.bf16.mxu0 0
    %2157 = vmatpush1.bf16.msra.mxu0 0
    %2158 = vmatprep.subr.bf16.mxu0 0
    %2159 = vmatpush1.bf16.msra.mxu0 0
    %2160 = vmatprep.subr.bf16.mxu0 0
    %2161 = vmatpush1.bf16.msra.mxu0 0
    %2162 = vmatprep.mubr.bf16.mxu0 0
    %2163 = vmatmul.mubr.bf16.gmra.mrb[0].mxu0 %v2125
    %v2164 = vpop.f32.mrb[0].mxu0
    %v2165 = vadd.f32 0.0, %v2164
    %v2166 = vpop.f32.mrb[0].mxu0
    %v2167 = vpop.f32.mrb[0].mxu0
    %v2168 = vpop.f32.mrb[0].mxu0
    %2169 = vdwg.mxu0
    %v2171 = vsel %vm767, %v2121, 0
    %v2174 = vsel %vm819, %v1881, 0
    %2176 = vmatprep.subr.bf16.mxu0 0
    %2177 = vmatpush1.bf16.msra.mxu0 %v2174
    %2178 = vmatprep.subr.bf16.mxu0 0
    %2179 = vmatpush1.bf16.msra.mxu0 0
    %2180 = vmatprep.subr.bf16.mxu0 0
    %2181 = vmatpush1.bf16.msra.mxu0 0
    %2182 = vmatprep.subr.bf16.mxu0 0
    %2183 = vmatpush1.bf16.msra.mxu0 0
    %2184 = vmatprep.subr.bf16.mxu0 0
    %2185 = vmatpush1.bf16.msra.mxu0 0
    %2186 = vmatprep.subr.bf16.mxu0 0
    %2187 = vmatpush1.bf16.msra.mxu0 0
    %2188 = vmatprep.subr.bf16.mxu0 0
    %2189 = vmatpush1.bf16.msra.mxu0 0
    %2190 = vmatprep.subr.bf16.mxu0 0
    %2191 = vmatpush1.bf16.msra.mxu0 0
    %2192 = vmatprep.subr.bf16.mxu0 0
    %2193 = vmatpush1.bf16.msra.mxu0 0
    %2194 = vmatprep.subr.bf16.mxu0 0
    %2195 = vmatpush1.bf16.msra.mxu0 0
    %2196 = vmatprep.subr.bf16.mxu0 0
    %2197 = vmatpush1.bf16.msra.mxu0 0
    %2198 = vmatprep.subr.bf16.mxu0 0
    %2199 = vmatpush1.bf16.msra.mxu0 0
    %2200 = vmatprep.subr.bf16.mxu0 0
    %2201 = vmatpush1.bf16.msra.mxu0 0
    %2202 = vmatprep.subr.bf16.mxu0 0
    %2203 = vmatpush1.bf16.msra.mxu0 0
    %2204 = vmatprep.subr.bf16.mxu0 0
    %2205 = vmatpush1.bf16.msra.mxu0 0
    %2206 = vmatprep.subr.bf16.mxu0 0
    %2207 = vmatpush1.bf16.msra.mxu0 0
    %2208 = vmatprep.mubr.bf16.mxu0 0
    %2209 = vmatmul.mubr.bf16.gmra.mrb[0].mxu0 %v2171
    %v2210 = vpop.f32.mrb[0].mxu0
    %v2211 = vadd.f32 0.0, %v2210
    %v2212 = vpop.f32.mrb[0].mxu0
    %v2213 = vpop.f32.mrb[0].mxu0
    %v2214 = vpop.f32.mrb[0].mxu0
    %2215 = vdwg.mxu0
    %v2217 = vsel %vm767, %v2122, 0
    %v2220 = vsel %vm819, %v1882, 0
    %2222 = vmatprep.subr.bf16.mxu0 0
    %2223 = vmatpush1.bf16.msra.mxu0 %v2220
    %2224 = vmatprep.subr.bf16.mxu0 0
    %2225 = vmatpush1.bf16.msra.mxu0 0
    %2226 = vmatprep.subr.bf16.mxu0 0
    %2227 = vmatpush1.bf16.msra.mxu0 0
    %2228 = vmatprep.subr.bf16.mxu0 0
    %2229 = vmatpush1.bf16.msra.mxu0 0
    %2230 = vmatprep.subr.bf16.mxu0 0
    %2231 = vmatpush1.bf16.msra.mxu0 0
    %2232 = vmatprep.subr.bf16.mxu0 0
    %2233 = vmatpush1.bf16.msra.mxu0 0
    %2234 = vmatprep.subr.bf16.mxu0 0
    %2235 = vmatpush1.bf16.msra.mxu0 0
    %2236 = vmatprep.subr.bf16.mxu0 0
    %2237 = vmatpush1.bf16.msra.mxu0 0
    %2238 = vmatprep.subr.bf16.mxu0 0
    %2239 = vmatpush1.bf16.msra.mxu0 0
    %2240 = vmatprep.subr.bf16.mxu0 0
    %2241 = vmatpush1.bf16.msra.mxu0 0
    %2242 = vmatprep.subr.bf16.mxu0 0
    %2243 = vmatpush1.bf16.msra.mxu0 0
    %2244 = vmatprep.subr.bf16.mxu0 0
    %2245 = vmatpush1.bf16.msra.mxu0 0
    %2246 = vmatprep.subr.bf16.mxu0 0
    %2247 = vmatpush1.bf16.msra.mxu0 0
    %2248 = vmatprep.subr.bf16.mxu0 0
    %2249 = vmatpush1.bf16.msra.mxu0 0
    %2250 = vmatprep.subr.bf16.mxu0 0
    %2251 = vmatpush1.bf16.msra.mxu0 0
    %2252 = vmatprep.subr.bf16.mxu0 0
    %2253 = vmatpush1.bf16.msra.mxu0 0
    %2254 = vmatprep.mubr.bf16.mxu0 0
    %2255 = vmatmul.mubr.bf16.gmra.mrb[0].mxu0 %v2217
    %v2256 = vpop.f32.mrb[0].mxu0
    %v2257 = vadd.f32 0.0, %v2256
    %v2258 = vpop.f32.mrb[0].mxu0
    %v2259 = vpop.f32.mrb[0].mxu0
    %v2260 = vpop.f32.mrb[0].mxu0
    %2261 = vdwg.mxu0
    %v2263 = vsel %vm767, %v2123, 0
    %v2266 = vsel %vm819, %v1883, 0
    %2268 = vmatprep.subr.bf16.mxu0 0
    %2269 = vmatpush1.bf16.msra.mxu0 %v2266
    %2270 = vmatprep.subr.bf16.mxu0 0
    %2271 = vmatpush1.bf16.msra.mxu0 0
    %2272 = vmatprep.subr.bf16.mxu0 0
    %2273 = vmatpush1.bf16.msra.mxu0 0
    %2274 = vmatprep.subr.bf16.mxu0 0
    %2275 = vmatpush1.bf16.msra.mxu0 0
    %2276 = vmatprep.subr.bf16.mxu0 0
    %2277 = vmatpush1.bf16.msra.mxu0 0
    %2278 = vmatprep.subr.bf16.mxu0 0
    %2279 = vmatpush1.bf16.msra.mxu0 0
    %2280 = vmatprep.subr.bf16.mxu0 0
    %2281 = vmatpush1.bf16.msra.mxu0 0
    %2282 = vmatprep.subr.bf16.mxu0 0
    %2283 = vmatpush1.bf16.msra.mxu0 0
    %2284 = vmatprep.subr.bf16.mxu0 0
    %2285 = vmatpush1.bf16.msra.mxu0 0
    %2286 = vmatprep.subr.bf16.mxu0 0
    %2287 = vmatpush1.bf16.msra.mxu0 0
    %2288 = vmatprep.subr.bf16.mxu0 0
    %2289 = vmatpush1.bf16.msra.mxu0 0
    %2290 = vmatprep.subr.bf16.mxu0 0
    %2291 = vmatpush1.bf16.msra.mxu0 0
    %2292 = vmatprep.subr.bf16.mxu0 0
    %2293 = vmatpush1.bf16.msra.mxu0 0
    %2294 = vmatprep.subr.bf16.mxu0 0
    %2295 = vmatpush1.bf16.msra.mxu0 0
    %2296 = vmatprep.subr.bf16.mxu0 0
    %2297 = vmatpush1.bf16.msra.mxu0 0
    %2298 = vmatprep.subr.bf16.mxu0 0
    %2299 = vmatpush1.bf16.msra.mxu0 0
    %2300 = vmatprep.mubr.bf16.mxu0 0
    %2301 = vmatmul.mubr.bf16.gmra.mrb[0].mxu0 %v2263
    %v2302 = vpop.f32.mrb[0].mxu0
    %v2303 = vadd.f32 0.0, %v2302
    %v2304 = vpop.f32.mrb[0].mxu0
    %v2305 = vpop.f32.mrb[0].mxu0
    %v2306 = vpop.f32.mrb[0].mxu0
    %2307 = vdwg.mxu0
    %2310 = vrot.lane.b32.xlu0 %v2257, 64
    %v2311 = vpop.permute.xlu0 %2310
    %2312 = vrot.lane.b32.xlu0 %v2303, 64
    %v2313 = vpop.permute.xlu0 %2312
    %v2316 = vsel %vm554, %v2165, %v2311
    %v2317 = vsel %vm554, %v2211, %v2313
    %v2318 = vpack.c.bf16 %v2317, %v2316
    %v2320 = vlaneseq
    %v2321 = vshrl.u32 %v2320, 7
    %v2322 = vsub.s32 0, %v2321
    %v2323 = vrot.slane %v1556, %v2322
    %v2341 = vunpack.c.l.b16 %v1539
    %v2342 = vunpack.c.l.b16 %v1540
    %v2343 = vunpack.c.l.b16 %v1541
    %v2344 = vunpack.c.l.b16 %v1542
    %v2345 = vunpack.c.l.b16 %v1543
    %v2346 = vunpack.c.l.b16 %v1544
    %v2347 = vunpack.c.l.b16 %v1545
    %v2348 = vunpack.c.l.b16 %v1546
    %v2349 = vunpack.c.l.b16 %v1547
    %v2350 = vunpack.c.l.b16 %v1548
    %v2351 = vunpack.c.l.b16 %v1549
    %v2352 = vunpack.c.l.b16 %v1550
    %v2353 = vunpack.c.l.b16 %v1551
    %v2354 = vunpack.c.l.b16 %v1552
    %v2355 = vunpack.c.l.b16 %v1553
    %v2356 = vunpack.c.l.b16 %v1554
    %v2357 = vpack.c.b16 %v2342, %v2341
    %v2358 = vpack.c.b16 %v2344, %v2343
    %v2359 = vpack.c.b16 %v2346, %v2345
    %v2360 = vpack.c.b16 %v2348, %v2347
    %v2361 = vpack.c.b16 %v2350, %v2349
    %v2362 = vpack.c.b16 %v2352, %v2351
    %v2363 = vpack.c.b16 %v2354, %v2353
    %v2364 = vpack.c.b16 %v2356, %v2355
    %2373 = vmatprep.subr.bf16.mxu0 0
    %2374 = vmatpush1.bf16.msra.mxu0 %v2357
    %2375 = vmatprep.subr.bf16.mxu0 0
    %2376 = vmatpush1.bf16.msra.mxu0 %v2358
    %2377 = vmatprep.subr.bf16.mxu0 0
    %2378 = vmatpush1.bf16.msra.mxu0 %v2359
    %2379 = vmatprep.subr.bf16.mxu0 0
    %2380 = vmatpush1.bf16.msra.mxu0 %v2360
    %2381 = vmatprep.subr.bf16.mxu0 0
    %2382 = vmatpush1.bf16.msra.mxu0 %v2361
    %2383 = vmatprep.subr.bf16.mxu0 0
    %2384 = vmatpush1.bf16.msra.mxu0 %v2362
    %2385 = vmatprep.subr.bf16.mxu0 0
    %2386 = vmatpush1.bf16.msra.mxu0 %v2363
    %2387 = vmatprep.subr.bf16.mxu0 0
    %2388 = vmatpush1.bf16.msra.mxu0 %v2364
    %2389 = vmatprep.subr.bf16.mxu0 0
    %2390 = vmatpush1.bf16.msra.mxu0 0
    %2391 = vmatprep.subr.bf16.mxu0 0
    %2392 = vmatpush1.bf16.msra.mxu0 0
    %2393 = vmatprep.subr.bf16.mxu0 0
    %2394 = vmatpush1.bf16.msra.mxu0 0
    %2395 = vmatprep.subr.bf16.mxu0 0
    %2396 = vmatpush1.bf16.msra.mxu0 0
    %2397 = vmatprep.subr.bf16.mxu0 0
    %2398 = vmatpush1.bf16.msra.mxu0 0
    %2399 = vmatprep.subr.bf16.mxu0 0
    %2400 = vmatpush1.bf16.msra.mxu0 0
    %2401 = vmatprep.subr.bf16.mxu0 0
    %2402 = vmatpush1.bf16.msra.mxu0 0
    %2403 = vmatprep.subr.bf16.mxu0 0
    %2404 = vmatpush1.bf16.msra.mxu0 0
    %2405 = vmatprep.mubr.bf16.mxu0 0
    %2406 = vmatmul.mubr.bf16.gmra.mrb[0].mxu0 %v2318
    %v2407 = vpop.f32.mrb[0].mxu0
    %v2408 = vadd.f32 %v2323, %v2407
    %v2409 = vpop.f32.mrb[0].mxu0
    %v2410 = vpop.f32.mrb[0].mxu0
    %v2411 = vadd.f32 %v2323, %v2410
    %v2412 = vpop.f32.mrb[0].mxu0
    %2413 = vdwg.mxu0
    %v2414 = vadd.f32 %v2408, %v1501
    %v2415 = vadd.f32 %v2411, %v1502
    %2416 = vadd.xlane.f32.xlu0 %v2414
    %v2417 = vpop.xlane.xlu0 %2416
    %2418 = vadd.xlane.f32.xlu0 %v2415
    %v2419 = vpop.xlane.xlu0 %2418
    %v2420 = vmul.f32 %v2417, %v116
    %v2421 = vmul.f32 %v2419, %v116
    %v2422 = vsub.f32 %v2414, %v2420
    %v2423 = vsub.f32 %v2415, %v2421
    %v2424 = vmul.f32 %v2422, %v2422
    %v2425 = vmul.f32 %v2423, %v2423
    %2426 = vadd.xlane.f32.xlu0 %v2424
    %v2427 = vpop.xlane.xlu0 %2426
    %2428 = vadd.xlane.f32.xlu0 %v2425
    %v2429 = vpop.xlane.xlu0 %2428
    %v2430 = vmul.f32 %v2427, %v116
    %v2431 = vmul.f32 %v2429, %v116
    %v2432 = vadd.f32 %v2430, 1e-12
    %v2433 = vadd.f32 %v2431, 1e-12
    %v2434 = vrsqrt.pop %v2432
    %v2435 = vrsqrt.pop %v2433
    %v2436 = vmul.f32 %v2422, %v2434
    %v2437 = vmul.f32 %v2423, %v2435
    %v2439 = vlaneseq
    %v2440 = vshrl.u32 %v2439, 7
    %v2441 = vsub.s32 0, %v2440
    %v2442 = vrot.slane %v1558, %v2441
    %v2444 = vmul.f32 %v2436, %v2442
    %v2445 = vmul.f32 %v2437, %v2442
    %v2447 = vlaneseq
    %v2448 = vshrl.u32 %v2447, 7
    %v2449 = vsub.s32 0, %v2448
    %v2450 = vrot.slane %v1560, %v2449
    %v2452 = vadd.f32 %v2444, %v2450
    %v2453 = vadd.f32 %v2445, %v2450
    %v2454 = vpack.c.bf16 %v2453, %v2452
    %v2456 = vlaneseq
    %v2457 = vshrl.u32 %v2456, 7
    %v2458 = vsub.s32 0, %v2457
    %v2459 = vrot.slane %v1579, %v2458
    %v2460 = vlaneseq
    %v2461 = vshrl.u32 %v2460, 7
    %v2462 = vsub.s32 1, %v2461
    %v2463 = vrot.slane %v1579, %v2462
    %v2482 = vunpack.c.l.b16 %v1562
    %v2483 = vunpack.c.h.b16 %v1562
    %v2484 = vunpack.c.l.b16 %v1563
    %v2485 = vunpack.c.h.b16 %v1563
    %v2486 = vunpack.c.l.b16 %v1564
    %v2487 = vunpack.c.h.b16 %v1564
    %v2488 = vunpack.c.l.b16 %v1565
    %v2489 = vunpack.c.h.b16 %v1565
    %v2490 = vunpack.c.l.b16 %v1566
    %v2491 = vunpack.c.h.b16 %v1566
    %v2492 = vunpack.c.l.b16 %v1567
    %v2493 = vunpack.c.h.b16 %v1567
    %v2494 = vunpack.c.l.b16 %v1568
    %v2495 = vunpack.c.h.b16 %v1568
    %v2496 = vunpack.c.l.b16 %v1569
    %v2497 = vunpack.c.h.b16 %v1569
    %v2498 = vunpack.c.l.b16 %v1570
    %v2499 = vunpack.c.h.b16 %v1570
    %v2500 = vunpack.c.l.b16 %v1571
    %v2501 = vunpack.c.h.b16 %v1571
    %v2502 = vunpack.c.l.b16 %v1572
    %v2503 = vunpack.c.h.b16 %v1572
    %v2504 = vunpack.c.l.b16 %v1573
    %v2505 = vunpack.c.h.b16 %v1573
    %v2506 = vunpack.c.l.b16 %v1574
    %v2507 = vunpack.c.h.b16 %v1574
    %v2508 = vunpack.c.l.b16 %v1575
    %v2509 = vunpack.c.h.b16 %v1575
    %v2510 = vunpack.c.l.b16 %v1576
    %v2511 = vunpack.c.h.b16 %v1576
    %v2512 = vunpack.c.l.b16 %v1577
    %v2513 = vunpack.c.h.b16 %v1577
    %v2514 = vpack.c.b16 %v2484, %v2482
    %v2515 = vpack.c.b16 %v2485, %v2483
    %v2516 = vpack.c.b16 %v2488, %v2486
    %v2517 = vpack.c.b16 %v2489, %v2487
    %v2518 = vpack.c.b16 %v2492, %v2490
    %v2519 = vpack.c.b16 %v2493, %v2491
    %v2520 = vpack.c.b16 %v2496, %v2494
    %v2521 = vpack.c.b16 %v2497, %v2495
    %v2522 = vpack.c.b16 %v2500, %v2498
    %v2523 = vpack.c.b16 %v2501, %v2499
    %v2524 = vpack.c.b16 %v2504, %v2502
    %v2525 = vpack.c.b16 %v2505, %v2503
    %v2526 = vpack.c.b16 %v2508, %v2506
    %v2527 = vpack.c.b16 %v2509, %v2507
    %v2528 = vpack.c.b16 %v2512, %v2510
    %v2529 = vpack.c.b16 %v2513, %v2511
    %2546 = vmatprep.subr.bf16.mxu0 %v2515
    %2547 = vmatpush1.bf16.msra.mxu0 %v2514
    %2548 = vmatprep.subr.bf16.mxu0 %v2517
    %2549 = vmatpush1.bf16.msra.mxu0 %v2516
    %2550 = vmatprep.subr.bf16.mxu0 %v2519
    %2551 = vmatpush1.bf16.msra.mxu0 %v2518
    %2552 = vmatprep.subr.bf16.mxu0 %v2521
    %2553 = vmatpush1.bf16.msra.mxu0 %v2520
    %2554 = vmatprep.subr.bf16.mxu0 %v2523
    %2555 = vmatpush1.bf16.msra.mxu0 %v2522
    %2556 = vmatprep.subr.bf16.mxu0 %v2525
    %2557 = vmatpush1.bf16.msra.mxu0 %v2524
    %2558 = vmatprep.subr.bf16.mxu0 %v2527
    %2559 = vmatpush1.bf16.msra.mxu0 %v2526
    %2560 = vmatprep.subr.bf16.mxu0 %v2529
    %2561 = vmatpush1.bf16.msra.mxu0 %v2528
    %2562 = vmatprep.subr.bf16.mxu0 0
    %2563 = vmatpush1.bf16.msra.mxu0 0
    %2564 = vmatprep.subr.bf16.mxu0 0
    %2565 = vmatpush1.bf16.msra.mxu0 0
    %2566 = vmatprep.subr.bf16.mxu0 0
    %2567 = vmatpush1.bf16.msra.mxu0 0
    %2568 = vmatprep.subr.bf16.mxu0 0
    %2569 = vmatpush1.bf16.msra.mxu0 0
    %2570 = vmatprep.subr.bf16.mxu0 0
    %2571 = vmatpush1.bf16.msra.mxu0 0
    %2572 = vmatprep.subr.bf16.mxu0 0
    %2573 = vmatpush1.bf16.msra.mxu0 0
    %2574 = vmatprep.subr.bf16.mxu0 0
    %2575 = vmatpush1.bf16.msra.mxu0 0
    %2576 = vmatprep.subr.bf16.mxu0 0
    %2577 = vmatpush1.bf16.msra.mxu0 0
    %2578 = vmatprep.mubr.bf16.mxu0 0
    %2579 = vmatmul.mubr.bf16.gmra.mrb[0].mxu0 %v2454
    %v2580 = vpop.f32.mrb[0].mxu0
    %v2581 = vadd.f32 %v2459, %v2580
    %v2582 = vpop.f32.mrb[0].mxu0
    %v2583 = vadd.f32 %v2463, %v2582
    %v2584 = vpop.f32.mrb[0].mxu0
    %v2585 = vadd.f32 %v2459, %v2584
    %v2586 = vpop.f32.mrb[0].mxu0
    %v2587 = vadd.f32 %v2463, %v2586
    %2588 = vdwg.mxu0
    %v2589 = vmul.f32 %v2581, 0.5
    %v2590 = vmul.f32 %v2583, 0.5
    %v2591 = vmul.f32 %v2585, 0.5
    %v2592 = vmul.f32 %v2587, 0.5
    %v2593 = vmul.f32 %v2581, 0.044715
    %v2594 = vmul.f32 %v2583, 0.044715
    %v2595 = vmul.f32 %v2585, 0.044715
    %v2596 = vmul.f32 %v2587, 0.044715
    %v2597 = vmul.f32 %v2593, %v2581
    %v2598 = vmul.f32 %v2594, %v2583
    %v2599 = vmul.f32 %v2595, %v2585
    %v2600 = vmul.f32 %v2596, %v2587
    %v2601 = vmul.f32 %v2597, %v2581
    %v2602 = vmul.f32 %v2598, %v2583
    %v2603 = vmul.f32 %v2599, %v2585
    %v2604 = vmul.f32 %v2600, %v2587
    %v2605 = vadd.f32 %v2581, %v2601
    %v2606 = vadd.f32 %v2583, %v2602
    %v2607 = vadd.f32 %v2585, %v2603
    %v2608 = vadd.f32 %v2587, %v2604
    %v2609 = vmul.f32 %v2605, 0.7978846
    %v2610 = vmul.f32 %v2606, 0.7978846
    %v2611 = vmul.f32 %v2607, 0.7978846
    %v2612 = vmul.f32 %v2608, 0.7978846
    %v2613 = vtanh.pop %v2609
    %v2614 = vtanh.pop %v2610
    %v2615 = vtanh.pop %v2611
    %v2616 = vtanh.pop %v2612
    %v2617 = vadd.f32 %v2613, 1.0
    %v2618 = vadd.f32 %v2614, 1.0
    %v2619 = vadd.f32 %v2615, 1.0
    %v2620 = vadd.f32 %v2616, 1.0
    %v2621 = vmul.f32 %v2589, %v2617
    %v2622 = vmul.f32 %v2590, %v2618
    %v2623 = vmul.f32 %v2591, %v2619
    %v2624 = vmul.f32 %v2592, %v2620
    %v2625 = vpack.c.bf16 %v2623, %v2621
    %v2626 = vpack.c.bf16 %v2624, %v2622
    %v2628 = vlaneseq
    %v2629 = vshrl.u32 %v2628, 7
    %v2630 = vsub.s32 0, %v2629
    %v2631 = vrot.slane %v1614, %v2630
    %v2665 = vunpack.c.l.b16 %v1581
    %v2666 = vunpack.c.l.b16 %v1582
    %v2667 = vunpack.c.l.b16 %v1583
    %v2668 = vunpack.c.l.b16 %v1584
    %v2669 = vunpack.c.l.b16 %v1585
    %v2670 = vunpack.c.l.b16 %v1586
    %v2671 = vunpack.c.l.b16 %v1587
    %v2672 = vunpack.c.l.b16 %v1588
    %v2673 = vunpack.c.l.b16 %v1589
    %v2674 = vunpack.c.l.b16 %v1590
    %v2675 = vunpack.c.l.b16 %v1591
    %v2676 = vunpack.c.l.b16 %v1592
    %v2677 = vunpack.c.l.b16 %v1593
    %v2678 = vunpack.c.l.b16 %v1594
    %v2679 = vunpack.c.l.b16 %v1595
    %v2680 = vunpack.c.l.b16 %v1596
    %v2681 = vunpack.c.l.b16 %v1597
    %v2682 = vunpack.c.l.b16 %v1598
    %v2683 = vunpack.c.l.b16 %v1599
    %v2684 = vunpack.c.l.b16 %v1600
    %v2685 = vunpack.c.l.b16 %v1601
    %v2686 = vunpack.c.l.b16 %v1602
    %v2687 = vunpack.c.l.b16 %v1603
    %v2688 = vunpack.c.l.b16 %v1604
    %v2689 = vunpack.c.l.b16 %v1605
    %v2690 = vunpack.c.l.b16 %v1606
    %v2691 = vunpack.c.l.b16 %v1607
    %v2692 = vunpack.c.l.b16 %v1608
    %v2693 = vunpack.c.l.b16 %v1609
    %v2694 = vunpack.c.l.b16 %v1610
    %v2695 = vunpack.c.l.b16 %v1611
    %v2696 = vunpack.c.l.b16 %v1612
    %v2697 = vpack.c.b16 %v2666, %v2665
    %v2698 = vpack.c.b16 %v2668, %v2667
    %v2699 = vpack.c.b16 %v2670, %v2669
    %v2700 = vpack.c.b16 %v2672, %v2671
    %v2701 = vpack.c.b16 %v2674, %v2673
    %v2702 = vpack.c.b16 %v2676, %v2675
    %v2703 = vpack.c.b16 %v2678, %v2677
    %v2704 = vpack.c.b16 %v2680, %v2679
    %v2705 = vpack.c.b16 %v2682, %v2681
    %v2706 = vpack.c.b16 %v2684, %v2683
    %v2707 = vpack.c.b16 %v2686, %v2685
    %v2708 = vpack.c.b16 %v2688, %v2687
    %v2709 = vpack.c.b16 %v2690, %v2689
    %v2710 = vpack.c.b16 %v2692, %v2691
    %v2711 = vpack.c.b16 %v2694, %v2693
    %v2712 = vpack.c.b16 %v2696, %v2695
    %2729 = vmatprep.subr.bf16.mxu0 0
    %2730 = vmatpush1.bf16.msra.mxu0 %v2697
    %2731 = vmatprep.subr.bf16.mxu0 0
    %2732 = vmatpush1.bf16.msra.mxu0 %v2698
    %2733 = vmatprep.subr.bf16.mxu0 0
    %2734 = vmatpush1.bf16.msra.mxu0 %v2699
    %2735 = vmatprep.subr.bf16.mxu0 0
    %2736 = vmatpush1.bf16.msra.mxu0 %v2700
    %2737 = vmatprep.subr.bf16.mxu0 0
    %2738 = vmatpush1.bf16.msra.mxu0 %v2701
    %2739 = vmatprep.subr.bf16.mxu0 0
    %2740 = vmatpush1.bf16.msra.mxu0 %v2702
    %2741 = vmatprep.subr.bf16.mxu0 0
    %2742 = vmatpush1.bf16.msra.mxu0 %v2703
    %2743 = vmatprep.subr.bf16.mxu0 0
    %2744 = vmatpush1.bf16.msra.mxu0 %v2704
    %2745 = vmatprep.subr.bf16.mxu0 0
    %2746 = vmatpush1.bf16.msra.mxu0 %v2705
    %2747 = vmatprep.subr.bf16.mxu0 0
    %2748 = vmatpush1.bf16.msra.mxu0 %v2706
    %2749 = vmatprep.subr.bf16.mxu0 0
    %2750 = vmatpush1.bf16.msra.mxu0 %v2707
    %2751 = vmatprep.subr.bf16.mxu0 0
    %2752 = vmatpush1.bf16.msra.mxu0 %v2708
    %2753 = vmatprep.subr.bf16.mxu0 0
    %2754 = vmatpush1.bf16.msra.mxu0 %v2709
    %2755 = vmatprep.subr.bf16.mxu0 0
    %2756 = vmatpush1.bf16.msra.mxu0 %v2710
    %2757 = vmatprep.subr.bf16.mxu0 0
    %2758 = vmatpush1.bf16.msra.mxu0 %v2711
    %2759 = vmatprep.subr.bf16.mxu0 0
    %2760 = vmatpush1.bf16.msra.mxu0 %v2712
    %2761 = vmatprep.mubr.bf16.mxu0 %v2626
    %2762 = vmatmul.mubr.bf16.gmra.mrb[0].mxu0 %v2625
    %v2763 = vpop.f32.mrb[0].mxu0
    %v2764 = vadd.f32 %v2631, %v2763
    %v2765 = vpop.f32.mrb[0].mxu0
    %v2766 = vpop.f32.mrb[0].mxu0
    %v2767 = vadd.f32 %v2631, %v2766
    %v2768 = vpop.f32.mrb[0].mxu0
    %2769 = vdwg.mxu0
    %v2770 = vadd.f32 %v2764, %v2452
    %v2771 = vadd.f32 %v2767, %v2453
    %2772 = vadd.xlane.f32.xlu0 %v2770
    %v2773 = vpop.xlane.xlu0 %2772
    %2774 = vadd.xlane.f32.xlu0 %v2771
    %v2775 = vpop.xlane.xlu0 %2774
    %v2776 = vmul.f32 %v2773, %v116
    %v2777 = vmul.f32 %v2775, %v116
    %v2778 = vsub.f32 %v2770, %v2776
    %v2779 = vsub.f32 %v2771, %v2777
    %v2780 = vmul.f32 %v2778, %v2778
    %v2781 = vmul.f32 %v2779, %v2779
    %2782 = vadd.xlane.f32.xlu0 %v2780
    %v2783 = vpop.xlane.xlu0 %2782
    %2784 = vadd.xlane.f32.xlu0 %v2781
    %v2785 = vpop.xlane.xlu0 %2784
    %v2786 = vmul.f32 %v2783, %v116
    %v2787 = vmul.f32 %v2785, %v116
    %v2788 = vadd.f32 %v2786, 1e-12
    %v2789 = vadd.f32 %v2787, 1e-12
    %v2790 = vrsqrt.pop %v2788
    %v2791 = vrsqrt.pop %v2789
    %v2792 = vmul.f32 %v2778, %v2790
    %v2793 = vmul.f32 %v2779, %v2791
    %v2795 = vlaneseq
    %v2796 = vshrl.u32 %v2795, 7
    %v2797 = vsub.s32 0, %v2796
    %v2798 = vrot.slane %v1616, %v2797
    %v2800 = vmul.f32 %v2792, %v2798
    %v2801 = vmul.f32 %v2793, %v2798
    %v2803 = vlaneseq
    %v2804 = vshrl.u32 %v2803, 7
    %v2805 = vsub.s32 0, %v2804
    %v2806 = vrot.slane %v1618, %v2805
    %v2808 = vadd.f32 %v2800, %v2806
    %v2809 = vadd.f32 %v2801, %v2806
    %v2811 = vrot.slane %v2809, 7
    %vm2813 = vcmask 1040384
    %v2814 = vsel %vm2813, %v2808, %v2811
    %v2815 = vpack.c.bf16 %v2814, %v2814
    %v2816 = vld [vmem:[%s16] sm:$0xf]
    %v2817 = vld [vmem:[%s16 + $0x4] sm:$0xf]
    %v2818 = vld [vmem:[%s16 + $0x8] sm:$0xf]
    %v2819 = vld [vmem:[%s16 + $0xc] sm:$0xf]
    %v2820 = vld [vmem:[%s16 + $0x10] sm:$0xf]
    %v2821 = vld [vmem:[%s16 + $0x14] sm:$0xf]
    %v2822 = vld [vmem:[%s16 + $0x18] sm:$0xf]
    %v2823 = vld [vmem:[%s16 + $0x1c] sm:$0xf]
    %v2824 = vld [vmem:[%s16 + $0x20] sm:$0xf]
    %v2825 = vld [vmem:[%s16 + $0x24] sm:$0xf]
    %v2826 = vld [vmem:[%s16 + $0x28] sm:$0xf]
    %v2827 = vld [vmem:[%s16 + $0x2c] sm:$0xf]
    %v2828 = vld [vmem:[%s16 + $0x30] sm:$0xf]
    %v2829 = vld [vmem:[%s16 + $0x34] sm:$0xf]
    %v2830 = vld [vmem:[%s16 + $0x38] sm:$0xf]
    %v2831 = vld [vmem:[%s16 + $0x3c] sm:$0xf]
    %v2832 = vld [vmem:[%s17] sm:$0x1]
    %v2834 = vlaneseq
    %v2835 = vshrl.u32 %v2834, 7
    %v2836 = vsub.s32 0, %v2835
    %v2837 = vrot.slane %v2832, %v2836
    %v2855 = vunpack.c.l.b16 %v2816
    %v2856 = vunpack.c.l.b16 %v2817
    %v2857 = vunpack.c.l.b16 %v2818
    %v2858 = vunpack.c.l.b16 %v2819
    %v2859 = vunpack.c.l.b16 %v2820
    %v2860 = vunpack.c.l.b16 %v2821
    %v2861 = vunpack.c.l.b16 %v2822
    %v2862 = vunpack.c.l.b16 %v2823
    %v2863 = vunpack.c.l.b16 %v2824
    %v2864 = vunpack.c.l.b16 %v2825
    %v2865 = vunpack.c.l.b16 %v2826
    %v2866 = vunpack.c.l.b16 %v2827
    %v2867 = vunpack.c.l.b16 %v2828
    %v2868 = vunpack.c.l.b16 %v2829
    %v2869 = vunpack.c.l.b16 %v2830
    %v2870 = vunpack.c.l.b16 %v2831
    %v2871 = vpack.c.b16 %v2856, %v2855
    %v2872 = vpack.c.b16 %v2858, %v2857
    %v2873 = vpack.c.b16 %v2860, %v2859
    %v2874 = vpack.c.b16 %v2862, %v2861
    %v2875 = vpack.c.b16 %v2864, %v2863
    %v2876 = vpack.c.b16 %v2866, %v2865
    %v2877 = vpack.c.b16 %v2868, %v2867
    %v2878 = vpack.c.b16 %v2870, %v2869
    %2887 = vmatprep.subr.bf16.mxu0 0
    %2888 = vmatpush1.bf16.msra.mxu0 %v2871
    %2889 = vmatprep.subr.bf16.mxu0 0
    %2890 = vmatpush1.bf16.msra.mxu0 %v2872
    %2891 = vmatprep.subr.bf16.mxu0 0
    %2892 = vmatpush1.bf16.msra.mxu0 %v2873
    %2893 = vmatprep.subr.bf16.mxu0 0
    %2894 = vmatpush1.bf16.msra.mxu0 %v2874
    %2895 = vmatprep.subr.bf16.mxu0 0
    %2896 = vmatpush1.bf16.msra.mxu0 %v2875
    %2897 = vmatprep.subr.bf16.mxu0 0
    %2898 = vmatpush1.bf16.msra.mxu0 %v2876
    %2899 = vmatprep.subr.bf16.mxu0 0
    %2900 = vmatpush1.bf16.msra.mxu0 %v2877
    %2901 = vmatprep.subr.bf16.mxu0 0
    %2902 = vmatpush1.bf16.msra.mxu0 %v2878
    %2903 = vmatprep.subr.bf16.mxu0 0
    %2904 = vmatpush1.bf16.msra.mxu0 0
    %2905 = vmatprep.subr.bf16.mxu0 0
    %2906 = vmatpush1.bf16.msra.mxu0 0
    %2907 = vmatprep.subr.bf16.mxu0 0
    %2908 = vmatpush1.bf16.msra.mxu0 0
    %2909 = vmatprep.subr.bf16.mxu0 0
    %2910 = vmatpush1.bf16.msra.mxu0 0
    %2911 = vmatprep.subr.bf16.mxu0 0
    %2912 = vmatpush1.bf16.msra.mxu0 0
    %2913 = vmatprep.subr.bf16.mxu0 0
    %2914 = vmatpush1.bf16.msra.mxu0 0
    %2915 = vmatprep.subr.bf16.mxu0 0
    %2916 = vmatpush1.bf16.msra.mxu0 0
    %2917 = vmatprep.subr.bf16.mxu0 0
    %2918 = vmatpush1.bf16.msra.mxu0 0
    %2919 = vmatprep.mubr.bf16.mxu0 0
    %2920 = vmatmul.mubr.bf16.gmra.mrb[0].mxu0 %v2815
    %v2921 = vpop.f32.mrb[0].mxu0
    %v2922 = vadd.f32 %v2837, %v2921
    %v2923 = vpop.f32.mrb[0].mxu0
    %v2924 = vpop.f32.mrb[0].mxu0
    %v2925 = vpop.f32.mrb[0].mxu0
    %2926 = vdwg.mxu0
    %v2927 = vtanh.pop %v2922
    %v2928 = vpack.c.bf16 %v2927, %v2927
    %v2929 = vld [vmem:[#allocation7] sm:$0xf]
    %v2930 = vld [vmem:[#allocation7 + $0x4] sm:$0xf]
    %v2931 = vld [vmem:[#allocation7 + $0x8] sm:$0xf]
    %v2932 = vld [vmem:[#allocation7 + $0xc] sm:$0xf]
    %v2933 = vld [vmem:[#allocation7 + $0x10] sm:$0xf]
    %v2934 = vld [vmem:[#allocation7 + $0x14] sm:$0xf]
    %v2935 = vld [vmem:[#allocation7 + $0x18] sm:$0xf]
    %v2936 = vld [vmem:[#allocation7 + $0x1c] sm:$0xf]
    %v2937 = vld [vmem:[#allocation7 + $0x20] sm:$0xf]
    %v2938 = vld [vmem:[#allocation7 + $0x24] sm:$0xf]
    %v2939 = vld [vmem:[#allocation7 + $0x28] sm:$0xf]
    %v2940 = vld [vmem:[#allocation7 + $0x2c] sm:$0xf]
    %v2941 = vld [vmem:[#allocation7 + $0x30] sm:$0xf]
    %v2942 = vld [vmem:[#allocation7 + $0x34] sm:$0xf]
    %v2943 = vld [vmem:[#allocation7 + $0x38] sm:$0xf]
    %v2944 = vld [vmem:[#allocation7 + $0x3c] sm:$0xf]
    %v2945 = vld [vmem:[%s19] sm:$0x1]
    %v2947 = vlaneseq
    %v2948 = vshrl.u32 %v2947, 7
    %v2949 = vsub.s32 0, %v2948
    %v2950 = vrot.slane %v2945, %v2949
    %v2968 = vunpack.c.l.b16 %v2929
    %v2969 = vunpack.c.l.b16 %v2930
    %v2970 = vunpack.c.l.b16 %v2931
    %v2971 = vunpack.c.l.b16 %v2932
    %v2972 = vunpack.c.l.b16 %v2933
    %v2973 = vunpack.c.l.b16 %v2934
    %v2974 = vunpack.c.l.b16 %v2935
    %v2975 = vunpack.c.l.b16 %v2936
    %v2976 = vunpack.c.l.b16 %v2937
    %v2977 = vunpack.c.l.b16 %v2938
    %v2978 = vunpack.c.l.b16 %v2939
    %v2979 = vunpack.c.l.b16 %v2940
    %v2980 = vunpack.c.l.b16 %v2941
    %v2981 = vunpack.c.l.b16 %v2942
    %v2982 = vunpack.c.l.b16 %v2943
    %v2983 = vunpack.c.l.b16 %v2944
    %v2984 = vpack.c.b16 %v2969, %v2968
    %v2985 = vpack.c.b16 %v2971, %v2970
    %v2986 = vpack.c.b16 %v2973, %v2972
    %v2987 = vpack.c.b16 %v2975, %v2974
    %v2988 = vpack.c.b16 %v2977, %v2976
    %v2989 = vpack.c.b16 %v2979, %v2978
    %v2990 = vpack.c.b16 %v2981, %v2980
    %v2991 = vpack.c.b16 %v2983, %v2982
    %3000 = vmatprep.subr.bf16.mxu0 0
    %3001 = vmatpush1.bf16.msra.mxu0 %v2984
    %3002 = vmatprep.subr.bf16.mxu0 0
    %3003 = vmatpush1.bf16.msra.mxu0 %v2985
    %3004 = vmatprep.subr.bf16.mxu0 0
    %3005 = vmatpush1.bf16.msra.mxu0 %v2986
    %3006 = vmatprep.subr.bf16.mxu0 0
    %3007 = vmatpush1.bf16.msra.mxu0 %v2987
    %3008 = vmatprep.subr.bf16.mxu0 0
    %3009 = vmatpush1.bf16.msra.mxu0 %v2988
    %3010 = vmatprep.subr.bf16.mxu0 0
    %3011 = vmatpush1.bf16.msra.mxu0 %v2989
    %3012 = vmatprep.subr.bf16.mxu0 0
    %3013 = vmatpush1.bf16.msra.mxu0 %v2990
    %3014 = vmatprep.subr.bf16.mxu0 0
    %3015 = vmatpush1.bf16.msra.mxu0 %v2991
    %3016 = vmatprep.subr.bf16.mxu0 0
    %3017 = vmatpush1.bf16.msra.mxu0 0
    %3018 = vmatprep.subr.bf16.mxu0 0
    %3019 = vmatpush1.bf16.msra.mxu0 0
    %3020 = vmatprep.subr.bf16.mxu0 0
    %3021 = vmatpush1.bf16.msra.mxu0 0
    %3022 = vmatprep.subr.bf16.mxu0 0
    %3023 = vmatpush1.bf16.msra.mxu0 0
    %3024 = vmatprep.subr.bf16.mxu0 0
    %3025 = vmatpush1.bf16.msra.mxu0 0
    %3026 = vmatprep.subr.bf16.mxu0 0
    %3027 = vmatpush1.bf16.msra.mxu0 0
    %3028 = vmatprep.subr.bf16.mxu0 0
    %3029 = vmatpush1.bf16.msra.mxu0 0
    %3030 = vmatprep.subr.bf16.mxu0 0
    %3031 = vmatpush1.bf16.msra.mxu0 0
    %3032 = vmatprep.mubr.bf16.mxu0 0
    %3033 = vmatmul.mubr.bf16.gmra.mrb[0].mxu0 %v2928
    %v3034 = vpop.f32.mrb[0].mxu0
    %v3035 = vadd.f32 %v2950, %v3034
    %v3036 = vpop.f32.mrb[0].mxu0
    %v3037 = vpop.f32.mrb[0].mxu0
    %v3038 = vpop.f32.mrb[0].mxu0
    %3039 = vdwg.mxu0
    %3040 = vst [vmem:[#allocation8] sm:$0x3] %v3035
    // Predicated region
    $region94: #{sentiment_binary_forward.1} parent=1 // pred_check
      _
    $region95: #{sentiment_binary_forward.1} parent=1 // pred_check_branch
      %3042 = sbr.rel (0) target = $region97
    $region96: #{sentiment_binary_forward.1} parent=1 // pred_region
      %s3044 = ssub.s32 32, 32
      %3045 = vsyncadd [#allocation4], %s3044
      %s3047 = sshll.u32 [#allocation8], 4
      %s3048 = int_to_ptr.vmem [resolvable:$true] %s3047
      %3050 = dma.vmem_to_hbm [thread:$0]  %s3048, 32, %s20, [#allocation4]
    $region97: #{sentiment_binary_forward.1} parent=1 // pred_fallthru
      _
    // Predicated region
    $region98: #{sentiment_binary_forward.1} parent=1 // pred_check
      _
    $region99: #{sentiment_binary_forward.1} parent=1 // pred_check_branch
      %3052 = sbr.rel (0) target = $region101
    $region100: #{sentiment_binary_forward.1} parent=1 // pred_region
      %3053 = dma.done [#allocation4], 32
    $region101: #{sentiment_binary_forward.1} parent=1 // pred_fallthru
      _
    %3054 = vsyncpa [#allocation3], 1
    %3055 = vsyncpa [#allocation6], 1
    %3056 = vsyncpa [#allocation4], 1

</llo_original>
